<compile_context>
chip_gen: v5e
topology: v5e:2x2
jax: 0.10.0
libtpu: 0.0.40
codegen_flags: <defaults>
</compile_context>

<pallas_src>
import functools

import jax
import jax.numpy as jnp
from jax.experimental import pallas as pl
from jax.experimental.pallas import tpu as pltpu


_VMEM_LIMIT_BYTES = 40 * 1024 * 1024   # headroom under v7x's 64 MiB/TC
_ROW_TILE_TARGET = 512                 # output-row tile target
_LANE_TILE_TARGET = 1024               # K (reduction) tile target
_X_RESIDENT_BYTES = 4 * 1024 * 1024    # keep dense RHS fully VMEM-resident below this


def _row_tile(dim, target=_ROW_TILE_TARGET, multiple=8):
    """Largest multiple of `multiple` <= target dividing dim (else full dim).

    Caps the tile at dim//2 when possible so the "parallel" row axis has at
    least two tiles (both v7x TensorCores get work)."""
    if dim >= 2 * multiple:
        target = min(target, max(multiple, dim // 2))
    t = min(target, dim)
    t -= t % multiple
    while t >= multiple:
        if dim % t == 0:
            return t
        t -= multiple
    return dim


def _lane_tile(dim, target=_LANE_TILE_TARGET):
    """Largest multiple of 128 <= target dividing dim (else full dim)."""
    t = min(target, dim)
    t -= t % 128
    while t >= 128:
        if dim % t == 0:
            return t
        t -= 128
    return dim


# ----------------------------- Pallas kernels ------------------------------ #

def _spmm_prelu_kernel(*refs, tk, has_w):
    """y = PReLU(adj @ x); optionally also yw = bf16(y @ W) for the next layer."""
    if has_w:
        adj_ref, x_ref, w_ref, alpha_ref, y_ref, yw_ref, acc_ref = refs
    else:
        adj_ref, x_ref, alpha_ref, y_ref, acc_ref = refs

    k = pl.program_id(1)

    @pl.when(k == 0)
    def _():
        acc_ref[...] = jnp.zeros_like(acc_ref)

    if x_ref.shape[0] == tk:
        xb = x_ref[...]                       # K-tiled x (or single K step)
    else:
        # x fully VMEM-resident: slice the current K window (aligned to tk).
        xb = x_ref[pl.ds(pl.multiple_of(k * tk, tk), tk), :]
    acc_ref[...] += jnp.dot(adj_ref[...], xb, preferred_element_type=jnp.float32)

    @pl.when(k == pl.num_programs(1) - 1)
    def _():
        y = acc_ref[...]
        y = jnp.where(y > 0, y, alpha_ref[...] * y)       # PReLU in f32
        y_ref[...] = y
        if has_w:
            # Small fused epilogue matmul in bf16 (MXU) with f32 accumulation;
            # emitted directly in bf16 to feed the next layer's spmm.
            yw_ref[...] = jnp.dot(y.astype(jnp.bfloat16), w_ref[...],
                                  preferred_element_type=jnp.float32
                                  ).astype(yw_ref.dtype)


def _group_sum2_linear_kernel(a_ref, b_ref, w_ref, bias_ref, o_ref, *,
                              groups, width, scale):
    """out = ((group_sum(a) | group_sum(b)) * scale) @ W + bias, bf16 output."""
    a = a_ref[...]
    b = b_ref[...]
    sa = a[:, :width]
    sb = b[:, :width]
    for g in range(1, groups):
        sa = sa + a[:, g * width:(g + 1) * width]
        sb = sb + b[:, g * width:(g + 1) * width]
    s = (jnp.concatenate([sa, sb], axis=-1) * scale).astype(jnp.bfloat16)
    o_ref[...] = (jnp.dot(s, w_ref[...], preferred_element_type=jnp.float32)
                  + bias_ref[...]).astype(o_ref.dtype)


def _group_sum2_kernel(a_ref, b_ref, o_ref, *, groups, width, scale):
    """out = (group_sum(a) | group_sum(b)) * scale — single 128-lane-wide store."""
    a = a_ref[...]
    b = b_ref[...]
    sa = a[:, :width]
    sb = b[:, :width]
    for g in range(1, groups):
        sa = sa + a[:, g * width:(g + 1) * width]
        sb = sb + b[:, g * width:(g + 1) * width]
    o_ref[...] = jnp.concatenate([sa, sb], axis=-1) * scale


# ------------------------------ wrappers ----------------------------------- #

def spmm_prelu(adj, x, alpha_row, *, w=None):
    """Tiled y = PReLU(adj @ x) with optional fused bf16 (y @ W) second output.

    Rows are "parallel", K reduction last and "arbitrary"; f32 VMEM accumulator;
    bf16 MXU operands; RHS x held fully resident in VMEM when it fits.
    """
    M, K = adj.shape
    D = x.shape[1]
    tm = _row_tile(M, multiple=16)        # bf16 adj sublane granularity
    tk = _lane_tile(K)
    grid = (M // tm, K // tk)
    has_w = w is not None

    x_resident = K * D * x.dtype.itemsize <= _X_RESIDENT_BYTES
    x_spec = (pl.BlockSpec((K, D), lambda i, k: (0, 0)) if x_resident
              else pl.BlockSpec((tk, D), lambda i, k: (k, 0)))
    x_bytes = K * D * x.dtype.itemsize * (1 if x_resident else grid[0])

    # NOTE: if a trace shows exposed adj DMA at large tk on v7x, add
    # pipeline_mode=pl.Buffered(3) to the adjacency BlockSpec below.
    in_specs = [pl.BlockSpec((tm, tk), lambda i, k: (i, k)), x_spec]
    inputs = [adj, x]
    if has_w:
        in_specs.append(pl.BlockSpec((D, D), lambda i, k: (0, 0)))
        inputs.append(w)
    in_specs.append(pl.BlockSpec((1, D), lambda i, k: (0, 0)))
    inputs.append(alpha_row)

    out_shapes = [jax.ShapeDtypeStruct((M, D), jnp.float32)]
    out_specs = [pl.BlockSpec((tm, D), lambda i, k: (i, 0))]
    if has_w:
        out_shapes.append(jax.ShapeDtypeStruct((M, D), jnp.bfloat16))
        out_specs.append(pl.BlockSpec((tm, D), lambda i, k: (i, 0)))

    flops = 2 * M * K * D + (2 * M * D * D if has_w else 0)
    out_bytes = M * D * 4 + (M * D * 2 if has_w else 0)
    cost = pl.CostEstimate(
        flops=int(flops), transcendentals=0,
        bytes_accessed=int(M * K * adj.dtype.itemsize + x_bytes + out_bytes))

    out = pl.pallas_call(
        functools.partial(_spmm_prelu_kernel, tk=tk, has_w=has_w),
        out_shape=tuple(out_shapes),
        grid=grid,
        in_specs=in_specs,
        out_specs=tuple(out_specs),
        scratch_shapes=[pltpu.VMEM((tm, D), jnp.float32)],
        compiler_params=pltpu.CompilerParams(
            dimension_semantics=("parallel", "arbitrary"),
            vmem_limit_bytes=_VMEM_LIMIT_BYTES),
        cost_estimate=cost,
    )(*inputs)
    return out if has_w else out[0]


def group_sum2_linear(a, b, w, bias, *, groups, width, scale):
    """((group_sum(a)|group_sum(b)) * scale) @ w + bias; w: (2*width, dout) bf16."""
    n, total = a.shape
    assert total == groups * width
    dout = w.shape[1]
    tr = _row_tile(n, multiple=16)        # bf16 output rows
    return pl.pallas_call(
        functools.partial(_group_sum2_linear_kernel, groups=groups,
                          width=width, scale=scale),
        out_shape=jax.ShapeDtypeStruct((n, dout), jnp.bfloat16),
        grid=(n // tr,),
        in_specs=[pl.BlockSpec((tr, total), lambda i: (i, 0)),
                  pl.BlockSpec((tr, total), lambda i: (i, 0)),
                  pl.BlockSpec((2 * width, dout), lambda i: (0, 0)),
                  pl.BlockSpec((1, dout), lambda i: (0, 0))],
        out_specs=pl.BlockSpec((tr, dout), lambda i: (i, 0)),
        compiler_params=pltpu.CompilerParams(
            dimension_semantics=("parallel",),
            vmem_limit_bytes=_VMEM_LIMIT_BYTES),
    )(a, b, w, bias)


def group_sum2(a, b, *, groups, width, scale):
    """(group_sum(a) | group_sum(b)) * scale -> (n, 2*width) f32 (lane-dense)."""
    n, total = a.shape
    assert total == groups * width
    tr = _row_tile(n, multiple=8)
    return pl.pallas_call(
        functools.partial(_group_sum2_kernel, groups=groups, width=width,
                          scale=scale),
        out_shape=jax.ShapeDtypeStruct((n, 2 * width), jnp.float32),
        grid=(n // tr,),
        in_specs=[pl.BlockSpec((tr, total), lambda i: (i, 0)),
                  pl.BlockSpec((tr, total), lambda i: (i, 0))],
        out_specs=pl.BlockSpec((tr, 2 * width), lambda i: (i, 0)),
        compiler_params=pltpu.CompilerParams(
            dimension_semantics=("parallel",),
            vmem_limit_bytes=_VMEM_LIMIT_BYTES),
    )(a, b)


# ---------------------------- one-time data prep ---------------------------- #

def prepare_adjacency(multi_social_adj, multi_adj, n_users):
    """Pre-cast the adjacencies to bf16 and pre-split the main one by row segment
    (user rows / item rows) once at data-load time (not per forward)."""
    bf16 = jnp.bfloat16
    adj_s = jnp.asarray(multi_social_adj, bf16)
    adj_u = jnp.asarray(multi_adj[:n_users], bf16)
    adj_i = jnp.asarray(multi_adj[n_users:], bf16)
    return adj_s, adj_u, adj_i


# --------------------------- RGCN forward pass ------------------------------ #

def rgcn_forward(params, adj_s, adj_u, adj_i, n_users, n_items, D=64,
                 rating_class=5, rating_social=5):
    bf16 = jnp.bfloat16
    # PReLU slope kept as a (1, D) row in VMEM (also supports per-channel PReLU).
    alpha_row = jnp.broadcast_to(params["alpha"], (1, D)).astype(jnp.float32)

    # ---------------- social GCN (getSocialEmbedding + w_r1) ----------------
    # e0 = PReLU(A_s @ U); ego_s = bf16(e0 @ Ws) fused in the same kernel.
    e0, ego_s = spmm_prelu(adj_s, params["user_emb"].astype(bf16), alpha_row,
                           w=params["social_user_w1"].astype(bf16))
    e1 = spmm_prelu(adj_s, ego_s, alpha_row)
    # view(-1, 5, 2D).sum(1) / 4 (div-by-4 with 5 groups matches the reference)
    # + fused w_r1 linear; bf16 output feeds the main-branch MXU directly.
    user_emb = group_sum2_linear(
        e0.reshape(n_users, rating_social * D),
        e1.reshape(n_users, rating_social * D),
        params["w_r1_wT"].astype(bf16), params["w_r1_b"][None, :],
        groups=rating_social, width=D, scale=1.0 / 4.0)        # (n_users, D) bf16

    # --------------------------- main GCN, layer 1 ---------------------------
    ego = jnp.concatenate([user_emb, params["item_emb"].astype(bf16)], axis=0)
    # Row-segment split (user rows / item rows) replaces the old gcd row tile +
    # scalar-prefetch weight select; each half gets its own layer weight.
    u0, u0w = spmm_prelu(adj_u, ego, alpha_row, w=params["user_w1"].astype(bf16))
    i0, i0w = spmm_prelu(adj_i, ego, alpha_row, w=params["item_w1"].astype(bf16))

    # --------------------------- main GCN, layer 2 ---------------------------
    ego1 = jnp.concatenate([u0w, i0w], axis=0)                 # (N, D) bf16
    u1 = spmm_prelu(adj_u, ego1, alpha_row)
    i1 = spmm_prelu(adj_i, ego1, alpha_row)

    user_embedding = jnp.concatenate([u0, u1], axis=1)         # (n_users, 2D) f32
    item_embedding = group_sum2(
        i0.reshape(n_items, rating_class * D),
        i1.reshape(n_items, rating_class * D),
        groups=rating_class, width=D, scale=1.0 / 5.0)         # (n_items, 2D) f32
    return user_embedding, item_embedding


# ------------------------- pure-JAX f32 reference --------------------------- #

def rgcn_forward_reference(params, social_adj, adj, n_users, n_items, D=64):
    a = params["alpha"][0, 0]
    prelu = lambda v: jnp.where(v > 0, v, a * v)
    U = params["user_emb"]
    e0 = prelu(social_adj @ U)
    e1 = prelu(social_adj @ (e0 @ params["social_user_w1"]))
    social = jnp.concatenate([e0, e1], 1).reshape(n_users, 5, 2 * D).sum(1) / 4.0
    user_embeddings = social @ params["w_r1_wT"] + params["w_r1_b"][None, :]
    ego = jnp.concatenate([user_embeddings, params["item_emb"]], 0)
    g0 = prelu(adj @ ego)
    u0, i0 = g0[:n_users], g0[n_users:]
    ego1 = jnp.concatenate([u0 @ params["user_w1"], i0 @ params["item_w1"]], 0)
    g1 = prelu(adj @ ego1)
    u1, i1 = g1[:n_users], g1[n_users:]
    user_embedding = jnp.concatenate([u0, u1], 1)
    item_embedding = (jnp.concatenate([i0, i1], 1)
                      .reshape(n_items, 5, 2 * D).sum(1) / 5.0)
    return user_embedding, item_embedding


# ------------------------------ param init ---------------------------------- #

def make_params(key, n_users, n_items, D=64):
    ks = jax.random.split(key, 10)

    def xavier(k, shape):
        fan_in, fan_out = shape
        lim = (6.0 / (fan_in + fan_out)) ** 0.5
        return jax.random.uniform(k, shape, jnp.float32, -lim, lim)

    lin_lim = (1.0 / (2 * D)) ** 0.5
    params = {
        "user_emb": 0.1 * jax.random.normal(ks[0], (n_users * 5, D), jnp.float32),
        "item_emb": 0.1 * jax.random.normal(ks[1], (n_items * 5, D), jnp.float32),
        "social_user_w1": xavier(ks[2], (D, D)),
        "user_w1": xavier(ks[3], (D, D)),
        "item_w1": xavier(ks[4], (D, D)),
        # nn.Linear(2D, D): weight (D, 2D) -- stored pre-transposed once at init.
        "w_r1_wT": xavier(ks[5], (D, 2 * D)).T,
        "w_r1_b": jax.random.uniform(ks[6], (D,), jnp.float32, -lin_lim, lin_lim),
        # PReLU default single-parameter init = 0.25
        "alpha": jnp.full((1, 1), 0.25, jnp.float32),
    }
    return params, ks[7], ks[8]


# ---------------------------------- main ------------------------------------ #

if __name__ == "__main__":
    # embed_dim=64, n_layers=2, ratingClass=ratingSocial=5 (implied by view(-1,5,128)).
    n_users, n_items, D = 16, 16, 64

    params, k_adj1, k_adj2 = make_params(jax.random.PRNGKey(0), n_users, n_items, D)

    # Dense stand-ins for the dataset's sparse adjacency matrices.
    multi_social_adj = 0.1 * jax.random.uniform(
        k_adj1, (n_users * 5, n_users * 5), jnp.float32)
    n_total = n_users + n_items * 5
    multi_adj = 0.1 * jax.random.uniform(k_adj2, (n_total, n_total), jnp.float32)

    # One-time data prep (mirrors loading the dataset's adjacency): bf16 + split.
    adj_s, adj_u, adj_i = prepare_adjacency(multi_social_adj, multi_adj, n_users)

    fwd = jax.jit(functools.partial(rgcn_forward, n_users=n_users,
                                    n_items=n_items, D=D))
    user_embedding, item_embedding = fwd(params, adj_s, adj_u, adj_i)
    jax.block_until_ready((user_embedding, item_embedding))

    assert user_embedding.shape == (n_users, 2 * D)
    assert item_embedding.shape == (n_items, 2 * D)
    assert user_embedding.dtype == jnp.float32
    assert item_embedding.dtype == jnp.float32

    # Sanity check against a pure-JAX f32 reference (kernels use bf16 MXU inputs).
    u_ref, i_ref = rgcn_forward_reference(params, multi_social_adj, multi_adj,
                                          n_users, n_items, D)
    assert jnp.allclose(user_embedding, u_ref, rtol=1e-1, atol=2e-2)
    assert jnp.allclose(item_embedding, i_ref, rtol=1e-1, atol=2e-2)

    print("KERNEL_OK")
</pallas_src>

<mosaic_0001>
module attributes {stable_mosaic.version = 11 : i64} {
  func.func @_spmm_prelu_kernel(%arg0: i32, %arg1: i32, %arg2: memref<16x80xbf16, #tpu.memory_space<vmem>>, %arg3: memref<80x64xbf16, #tpu.memory_space<vmem>>, %arg4: memref<1x64xf32, #tpu.memory_space<vmem>>, %arg5: memref<16x64xf32, #tpu.memory_space<vmem>>, %arg6: memref<16x64xf32, #tpu.memory_space<vmem>>) attributes {dimension_semantics = [#tpu.dimension_semantics<parallel>, #tpu.dimension_semantics<arbitrary>], iteration_bounds = array<i64: 5, 1>, scalar_prefetch = 0 : i64, scratch_operands = 1 : i64, tpu.core_type = #tpu.core_type<tc>, window_params = [{transform_indices = @transform_0, window_bounds = array<i64: 16, 80>}, {pipeline_mode = #tpu.pipeline_mode<synchronous>, transform_indices = @transform_1, window_bounds = array<i64: 80, 64>}, {pipeline_mode = #tpu.pipeline_mode<synchronous>, transform_indices = @transform_2, window_bounds = array<i64: 1, 64>}, {transform_indices = @transform_3, window_bounds = array<i64: 16, 64>}]} {
    %c0_i32 = arith.constant 0 : i32
    %0 = arith.cmpi eq, %arg1, %c0_i32 : i32
    %1 = arith.extui %0 : i1 to i32
    %c0_i32_0 = arith.constant 0 : i32
    %2 = arith.cmpi ne, %1, %c0_i32_0 : i32
    scf.if %2 {
      %cst_10 = arith.constant 0.000000e+00 : f32
      %12 = vector.broadcast %cst_10 : f32 to vector<16x64xf32>
      %c0_11 = arith.constant 0 : index
      %c0_12 = arith.constant 0 : index
      %13 = vector.load %arg6[%c0_11, %c0_12] : memref<16x64xf32, #tpu.memory_space<vmem>>, vector<16x64xf32>
      tpu.vector_store %arg6[%c0_11, %c0_12], %12 {strides = array<i32>} : memref<16x64xf32, #tpu.memory_space<vmem>>, vector<16x64xf32>,
    } else {
    }
    %c0 = arith.constant 0 : index
    %c0_1 = arith.constant 0 : index
    %3 = vector.load %arg3[%c0, %c0_1] : memref<80x64xbf16, #tpu.memory_space<vmem>>, vector<80x64xbf16>
    %c0_2 = arith.constant 0 : index
    %c0_3 = arith.constant 0 : index
    %4 = vector.load %arg6[%c0_2, %c0_3] : memref<16x64xf32, #tpu.memory_space<vmem>>, vector<16x64xf32>
    %c0_4 = arith.constant 0 : index
    %c0_5 = arith.constant 0 : index
    %5 = vector.load %arg2[%c0_4, %c0_5] : memref<16x80xbf16, #tpu.memory_space<vmem>>, vector<16x80xbf16>
    %cst = arith.constant dense<0.000000e+00> : vector<16x64xf32>
    %6 = tpu.matmul %5, %3, %cst {dimension_numbers = #tpu.dot_dimension_numbers<[1], [0], [0], [1], [0, 0, 1, 1], [], []>} : vector<16x80xbf16>, vector<80x64xbf16>, vector<16x64xf32> -> vector<16x64xf32>
    %7 = arith.addf %4, %6 : vector<16x64xf32>
    %c0_6 = arith.constant 0 : index
    %c0_7 = arith.constant 0 : index
    %8 = vector.load %arg6[%c0_6, %c0_7] : memref<16x64xf32, #tpu.memory_space<vmem>>, vector<16x64xf32>
    tpu.vector_store %arg6[%c0_6, %c0_7], %7 {strides = array<i32>} : memref<16x64xf32, #tpu.memory_space<vmem>>, vector<16x64xf32>,
    %c0_i32_8 = arith.constant 0 : i32
    %9 = arith.cmpi eq, %arg1, %c0_i32_8 : i32
    %10 = arith.extui %9 : i1 to i32
    %c0_i32_9 = arith.constant 0 : i32
    %11 = arith.cmpi ne, %10, %c0_i32_9 : i32
    scf.if %11 {
      %c0_10 = arith.constant 0 : index
      %c0_11 = arith.constant 0 : index
      %12 = vector.load %arg6[%c0_10, %c0_11] : memref<16x64xf32, #tpu.memory_space<vmem>>, vector<16x64xf32>
      %cst_12 = arith.constant 0.000000e+00 : f32
      %13 = vector.broadcast %cst_12 : f32 to vector<16x64xf32>
      %14 = arith.cmpf ogt, %12, %13 : vector<16x64xf32>
      %c0_13 = arith.constant 0 : index
      %c0_14 = arith.constant 0 : index
      %15 = vector.load %arg4[%c0_13, %c0_14] : memref<1x64xf32, #tpu.memory_space<vmem>>, vector<1x64xf32>
      %16 = vector.broadcast %15 : vector<1x64xf32> to vector<16x64xf32>
      %17 = arith.mulf %16, %12 : vector<16x64xf32>
      %18 = arith.select %14, %12, %17 : vector<16x64xi1>, vector<16x64xf32>
      %c0_15 = arith.constant 0 : index
      %c0_16 = arith.constant 0 : index
      %19 = vector.load %arg5[%c0_15, %c0_16] : memref<16x64xf32, #tpu.memory_space<vmem>>, vector<16x64xf32>
      tpu.vector_store %arg5[%c0_15, %c0_16], %18 {strides = array<i32>} : memref<16x64xf32, #tpu.memory_space<vmem>>, vector<16x64xf32>,
    } else {
    }
    return
  }
  func.func @transform_0(%arg0: i32, %arg1: i32) -> (i32, i32) {
    %c0_i32 = arith.constant 0 : i32
    return %arg0, %arg1 : i32, i32
  }
  func.func @transform_1(%arg0: i32, %arg1: i32) -> (i32, i32) {
    %c0_i32 = arith.constant 0 : i32
    %c0_i32_0 = arith.constant 0 : i32
    %c0_i32_1 = arith.constant 0 : i32
    return %c0_i32, %c0_i32_0 : i32, i32
  }
  func.func @transform_2(%arg0: i32, %arg1: i32) -> (i32, i32) {
    %c0_i32 = arith.constant 0 : i32
    %c0_i32_0 = arith.constant 0 : i32
    %c0_i32_1 = arith.constant 0 : i32
    return %c0_i32, %c0_i32_0 : i32, i32
  }
  func.func @transform_3(%arg0: i32, %arg1: i32) -> (i32, i32) {
    %c0_i32 = arith.constant 0 : i32
    %c0_i32_0 = arith.constant 0 : i32
    return %arg0, %c0_i32 : i32, i32
  }
}

module attributes {stable_mosaic.version = 11 : i64} {
  func.func @_spmm_prelu_kernel(%arg0: i32, %arg1: i32, %arg2: memref<16x80xbf16, #tpu.memory_space<vmem>>, %arg3: memref<80x64xbf16, #tpu.memory_space<vmem>>, %arg4: memref<64x64xbf16, #tpu.memory_space<vmem>>, %arg5: memref<1x64xf32, #tpu.memory_space<vmem>>, %arg6: memref<16x64xf32, #tpu.memory_space<vmem>>, %arg7: memref<16x64xbf16, #tpu.memory_space<vmem>>, %arg8: memref<16x64xf32, #tpu.memory_space<vmem>>) attributes {dimension_semantics = [#tpu.dimension_semantics<parallel>, #tpu.dimension_semantics<arbitrary>], iteration_bounds = array<i64: 5, 1>, scalar_prefetch = 0 : i64, scratch_operands = 1 : i64, tpu.core_type = #tpu.core_type<tc>, window_params = [{transform_indices = @transform_0, window_bounds = array<i64: 16, 80>}, {pipeline_mode = #tpu.pipeline_mode<synchronous>, transform_indices = @transform_1, window_bounds = array<i64: 80, 64>}, {pipeline_mode = #tpu.pipeline_mode<synchronous>, transform_indices = @transform_2, window_bounds = array<i64: 64, 64>}, {pipeline_mode = #tpu.pipeline_mode<synchronous>, transform_indices = @transform_3, window_bounds = array<i64: 1, 64>}, {transform_indices = @transform_4, window_bounds = array<i64: 16, 64>}, {transform_indices = @transform_5, window_bounds = array<i64: 16, 64>}]} {
    %c0_i32 = arith.constant 0 : i32
    %0 = arith.cmpi eq, %arg1, %c0_i32 : i32
    %1 = arith.extui %0 : i1 to i32
    %c0_i32_0 = arith.constant 0 : i32
    %2 = arith.cmpi ne, %1, %c0_i32_0 : i32
    scf.if %2 {
      %cst_10 = arith.constant 0.000000e+00 : f32
      %12 = vector.broadcast %cst_10 : f32 to vector<16x64xf32>
      %c0_11 = arith.constant 0 : index
      %c0_12 = arith.constant 0 : index
      %13 = vector.load %arg8[%c0_11, %c0_12] : memref<16x64xf32, #tpu.memory_space<vmem>>, vector<16x64xf32>
      tpu.vector_store %arg8[%c0_11, %c0_12], %12 {strides = array<i32>} : memref<16x64xf32, #tpu.memory_space<vmem>>, vector<16x64xf32>,
    } else {
    }
    %c0 = arith.constant 0 : index
    %c0_1 = arith.constant 0 : index
    %3 = vector.load %arg3[%c0, %c0_1] : memref<80x64xbf16, #tpu.memory_space<vmem>>, vector<80x64xbf16>
    %c0_2 = arith.constant 0 : index
    %c0_3 = arith.constant 0 : index
    %4 = vector.load %arg8[%c0_2, %c0_3] : memref<16x64xf32, #tpu.memory_space<vmem>>, vector<16x64xf32>
    %c0_4 = arith.constant 0 : index
    %c0_5 = arith.constant 0 : index
    %5 = vector.load %arg2[%c0_4, %c0_5] : memref<16x80xbf16, #tpu.memory_space<vmem>>, vector<16x80xbf16>
    %cst = arith.constant dense<0.000000e+00> : vector<16x64xf32>
    %6 = tpu.matmul %5, %3, %cst {dimension_numbers = #tpu.dot_dimension_numbers<[1], [0], [0], [1], [0, 0, 1, 1], [], []>} : vector<16x80xbf16>, vector<80x64xbf16>, vector<16x64xf32> -> vector<16x64xf32>
    %7 = arith.addf %4, %6 : vector<16x64xf32>
    %c0_6 = arith.constant 0 : index
    %c0_7 = arith.constant 0 : index
    %8 = vector.load %arg8[%c0_6, %c0_7] : memref<16x64xf32, #tpu.memory_space<vmem>>, vector<16x64xf32>
    tpu.vector_store %arg8[%c0_6, %c0_7], %7 {strides = array<i32>} : memref<16x64xf32, #tpu.memory_space<vmem>>, vector<16x64xf32>,
    %c0_i32_8 = arith.constant 0 : i32
    %9 = arith.cmpi eq, %arg1, %c0_i32_8 : i32
    %10 = arith.extui %9 : i1 to i32
    %c0_i32_9 = arith.constant 0 : i32
    %11 = arith.cmpi ne, %10, %c0_i32_9 : i32
    scf.if %11 {
      %c0_10 = arith.constant 0 : index
      %c0_11 = arith.constant 0 : index
      %12 = vector.load %arg8[%c0_10, %c0_11] : memref<16x64xf32, #tpu.memory_space<vmem>>, vector<16x64xf32>
      %cst_12 = arith.constant 0.000000e+00 : f32
      %13 = vector.broadcast %cst_12 : f32 to vector<16x64xf32>
      %14 = arith.cmpf ogt, %12, %13 : vector<16x64xf32>
      %c0_13 = arith.constant 0 : index
      %c0_14 = arith.constant 0 : index
      %15 = vector.load %arg5[%c0_13, %c0_14] : memref<1x64xf32, #tpu.memory_space<vmem>>, vector<1x64xf32>
      %16 = vector.broadcast %15 : vector<1x64xf32> to vector<16x64xf32>
      %17 = arith.mulf %16, %12 : vector<16x64xf32>
      %18 = arith.select %14, %12, %17 : vector<16x64xi1>, vector<16x64xf32>
      %c0_15 = arith.constant 0 : index
      %c0_16 = arith.constant 0 : index
      %19 = vector.load %arg6[%c0_15, %c0_16] : memref<16x64xf32, #tpu.memory_space<vmem>>, vector<16x64xf32>
      tpu.vector_store %arg6[%c0_15, %c0_16], %18 {strides = array<i32>} : memref<16x64xf32, #tpu.memory_space<vmem>>, vector<16x64xf32>,
      %20 = arith.truncf %18 : vector<16x64xf32> to vector<16x64xbf16>
      %c0_17 = arith.constant 0 : index
      %c0_18 = arith.constant 0 : index
      %21 = vector.load %arg4[%c0_17, %c0_18] : memref<64x64xbf16, #tpu.memory_space<vmem>>, vector<64x64xbf16>
      %cst_19 = arith.constant dense<0.000000e+00> : vector<16x64xf32>
      %22 = tpu.matmul %20, %21, %cst_19 {dimension_numbers = #tpu.dot_dimension_numbers<[1], [0], [0], [1], [0, 0, 1, 1], [], []>} : vector<16x64xbf16>, vector<64x64xbf16>, vector<16x64xf32> -> vector<16x64xf32>
      %23 = arith.truncf %22 : vector<16x64xf32> to vector<16x64xbf16>
      %c0_20 = arith.constant 0 : index
      %c0_21 = arith.constant 0 : index
      %24 = vector.load %arg7[%c0_20, %c0_21] : memref<16x64xbf16, #tpu.memory_space<vmem>>, vector<16x64xbf16>
      tpu.vector_store %arg7[%c0_20, %c0_21], %23 {strides = array<i32>} : memref<16x64xbf16, #tpu.memory_space<vmem>>, vector<16x64xbf16>,
    } else {
    }
    return
  }
  func.func @transform_0(%arg0: i32, %arg1: i32) -> (i32, i32) {
    %c0_i32 = arith.constant 0 : i32
    return %arg0, %arg1 : i32, i32
  }
  func.func @transform_1(%arg0: i32, %arg1: i32) -> (i32, i32) {
    %c0_i32 = arith.constant 0 : i32
    %c0_i32_0 = arith.constant 0 : i32
    %c0_i32_1 = arith.constant 0 : i32
    return %c0_i32, %c0_i32_0 : i32, i32
  }
  func.func @transform_2(%arg0: i32, %arg1: i32) -> (i32, i32) {
    %c0_i32 = arith.constant 0 : i32
    %c0_i32_0 = arith.constant 0 : i32
    %c0_i32_1 = arith.constant 0 : i32
    return %c0_i32, %c0_i32_0 : i32, i32
  }
  func.func @transform_3(%arg0: i32, %arg1: i32) -> (i32, i32) {
    %c0_i32 = arith.constant 0 : i32
    %c0_i32_0 = arith.constant 0 : i32
    %c0_i32_1 = arith.constant 0 : i32
    return %c0_i32, %c0_i32_0 : i32, i32
  }
  func.func @transform_4(%arg0: i32, %arg1: i32) -> (i32, i32) {
    %c0_i32 = arith.constant 0 : i32
    %c0_i32_0 = arith.constant 0 : i32
    return %arg0, %c0_i32 : i32, i32
  }
  func.func @transform_5(%arg0: i32, %arg1: i32) -> (i32, i32) {
    %c0_i32 = arith.constant 0 : i32
    %c0_i32_0 = arith.constant 0 : i32
    return %arg0, %c0_i32 : i32, i32
  }
}

module attributes {stable_mosaic.version = 11 : i64} {
  func.func @_group_sum2_linear_kernel(%arg0: i32, %arg1: memref<16x320xf32, #tpu.memory_space<vmem>>, %arg2: memref<16x320xf32, #tpu.memory_space<vmem>>, %arg3: memref<128x64xbf16, #tpu.memory_space<vmem>>, %arg4: memref<1x64xf32, #tpu.memory_space<vmem>>, %arg5: memref<16x64xbf16, #tpu.memory_space<vmem>>) attributes {dimension_semantics = [#tpu.dimension_semantics<parallel>], iteration_bounds = array<i64: 1>, scalar_prefetch = 0 : i64, scratch_operands = 0 : i64, tpu.core_type = #tpu.core_type<tc>, window_params = [{transform_indices = @transform_0, window_bounds = array<i64: 16, 320>}, {transform_indices = @transform_1, window_bounds = array<i64: 16, 320>}, {pipeline_mode = #tpu.pipeline_mode<synchronous>, transform_indices = @transform_2, window_bounds = array<i64: 128, 64>}, {pipeline_mode = #tpu.pipeline_mode<synchronous>, transform_indices = @transform_3, window_bounds = array<i64: 1, 64>}, {transform_indices = @transform_4, window_bounds = array<i64: 16, 64>}]} {
    %c0 = arith.constant 0 : index
    %c0_0 = arith.constant 0 : index
    %0 = vector.load %arg1[%c0, %c0_0] : memref<16x320xf32, #tpu.memory_space<vmem>>, vector<16x320xf32>
    %c0_1 = arith.constant 0 : index
    %c0_2 = arith.constant 0 : index
    %1 = vector.load %arg2[%c0_1, %c0_2] : memref<16x320xf32, #tpu.memory_space<vmem>>, vector<16x320xf32>
    %2 = vector.extract_strided_slice %0 {offsets = [0, 0], sizes = [16, 64], strides = [1, 1]} : vector<16x320xf32> to vector<16x64xf32>
    %3 = vector.extract_strided_slice %1 {offsets = [0, 0], sizes = [16, 64], strides = [1, 1]} : vector<16x320xf32> to vector<16x64xf32>
    %4 = vector.extract_strided_slice %0 {offsets = [0, 64], sizes = [16, 64], strides = [1, 1]} : vector<16x320xf32> to vector<16x64xf32>
    %5 = arith.addf %2, %4 : vector<16x64xf32>
    %6 = vector.extract_strided_slice %1 {offsets = [0, 64], sizes = [16, 64], strides = [1, 1]} : vector<16x320xf32> to vector<16x64xf32>
    %7 = arith.addf %3, %6 : vector<16x64xf32>
    %8 = vector.extract_strided_slice %0 {offsets = [0, 128], sizes = [16, 64], strides = [1, 1]} : vector<16x320xf32> to vector<16x64xf32>
    %9 = arith.addf %5, %8 : vector<16x64xf32>
    %10 = vector.extract_strided_slice %1 {offsets = [0, 128], sizes = [16, 64], strides = [1, 1]} : vector<16x320xf32> to vector<16x64xf32>
    %11 = arith.addf %7, %10 : vector<16x64xf32>
    %12 = vector.extract_strided_slice %0 {offsets = [0, 192], sizes = [16, 64], strides = [1, 1]} : vector<16x320xf32> to vector<16x64xf32>
    %13 = arith.addf %9, %12 : vector<16x64xf32>
    %14 = vector.extract_strided_slice %1 {offsets = [0, 192], sizes = [16, 64], strides = [1, 1]} : vector<16x320xf32> to vector<16x64xf32>
    %15 = arith.addf %11, %14 : vector<16x64xf32>
    %16 = vector.extract_strided_slice %0 {offsets = [0, 256], sizes = [16, 64], strides = [1, 1]} : vector<16x320xf32> to vector<16x64xf32>
    %17 = arith.addf %13, %16 : vector<16x64xf32>
    %18 = vector.extract_strided_slice %1 {offsets = [0, 256], sizes = [16, 64], strides = [1, 1]} : vector<16x320xf32> to vector<16x64xf32>
    %19 = arith.addf %15, %18 : vector<16x64xf32>
    %20 = tpu.concatenate %17, %19 in 1 : vector<16x64xf32>, vector<16x64xf32> -> vector<16x128xf32>
    %cst = arith.constant 2.500000e-01 : f32
    %21 = vector.broadcast %cst : f32 to vector<16x128xf32>
    %22 = arith.mulf %20, %21 : vector<16x128xf32>
    %23 = arith.truncf %22 : vector<16x128xf32> to vector<16x128xbf16>
    %c0_3 = arith.constant 0 : index
    %c0_4 = arith.constant 0 : index
    %24 = vector.load %arg3[%c0_3, %c0_4] : memref<128x64xbf16, #tpu.memory_space<vmem>>, vector<128x64xbf16>
    %cst_5 = arith.constant dense<0.000000e+00> : vector<16x64xf32>
    %25 = tpu.matmul %23, %24, %cst_5 {dimension_numbers = #tpu.dot_dimension_numbers<[1], [0], [0], [1], [0, 0, 1, 1], [], []>} : vector<16x128xbf16>, vector<128x64xbf16>, vector<16x64xf32> -> vector<16x64xf32>
    %c0_6 = arith.constant 0 : index
    %c0_7 = arith.constant 0 : index
    %26 = vector.load %arg4[%c0_6, %c0_7] : memref<1x64xf32, #tpu.memory_space<vmem>>, vector<1x64xf32>
    %27 = vector.broadcast %26 : vector<1x64xf32> to vector<16x64xf32>
    %28 = arith.addf %25, %27 : vector<16x64xf32>
    %29 = arith.truncf %28 : vector<16x64xf32> to vector<16x64xbf16>
    %c0_8 = arith.constant 0 : index
    %c0_9 = arith.constant 0 : index
    %30 = vector.load %arg5[%c0_8, %c0_9] : memref<16x64xbf16, #tpu.memory_space<vmem>>, vector<16x64xbf16>
    tpu.vector_store %arg5[%c0_8, %c0_9], %29 {strides = array<i32>} : memref<16x64xbf16, #tpu.memory_space<vmem>>, vector<16x64xbf16>,
    return
  }
  func.func @transform_0(%arg0: i32) -> (i32, i32) {
    %c0_i32 = arith.constant 0 : i32
    %c0_i32_0 = arith.constant 0 : i32
    return %arg0, %c0_i32 : i32, i32
  }
  func.func @transform_1(%arg0: i32) -> (i32, i32) {
    %c0_i32 = arith.constant 0 : i32
    %c0_i32_0 = arith.constant 0 : i32
    return %arg0, %c0_i32 : i32, i32
  }
  func.func @transform_2(%arg0: i32) -> (i32, i32) {
    %c0_i32 = arith.constant 0 : i32
    %c0_i32_0 = arith.constant 0 : i32
    %c0_i32_1 = arith.constant 0 : i32
    return %c0_i32, %c0_i32_0 : i32, i32
  }
  func.func @transform_3(%arg0: i32) -> (i32, i32) {
    %c0_i32 = arith.constant 0 : i32
    %c0_i32_0 = arith.constant 0 : i32
    %c0_i32_1 = arith.constant 0 : i32
    return %c0_i32, %c0_i32_0 : i32, i32
  }
  func.func @transform_4(%arg0: i32) -> (i32, i32) {
    %c0_i32 = arith.constant 0 : i32
    %c0_i32_0 = arith.constant 0 : i32
    return %arg0, %c0_i32 : i32, i32
  }
}

module attributes {stable_mosaic.version = 11 : i64} {
  func.func @_spmm_prelu_kernel(%arg0: i32, %arg1: i32, %arg2: memref<16x96xbf16, #tpu.memory_space<vmem>>, %arg3: memref<96x64xbf16, #tpu.memory_space<vmem>>, %arg4: memref<64x64xbf16, #tpu.memory_space<vmem>>, %arg5: memref<1x64xf32, #tpu.memory_space<vmem>>, %arg6: memref<16x64xf32, #tpu.memory_space<vmem>>, %arg7: memref<16x64xbf16, #tpu.memory_space<vmem>>, %arg8: memref<16x64xf32, #tpu.memory_space<vmem>>) attributes {dimension_semantics = [#tpu.dimension_semantics<parallel>, #tpu.dimension_semantics<arbitrary>], iteration_bounds = array<i64: 1, 1>, scalar_prefetch = 0 : i64, scratch_operands = 1 : i64, tpu.core_type = #tpu.core_type<tc>, window_params = [{transform_indices = @transform_0, window_bounds = array<i64: 16, 96>}, {pipeline_mode = #tpu.pipeline_mode<synchronous>, transform_indices = @transform_1, window_bounds = array<i64: 96, 64>}, {pipeline_mode = #tpu.pipeline_mode<synchronous>, transform_indices = @transform_2, window_bounds = array<i64: 64, 64>}, {pipeline_mode = #tpu.pipeline_mode<synchronous>, transform_indices = @transform_3, window_bounds = array<i64: 1, 64>}, {transform_indices = @transform_4, window_bounds = array<i64: 16, 64>}, {transform_indices = @transform_5, window_bounds = array<i64: 16, 64>}]} {
    %c0_i32 = arith.constant 0 : i32
    %0 = arith.cmpi eq, %arg1, %c0_i32 : i32
    %1 = arith.extui %0 : i1 to i32
    %c0_i32_0 = arith.constant 0 : i32
    %2 = arith.cmpi ne, %1, %c0_i32_0 : i32
    scf.if %2 {
      %cst_10 = arith.constant 0.000000e+00 : f32
      %12 = vector.broadcast %cst_10 : f32 to vector<16x64xf32>
      %c0_11 = arith.constant 0 : index
      %c0_12 = arith.constant 0 : index
      %13 = vector.load %arg8[%c0_11, %c0_12] : memref<16x64xf32, #tpu.memory_space<vmem>>, vector<16x64xf32>
      tpu.vector_store %arg8[%c0_11, %c0_12], %12 {strides = array<i32>} : memref<16x64xf32, #tpu.memory_space<vmem>>, vector<16x64xf32>,
    } else {
    }
    %c0 = arith.constant 0 : index
    %c0_1 = arith.constant 0 : index
    %3 = vector.load %arg3[%c0, %c0_1] : memref<96x64xbf16, #tpu.memory_space<vmem>>, vector<96x64xbf16>
    %c0_2 = arith.constant 0 : index
    %c0_3 = arith.constant 0 : index
    %4 = vector.load %arg8[%c0_2, %c0_3] : memref<16x64xf32, #tpu.memory_space<vmem>>, vector<16x64xf32>
    %c0_4 = arith.constant 0 : index
    %c0_5 = arith.constant 0 : index
    %5 = vector.load %arg2[%c0_4, %c0_5] : memref<16x96xbf16, #tpu.memory_space<vmem>>, vector<16x96xbf16>
    %cst = arith.constant dense<0.000000e+00> : vector<16x64xf32>
    %6 = tpu.matmul %5, %3, %cst {dimension_numbers = #tpu.dot_dimension_numbers<[1], [0], [0], [1], [0, 0, 1, 1], [], []>} : vector<16x96xbf16>, vector<96x64xbf16>, vector<16x64xf32> -> vector<16x64xf32>
    %7 = arith.addf %4, %6 : vector<16x64xf32>
    %c0_6 = arith.constant 0 : index
    %c0_7 = arith.constant 0 : index
    %8 = vector.load %arg8[%c0_6, %c0_7] : memref<16x64xf32, #tpu.memory_space<vmem>>, vector<16x64xf32>
    tpu.vector_store %arg8[%c0_6, %c0_7], %7 {strides = array<i32>} : memref<16x64xf32, #tpu.memory_space<vmem>>, vector<16x64xf32>,
    %c0_i32_8 = arith.constant 0 : i32
    %9 = arith.cmpi eq, %arg1, %c0_i32_8 : i32
    %10 = arith.extui %9 : i1 to i32
    %c0_i32_9 = arith.constant 0 : i32
    %11 = arith.cmpi ne, %10, %c0_i32_9 : i32
    scf.if %11 {
      %c0_10 = arith.constant 0 : index
      %c0_11 = arith.constant 0 : index
      %12 = vector.load %arg8[%c0_10, %c0_11] : memref<16x64xf32, #tpu.memory_space<vmem>>, vector<16x64xf32>
      %cst_12 = arith.constant 0.000000e+00 : f32
      %13 = vector.broadcast %cst_12 : f32 to vector<16x64xf32>
      %14 = arith.cmpf ogt, %12, %13 : vector<16x64xf32>
      %c0_13 = arith.constant 0 : index
      %c0_14 = arith.constant 0 : index
      %15 = vector.load %arg5[%c0_13, %c0_14] : memref<1x64xf32, #tpu.memory_space<vmem>>, vector<1x64xf32>
      %16 = vector.broadcast %15 : vector<1x64xf32> to vector<16x64xf32>
      %17 = arith.mulf %16, %12 : vector<16x64xf32>
      %18 = arith.select %14, %12, %17 : vector<16x64xi1>, vector<16x64xf32>
      %c0_15 = arith.constant 0 : index
      %c0_16 = arith.constant 0 : index
      %19 = vector.load %arg6[%c0_15, %c0_16] : memref<16x64xf32, #tpu.memory_space<vmem>>, vector<16x64xf32>
      tpu.vector_store %arg6[%c0_15, %c0_16], %18 {strides = array<i32>} : memref<16x64xf32, #tpu.memory_space<vmem>>, vector<16x64xf32>,
      %20 = arith.truncf %18 : vector<16x64xf32> to vector<16x64xbf16>
      %c0_17 = arith.constant 0 : index
      %c0_18 = arith.constant 0 : index
      %21 = vector.load %arg4[%c0_17, %c0_18] : memref<64x64xbf16, #tpu.memory_space<vmem>>, vector<64x64xbf16>
      %cst_19 = arith.constant dense<0.000000e+00> : vector<16x64xf32>
      %22 = tpu.matmul %20, %21, %cst_19 {dimension_numbers = #tpu.dot_dimension_numbers<[1], [0], [0], [1], [0, 0, 1, 1], [], []>} : vector<16x64xbf16>, vector<64x64xbf16>, vector<16x64xf32> -> vector<16x64xf32>
      %23 = arith.truncf %22 : vector<16x64xf32> to vector<16x64xbf16>
      %c0_20 = arith.constant 0 : index
      %c0_21 = arith.constant 0 : index
      %24 = vector.load %arg7[%c0_20, %c0_21] : memref<16x64xbf16, #tpu.memory_space<vmem>>, vector<16x64xbf16>
      tpu.vector_store %arg7[%c0_20, %c0_21], %23 {strides = array<i32>} : memref<16x64xbf16, #tpu.memory_space<vmem>>, vector<16x64xbf16>,
    } else {
    }
    return
  }
  func.func @transform_0(%arg0: i32, %arg1: i32) -> (i32, i32) {
    %c0_i32 = arith.constant 0 : i32
    return %arg0, %arg1 : i32, i32
  }
  func.func @transform_1(%arg0: i32, %arg1: i32) -> (i32, i32) {
    %c0_i32 = arith.constant 0 : i32
    %c0_i32_0 = arith.constant 0 : i32
    %c0_i32_1 = arith.constant 0 : i32
    return %c0_i32, %c0_i32_0 : i32, i32
  }
  func.func @transform_2(%arg0: i32, %arg1: i32) -> (i32, i32) {
    %c0_i32 = arith.constant 0 : i32
    %c0_i32_0 = arith.constant 0 : i32
    %c0_i32_1 = arith.constant 0 : i32
    return %c0_i32, %c0_i32_0 : i32, i32
  }
  func.func @transform_3(%arg0: i32, %arg1: i32) -> (i32, i32) {
    %c0_i32 = arith.constant 0 : i32
    %c0_i32_0 = arith.constant 0 : i32
    %c0_i32_1 = arith.constant 0 : i32
    return %c0_i32, %c0_i32_0 : i32, i32
  }
  func.func @transform_4(%arg0: i32, %arg1: i32) -> (i32, i32) {
    %c0_i32 = arith.constant 0 : i32
    %c0_i32_0 = arith.constant 0 : i32
    return %arg0, %c0_i32 : i32, i32
  }
  func.func @transform_5(%arg0: i32, %arg1: i32) -> (i32, i32) {
    %c0_i32 = arith.constant 0 : i32
    %c0_i32_0 = arith.constant 0 : i32
    return %arg0, %c0_i32 : i32, i32
  }
}

module attributes {stable_mosaic.version = 11 : i64} {
  func.func @_spmm_prelu_kernel(%arg0: i32, %arg1: i32, %arg2: memref<16x96xbf16, #tpu.memory_space<vmem>>, %arg3: memref<96x64xbf16, #tpu.memory_space<vmem>>, %arg4: memref<64x64xbf16, #tpu.memory_space<vmem>>, %arg5: memref<1x64xf32, #tpu.memory_space<vmem>>, %arg6: memref<16x64xf32, #tpu.memory_space<vmem>>, %arg7: memref<16x64xbf16, #tpu.memory_space<vmem>>, %arg8: memref<16x64xf32, #tpu.memory_space<vmem>>) attributes {dimension_semantics = [#tpu.dimension_semantics<parallel>, #tpu.dimension_semantics<arbitrary>], iteration_bounds = array<i64: 5, 1>, scalar_prefetch = 0 : i64, scratch_operands = 1 : i64, tpu.core_type = #tpu.core_type<tc>, window_params = [{transform_indices = @transform_0, window_bounds = array<i64: 16, 96>}, {pipeline_mode = #tpu.pipeline_mode<synchronous>, transform_indices = @transform_1, window_bounds = array<i64: 96, 64>}, {pipeline_mode = #tpu.pipeline_mode<synchronous>, transform_indices = @transform_2, window_bounds = array<i64: 64, 64>}, {pipeline_mode = #tpu.pipeline_mode<synchronous>, transform_indices = @transform_3, window_bounds = array<i64: 1, 64>}, {transform_indices = @transform_4, window_bounds = array<i64: 16, 64>}, {transform_indices = @transform_5, window_bounds = array<i64: 16, 64>}]} {
    %c0_i32 = arith.constant 0 : i32
    %0 = arith.cmpi eq, %arg1, %c0_i32 : i32
    %1 = arith.extui %0 : i1 to i32
    %c0_i32_0 = arith.constant 0 : i32
    %2 = arith.cmpi ne, %1, %c0_i32_0 : i32
    scf.if %2 {
      %cst_10 = arith.constant 0.000000e+00 : f32
      %12 = vector.broadcast %cst_10 : f32 to vector<16x64xf32>
      %c0_11 = arith.constant 0 : index
      %c0_12 = arith.constant 0 : index
      %13 = vector.load %arg8[%c0_11, %c0_12] : memref<16x64xf32, #tpu.memory_space<vmem>>, vector<16x64xf32>
      tpu.vector_store %arg8[%c0_11, %c0_12], %12 {strides = array<i32>} : memref<16x64xf32, #tpu.memory_space<vmem>>, vector<16x64xf32>,
    } else {
    }
    %c0 = arith.constant 0 : index
    %c0_1 = arith.constant 0 : index
    %3 = vector.load %arg3[%c0, %c0_1] : memref<96x64xbf16, #tpu.memory_space<vmem>>, vector<96x64xbf16>
    %c0_2 = arith.constant 0 : index
    %c0_3 = arith.constant 0 : index
    %4 = vector.load %arg8[%c0_2, %c0_3] : memref<16x64xf32, #tpu.memory_space<vmem>>, vector<16x64xf32>
    %c0_4 = arith.constant 0 : index
    %c0_5 = arith.constant 0 : index
    %5 = vector.load %arg2[%c0_4, %c0_5] : memref<16x96xbf16, #tpu.memory_space<vmem>>, vector<16x96xbf16>
    %cst = arith.constant dense<0.000000e+00> : vector<16x64xf32>
    %6 = tpu.matmul %5, %3, %cst {dimension_numbers = #tpu.dot_dimension_numbers<[1], [0], [0], [1], [0, 0, 1, 1], [], []>} : vector<16x96xbf16>, vector<96x64xbf16>, vector<16x64xf32> -> vector<16x64xf32>
    %7 = arith.addf %4, %6 : vector<16x64xf32>
    %c0_6 = arith.constant 0 : index
    %c0_7 = arith.constant 0 : index
    %8 = vector.load %arg8[%c0_6, %c0_7] : memref<16x64xf32, #tpu.memory_space<vmem>>, vector<16x64xf32>
    tpu.vector_store %arg8[%c0_6, %c0_7], %7 {strides = array<i32>} : memref<16x64xf32, #tpu.memory_space<vmem>>, vector<16x64xf32>,
    %c0_i32_8 = arith.constant 0 : i32
    %9 = arith.cmpi eq, %arg1, %c0_i32_8 : i32
    %10 = arith.extui %9 : i1 to i32
    %c0_i32_9 = arith.constant 0 : i32
    %11 = arith.cmpi ne, %10, %c0_i32_9 : i32
    scf.if %11 {
      %c0_10 = arith.constant 0 : index
      %c0_11 = arith.constant 0 : index
      %12 = vector.load %arg8[%c0_10, %c0_11] : memref<16x64xf32, #tpu.memory_space<vmem>>, vector<16x64xf32>
      %cst_12 = arith.constant 0.000000e+00 : f32
      %13 = vector.broadcast %cst_12 : f32 to vector<16x64xf32>
      %14 = arith.cmpf ogt, %12, %13 : vector<16x64xf32>
      %c0_13 = arith.constant 0 : index
      %c0_14 = arith.constant 0 : index
      %15 = vector.load %arg5[%c0_13, %c0_14] : memref<1x64xf32, #tpu.memory_space<vmem>>, vector<1x64xf32>
      %16 = vector.broadcast %15 : vector<1x64xf32> to vector<16x64xf32>
      %17 = arith.mulf %16, %12 : vector<16x64xf32>
      %18 = arith.select %14, %12, %17 : vector<16x64xi1>, vector<16x64xf32>
      %c0_15 = arith.constant 0 : index
      %c0_16 = arith.constant 0 : index
      %19 = vector.load %arg6[%c0_15, %c0_16] : memref<16x64xf32, #tpu.memory_space<vmem>>, vector<16x64xf32>
      tpu.vector_store %arg6[%c0_15, %c0_16], %18 {strides = array<i32>} : memref<16x64xf32, #tpu.memory_space<vmem>>, vector<16x64xf32>,
      %20 = arith.truncf %18 : vector<16x64xf32> to vector<16x64xbf16>
      %c0_17 = arith.constant 0 : index
      %c0_18 = arith.constant 0 : index
      %21 = vector.load %arg4[%c0_17, %c0_18] : memref<64x64xbf16, #tpu.memory_space<vmem>>, vector<64x64xbf16>
      %cst_19 = arith.constant dense<0.000000e+00> : vector<16x64xf32>
      %22 = tpu.matmul %20, %21, %cst_19 {dimension_numbers = #tpu.dot_dimension_numbers<[1], [0], [0], [1], [0, 0, 1, 1], [], []>} : vector<16x64xbf16>, vector<64x64xbf16>, vector<16x64xf32> -> vector<16x64xf32>
      %23 = arith.truncf %22 : vector<16x64xf32> to vector<16x64xbf16>
      %c0_20 = arith.constant 0 : index
      %c0_21 = arith.constant 0 : index
      %24 = vector.load %arg7[%c0_20, %c0_21] : memref<16x64xbf16, #tpu.memory_space<vmem>>, vector<16x64xbf16>
      tpu.vector_store %arg7[%c0_20, %c0_21], %23 {strides = array<i32>} : memref<16x64xbf16, #tpu.memory_space<vmem>>, vector<16x64xbf16>,
    } else {
    }
    return
  }
  func.func @transform_0(%arg0: i32, %arg1: i32) -> (i32, i32) {
    %c0_i32 = arith.constant 0 : i32
    return %arg0, %arg1 : i32, i32
  }
  func.func @transform_1(%arg0: i32, %arg1: i32) -> (i32, i32) {
    %c0_i32 = arith.constant 0 : i32
    %c0_i32_0 = arith.constant 0 : i32
    %c0_i32_1 = arith.constant 0 : i32
    return %c0_i32, %c0_i32_0 : i32, i32
  }
  func.func @transform_2(%arg0: i32, %arg1: i32) -> (i32, i32) {
    %c0_i32 = arith.constant 0 : i32
    %c0_i32_0 = arith.constant 0 : i32
    %c0_i32_1 = arith.constant 0 : i32
    return %c0_i32, %c0_i32_0 : i32, i32
  }
  func.func @transform_3(%arg0: i32, %arg1: i32) -> (i32, i32) {
    %c0_i32 = arith.constant 0 : i32
    %c0_i32_0 = arith.constant 0 : i32
    %c0_i32_1 = arith.constant 0 : i32
    return %c0_i32, %c0_i32_0 : i32, i32
  }
  func.func @transform_4(%arg0: i32, %arg1: i32) -> (i32, i32) {
    %c0_i32 = arith.constant 0 : i32
    %c0_i32_0 = arith.constant 0 : i32
    return %arg0, %c0_i32 : i32, i32
  }
  func.func @transform_5(%arg0: i32, %arg1: i32) -> (i32, i32) {
    %c0_i32 = arith.constant 0 : i32
    %c0_i32_0 = arith.constant 0 : i32
    return %arg0, %c0_i32 : i32, i32
  }
}

module attributes {stable_mosaic.version = 11 : i64} {
  func.func @_spmm_prelu_kernel(%arg0: i32, %arg1: i32, %arg2: memref<16x96xbf16, #tpu.memory_space<vmem>>, %arg3: memref<96x64xbf16, #tpu.memory_space<vmem>>, %arg4: memref<1x64xf32, #tpu.memory_space<vmem>>, %arg5: memref<16x64xf32, #tpu.memory_space<vmem>>, %arg6: memref<16x64xf32, #tpu.memory_space<vmem>>) attributes {dimension_semantics = [#tpu.dimension_semantics<parallel>, #tpu.dimension_semantics<arbitrary>], iteration_bounds = array<i64: 5, 1>, scalar_prefetch = 0 : i64, scratch_operands = 1 : i64, tpu.core_type = #tpu.core_type<tc>, window_params = [{transform_indices = @transform_0, window_bounds = array<i64: 16, 96>}, {pipeline_mode = #tpu.pipeline_mode<synchronous>, transform_indices = @transform_1, window_bounds = array<i64: 96, 64>}, {pipeline_mode = #tpu.pipeline_mode<synchronous>, transform_indices = @transform_2, window_bounds = array<i64: 1, 64>}, {transform_indices = @transform_3, window_bounds = array<i64: 16, 64>}]} {
    %c0_i32 = arith.constant 0 : i32
    %0 = arith.cmpi eq, %arg1, %c0_i32 : i32
    %1 = arith.extui %0 : i1 to i32
    %c0_i32_0 = arith.constant 0 : i32
    %2 = arith.cmpi ne, %1, %c0_i32_0 : i32
    scf.if %2 {
      %cst_10 = arith.constant 0.000000e+00 : f32
      %12 = vector.broadcast %cst_10 : f32 to vector<16x64xf32>
      %c0_11 = arith.constant 0 : index
      %c0_12 = arith.constant 0 : index
      %13 = vector.load %arg6[%c0_11, %c0_12] : memref<16x64xf32, #tpu.memory_space<vmem>>, vector<16x64xf32>
      tpu.vector_store %arg6[%c0_11, %c0_12], %12 {strides = array<i32>} : memref<16x64xf32, #tpu.memory_space<vmem>>, vector<16x64xf32>,
    } else {
    }
    %c0 = arith.constant 0 : index
    %c0_1 = arith.constant 0 : index
    %3 = vector.load %arg3[%c0, %c0_1] : memref<96x64xbf16, #tpu.memory_space<vmem>>, vector<96x64xbf16>
    %c0_2 = arith.constant 0 : index
    %c0_3 = arith.constant 0 : index
    %4 = vector.load %arg6[%c0_2, %c0_3] : memref<16x64xf32, #tpu.memory_space<vmem>>, vector<16x64xf32>
    %c0_4 = arith.constant 0 : index
    %c0_5 = arith.constant 0 : index
    %5 = vector.load %arg2[%c0_4, %c0_5] : memref<16x96xbf16, #tpu.memory_space<vmem>>, vector<16x96xbf16>
    %cst = arith.constant dense<0.000000e+00> : vector<16x64xf32>
    %6 = tpu.matmul %5, %3, %cst {dimension_numbers = #tpu.dot_dimension_numbers<[1], [0], [0], [1], [0, 0, 1, 1], [], []>} : vector<16x96xbf16>, vector<96x64xbf16>, vector<16x64xf32> -> vector<16x64xf32>
    %7 = arith.addf %4, %6 : vector<16x64xf32>
    %c0_6 = arith.constant 0 : index
    %c0_7 = arith.constant 0 : index
    %8 = vector.load %arg6[%c0_6, %c0_7] : memref<16x64xf32, #tpu.memory_space<vmem>>, vector<16x64xf32>
    tpu.vector_store %arg6[%c0_6, %c0_7], %7 {strides = array<i32>} : memref<16x64xf32, #tpu.memory_space<vmem>>, vector<16x64xf32>,
    %c0_i32_8 = arith.constant 0 : i32
    %9 = arith.cmpi eq, %arg1, %c0_i32_8 : i32
    %10 = arith.extui %9 : i1 to i32
    %c0_i32_9 = arith.constant 0 : i32
    %11 = arith.cmpi ne, %10, %c0_i32_9 : i32
    scf.if %11 {
      %c0_10 = arith.constant 0 : index
      %c0_11 = arith.constant 0 : index
      %12 = vector.load %arg6[%c0_10, %c0_11] : memref<16x64xf32, #tpu.memory_space<vmem>>, vector<16x64xf32>
      %cst_12 = arith.constant 0.000000e+00 : f32
      %13 = vector.broadcast %cst_12 : f32 to vector<16x64xf32>
      %14 = arith.cmpf ogt, %12, %13 : vector<16x64xf32>
      %c0_13 = arith.constant 0 : index
      %c0_14 = arith.constant 0 : index
      %15 = vector.load %arg4[%c0_13, %c0_14] : memref<1x64xf32, #tpu.memory_space<vmem>>, vector<1x64xf32>
      %16 = vector.broadcast %15 : vector<1x64xf32> to vector<16x64xf32>
      %17 = arith.mulf %16, %12 : vector<16x64xf32>
      %18 = arith.select %14, %12, %17 : vector<16x64xi1>, vector<16x64xf32>
      %c0_15 = arith.constant 0 : index
      %c0_16 = arith.constant 0 : index
      %19 = vector.load %arg5[%c0_15, %c0_16] : memref<16x64xf32, #tpu.memory_space<vmem>>, vector<16x64xf32>
      tpu.vector_store %arg5[%c0_15, %c0_16], %18 {strides = array<i32>} : memref<16x64xf32, #tpu.memory_space<vmem>>, vector<16x64xf32>,
    } else {
    }
    return
  }
  func.func @transform_0(%arg0: i32, %arg1: i32) -> (i32, i32) {
    %c0_i32 = arith.constant 0 : i32
    return %arg0, %arg1 : i32, i32
  }
  func.func @transform_1(%arg0: i32, %arg1: i32) -> (i32, i32) {
    %c0_i32 = arith.constant 0 : i32
    %c0_i32_0 = arith.constant 0 : i32
    %c0_i32_1 = arith.constant 0 : i32
    return %c0_i32, %c0_i32_0 : i32, i32
  }
  func.func @transform_2(%arg0: i32, %arg1: i32) -> (i32, i32) {
    %c0_i32 = arith.constant 0 : i32
    %c0_i32_0 = arith.constant 0 : i32
    %c0_i32_1 = arith.constant 0 : i32
    return %c0_i32, %c0_i32_0 : i32, i32
  }
  func.func @transform_3(%arg0: i32, %arg1: i32) -> (i32, i32) {
    %c0_i32 = arith.constant 0 : i32
    %c0_i32_0 = arith.constant 0 : i32
    return %arg0, %c0_i32 : i32, i32
  }
}

module attributes {stable_mosaic.version = 11 : i64} {
  func.func @_group_sum2_kernel(%arg0: i32, %arg1: memref<8x320xf32, #tpu.memory_space<vmem>>, %arg2: memref<8x320xf32, #tpu.memory_space<vmem>>, %arg3: memref<8x128xf32, #tpu.memory_space<vmem>>) attributes {dimension_semantics = [#tpu.dimension_semantics<parallel>], iteration_bounds = array<i64: 2>, scalar_prefetch = 0 : i64, scratch_operands = 0 : i64, tpu.core_type = #tpu.core_type<tc>, window_params = [{transform_indices = @transform_0, window_bounds = array<i64: 8, 320>}, {transform_indices = @transform_1, window_bounds = array<i64: 8, 320>}, {transform_indices = @transform_2, window_bounds = array<i64: 8, 128>}]} {
    %c0 = arith.constant 0 : index
    %c0_0 = arith.constant 0 : index
    %0 = vector.load %arg1[%c0, %c0_0] : memref<8x320xf32, #tpu.memory_space<vmem>>, vector<8x320xf32>
    %c0_1 = arith.constant 0 : index
    %c0_2 = arith.constant 0 : index
    %1 = vector.load %arg2[%c0_1, %c0_2] : memref<8x320xf32, #tpu.memory_space<vmem>>, vector<8x320xf32>
    %2 = vector.extract_strided_slice %0 {offsets = [0, 0], sizes = [8, 64], strides = [1, 1]} : vector<8x320xf32> to vector<8x64xf32>
    %3 = vector.extract_strided_slice %1 {offsets = [0, 0], sizes = [8, 64], strides = [1, 1]} : vector<8x320xf32> to vector<8x64xf32>
    %4 = vector.extract_strided_slice %0 {offsets = [0, 64], sizes = [8, 64], strides = [1, 1]} : vector<8x320xf32> to vector<8x64xf32>
    %5 = arith.addf %2, %4 : vector<8x64xf32>
    %6 = vector.extract_strided_slice %1 {offsets = [0, 64], sizes = [8, 64], strides = [1, 1]} : vector<8x320xf32> to vector<8x64xf32>
    %7 = arith.addf %3, %6 : vector<8x64xf32>
    %8 = vector.extract_strided_slice %0 {offsets = [0, 128], sizes = [8, 64], strides = [1, 1]} : vector<8x320xf32> to vector<8x64xf32>
    %9 = arith.addf %5, %8 : vector<8x64xf32>
    %10 = vector.extract_strided_slice %1 {offsets = [0, 128], sizes = [8, 64], strides = [1, 1]} : vector<8x320xf32> to vector<8x64xf32>
    %11 = arith.addf %7, %10 : vector<8x64xf32>
    %12 = vector.extract_strided_slice %0 {offsets = [0, 192], sizes = [8, 64], strides = [1, 1]} : vector<8x320xf32> to vector<8x64xf32>
    %13 = arith.addf %9, %12 : vector<8x64xf32>
    %14 = vector.extract_strided_slice %1 {offsets = [0, 192], sizes = [8, 64], strides = [1, 1]} : vector<8x320xf32> to vector<8x64xf32>
    %15 = arith.addf %11, %14 : vector<8x64xf32>
    %16 = vector.extract_strided_slice %0 {offsets = [0, 256], sizes = [8, 64], strides = [1, 1]} : vector<8x320xf32> to vector<8x64xf32>
    %17 = arith.addf %13, %16 : vector<8x64xf32>
    %18 = vector.extract_strided_slice %1 {offsets = [0, 256], sizes = [8, 64], strides = [1, 1]} : vector<8x320xf32> to vector<8x64xf32>
    %19 = arith.addf %15, %18 : vector<8x64xf32>
    %20 = tpu.concatenate %17, %19 in 1 : vector<8x64xf32>, vector<8x64xf32> -> vector<8x128xf32>
    %cst = arith.constant 2.000000e-01 : f32
    %21 = vector.broadcast %cst : f32 to vector<8x128xf32>
    %22 = arith.mulf %20, %21 : vector<8x128xf32>
    %c0_3 = arith.constant 0 : index
    %c0_4 = arith.constant 0 : index
    %23 = vector.load %arg3[%c0_3, %c0_4] : memref<8x128xf32, #tpu.memory_space<vmem>>, vector<8x128xf32>
    tpu.vector_store %arg3[%c0_3, %c0_4], %22 {strides = array<i32>} : memref<8x128xf32, #tpu.memory_space<vmem>>, vector<8x128xf32>,
    return
  }
  func.func @transform_0(%arg0: i32) -> (i32, i32) {
    %c0_i32 = arith.constant 0 : i32
    %c0_i32_0 = arith.constant 0 : i32
    return %arg0, %c0_i32 : i32, i32
  }
  func.func @transform_1(%arg0: i32) -> (i32, i32) {
    %c0_i32 = arith.constant 0 : i32
    %c0_i32_0 = arith.constant 0 : i32
    return %arg0, %c0_i32 : i32, i32
  }
  func.func @transform_2(%arg0: i32) -> (i32, i32) {
    %c0_i32 = arith.constant 0 : i32
    %c0_i32_0 = arith.constant 0 : i32
    return %arg0, %c0_i32 : i32, i32
  }
}

module attributes {stable_mosaic.version = 11 : i64} {
  func.func @_spmm_prelu_kernel(%arg0: i32, %arg1: i32, %arg2: memref<16x96xbf16, #tpu.memory_space<vmem>>, %arg3: memref<96x64xbf16, #tpu.memory_space<vmem>>, %arg4: memref<1x64xf32, #tpu.memory_space<vmem>>, %arg5: memref<16x64xf32, #tpu.memory_space<vmem>>, %arg6: memref<16x64xf32, #tpu.memory_space<vmem>>) attributes {dimension_semantics = [#tpu.dimension_semantics<parallel>, #tpu.dimension_semantics<arbitrary>], iteration_bounds = array<i64: 1, 1>, scalar_prefetch = 0 : i64, scratch_operands = 1 : i64, tpu.core_type = #tpu.core_type<tc>, window_params = [{transform_indices = @transform_0, window_bounds = array<i64: 16, 96>}, {pipeline_mode = #tpu.pipeline_mode<synchronous>, transform_indices = @transform_1, window_bounds = array<i64: 96, 64>}, {pipeline_mode = #tpu.pipeline_mode<synchronous>, transform_indices = @transform_2, window_bounds = array<i64: 1, 64>}, {transform_indices = @transform_3, window_bounds = array<i64: 16, 64>}]} {
    %c0_i32 = arith.constant 0 : i32
    %0 = arith.cmpi eq, %arg1, %c0_i32 : i32
    %1 = arith.extui %0 : i1 to i32
    %c0_i32_0 = arith.constant 0 : i32
    %2 = arith.cmpi ne, %1, %c0_i32_0 : i32
    scf.if %2 {
      %cst_10 = arith.constant 0.000000e+00 : f32
      %12 = vector.broadcast %cst_10 : f32 to vector<16x64xf32>
      %c0_11 = arith.constant 0 : index
      %c0_12 = arith.constant 0 : index
      %13 = vector.load %arg6[%c0_11, %c0_12] : memref<16x64xf32, #tpu.memory_space<vmem>>, vector<16x64xf32>
      tpu.vector_store %arg6[%c0_11, %c0_12], %12 {strides = array<i32>} : memref<16x64xf32, #tpu.memory_space<vmem>>, vector<16x64xf32>,
    } else {
    }
    %c0 = arith.constant 0 : index
    %c0_1 = arith.constant 0 : index
    %3 = vector.load %arg3[%c0, %c0_1] : memref<96x64xbf16, #tpu.memory_space<vmem>>, vector<96x64xbf16>
    %c0_2 = arith.constant 0 : index
    %c0_3 = arith.constant 0 : index
    %4 = vector.load %arg6[%c0_2, %c0_3] : memref<16x64xf32, #tpu.memory_space<vmem>>, vector<16x64xf32>
    %c0_4 = arith.constant 0 : index
    %c0_5 = arith.constant 0 : index
    %5 = vector.load %arg2[%c0_4, %c0_5] : memref<16x96xbf16, #tpu.memory_space<vmem>>, vector<16x96xbf16>
    %cst = arith.constant dense<0.000000e+00> : vector<16x64xf32>
    %6 = tpu.matmul %5, %3, %cst {dimension_numbers = #tpu.dot_dimension_numbers<[1], [0], [0], [1], [0, 0, 1, 1], [], []>} : vector<16x96xbf16>, vector<96x64xbf16>, vector<16x64xf32> -> vector<16x64xf32>
    %7 = arith.addf %4, %6 : vector<16x64xf32>
    %c0_6 = arith.constant 0 : index
    %c0_7 = arith.constant 0 : index
    %8 = vector.load %arg6[%c0_6, %c0_7] : memref<16x64xf32, #tpu.memory_space<vmem>>, vector<16x64xf32>
    tpu.vector_store %arg6[%c0_6, %c0_7], %7 {strides = array<i32>} : memref<16x64xf32, #tpu.memory_space<vmem>>, vector<16x64xf32>,
    %c0_i32_8 = arith.constant 0 : i32
    %9 = arith.cmpi eq, %arg1, %c0_i32_8 : i32
    %10 = arith.extui %9 : i1 to i32
    %c0_i32_9 = arith.constant 0 : i32
    %11 = arith.cmpi ne, %10, %c0_i32_9 : i32
    scf.if %11 {
      %c0_10 = arith.constant 0 : index
      %c0_11 = arith.constant 0 : index
      %12 = vector.load %arg6[%c0_10, %c0_11] : memref<16x64xf32, #tpu.memory_space<vmem>>, vector<16x64xf32>
      %cst_12 = arith.constant 0.000000e+00 : f32
      %13 = vector.broadcast %cst_12 : f32 to vector<16x64xf32>
      %14 = arith.cmpf ogt, %12, %13 : vector<16x64xf32>
      %c0_13 = arith.constant 0 : index
      %c0_14 = arith.constant 0 : index
      %15 = vector.load %arg4[%c0_13, %c0_14] : memref<1x64xf32, #tpu.memory_space<vmem>>, vector<1x64xf32>
      %16 = vector.broadcast %15 : vector<1x64xf32> to vector<16x64xf32>
      %17 = arith.mulf %16, %12 : vector<16x64xf32>
      %18 = arith.select %14, %12, %17 : vector<16x64xi1>, vector<16x64xf32>
      %c0_15 = arith.constant 0 : index
      %c0_16 = arith.constant 0 : index
      %19 = vector.load %arg5[%c0_15, %c0_16] : memref<16x64xf32, #tpu.memory_space<vmem>>, vector<16x64xf32>
      tpu.vector_store %arg5[%c0_15, %c0_16], %18 {strides = array<i32>} : memref<16x64xf32, #tpu.memory_space<vmem>>, vector<16x64xf32>,
    } else {
    }
    return
  }
  func.func @transform_0(%arg0: i32, %arg1: i32) -> (i32, i32) {
    %c0_i32 = arith.constant 0 : i32
    return %arg0, %arg1 : i32, i32
  }
  func.func @transform_1(%arg0: i32, %arg1: i32) -> (i32, i32) {
    %c0_i32 = arith.constant 0 : i32
    %c0_i32_0 = arith.constant 0 : i32
    %c0_i32_1 = arith.constant 0 : i32
    return %c0_i32, %c0_i32_0 : i32, i32
  }
  func.func @transform_2(%arg0: i32, %arg1: i32) -> (i32, i32) {
    %c0_i32 = arith.constant 0 : i32
    %c0_i32_0 = arith.constant 0 : i32
    %c0_i32_1 = arith.constant 0 : i32
    return %c0_i32, %c0_i32_0 : i32, i32
  }
  func.func @transform_3(%arg0: i32, %arg1: i32) -> (i32, i32) {
    %c0_i32 = arith.constant 0 : i32
    %c0_i32_0 = arith.constant 0 : i32
    return %arg0, %c0_i32 : i32, i32
  }
}

</mosaic_0001>

<llo_original>
// kernel: rgcn_forward.10
$region0: #{rgcn_forward.10}
  #allocation0 [shape = 'u32[]', space=smem, size = 0x4, offset = 0x4, fixed_abs, tag = 'smem constant byte address 0x4 - core index']
  #allocation1 [shape = 'u32[72,128]{1,0:T(1,128)}', space=vmem, size = 0x9000, scoped, tag = 'internal scratch']
  %s0 = inlined_call_operand.vmem [shape: f32[16,320], index: 0, kind: input, shape index: {}]
  %s1 = inlined_call_operand.vmem [shape: f32[16,320], index: 1, kind: input, shape index: {}]
  %s2 = inlined_call_operand.vmem [shape: bf16[128,64], index: 2, kind: input, shape index: {}]
  %s3 = inlined_call_operand.vmem [shape: f32[1,64], index: 3, kind: input, shape index: {}]
  %s4 = inlined_call_operand.vmem [shape: bf16[16,64], index: 4, kind: output, shape index: {}]
  %s5 = sld [smem:[#allocation0]]
  $region26: #{rgcn_forward.10} parent=0
    _
  %s7 = ssub.s32 1, %s5
  %s8 = scalar_select 0, %s7, %s5
  // Predicated region
  $region2: #{rgcn_forward.10} parent=0 // pred_check
    _
  $region3: #{rgcn_forward.10} parent=0 // pred_check_branch
    %10 = sbr.rel (0) target = $region5
  $region4: #{rgcn_forward.10} parent=0 // pred_region
    _
  $region5: #{rgcn_forward.10} parent=0 // pred_fallthru
    _
  // Predicated region
  $region6: #{rgcn_forward.10} parent=0 // pred_check
    _
  $region7: #{rgcn_forward.10} parent=0 // pred_check_branch
    %12 = sbr.rel (0) target = $region9
  $region8: #{rgcn_forward.10} parent=0 // pred_region
    _
  $region9: #{rgcn_forward.10} parent=0 // pred_fallthru
    _
  // Predicated region
  $region10: #{rgcn_forward.10} parent=0 // pred_check
    _
  $region11: #{rgcn_forward.10} parent=0 // pred_check_branch
    %14 = sbr.rel (0) target = $region13
  $region12: #{rgcn_forward.10} parent=0 // pred_region
    _
  $region13: #{rgcn_forward.10} parent=0 // pred_fallthru
    _
  // Predicated region
  $region14: #{rgcn_forward.10} parent=0 // pred_check
    _
  $region15: #{rgcn_forward.10} parent=0 // pred_check_branch
    %16 = sbr.rel (0) target = $region17
  $region16: #{rgcn_forward.10} parent=0 // pred_region
    _
  $region17: #{rgcn_forward.10} parent=0 // pred_fallthru
    _
  %v17 = vld [vmem:[%s0] sm:$0xff]
  %v18 = vld [vmem:[%s0 + $0x8] sm:$0xff]
  %v19 = vld [vmem:[%s0 + $0x10] sm:$0xff]
  %v20 = vld [vmem:[%s0 + $0x18] sm:$0xff]
  %v21 = vld [vmem:[%s0 + $0x20] sm:$0xff]
  %v22 = vld [vmem:[%s0 + $0x28] sm:$0xff]
  %v23 = vld [vmem:[%s1] sm:$0xff]
  %v24 = vld [vmem:[%s1 + $0x8] sm:$0xff]
  %v25 = vld [vmem:[%s1 + $0x10] sm:$0xff]
  %v26 = vld [vmem:[%s1 + $0x18] sm:$0xff]
  %v27 = vld [vmem:[%s1 + $0x20] sm:$0xff]
  %v28 = vld [vmem:[%s1 + $0x28] sm:$0xff]
  %31 = vrot.lane.b32.xlu0 %v17, 64
  %v32 = vpop.permute.xlu0 %31
  %33 = vrot.lane.b32.xlu0 %v20, 64
  %v34 = vpop.permute.xlu0 %33
  %v37 = vadd.f32 %v17, %v32
  %v38 = vadd.f32 %v20, %v34
  %41 = vrot.lane.b32.xlu0 %v23, 64
  %v42 = vpop.permute.xlu0 %41
  %43 = vrot.lane.b32.xlu0 %v26, 64
  %v44 = vpop.permute.xlu0 %43
  %v47 = vadd.f32 %v23, %v42
  %v48 = vadd.f32 %v26, %v44
  %v49 = vadd.f32 %v37, %v18
  %v50 = vadd.f32 %v38, %v21
  %v51 = vadd.f32 %v47, %v24
  %v52 = vadd.f32 %v48, %v27
  %55 = vrot.lane.b32.xlu0 %v18, 64
  %v56 = vpop.permute.xlu0 %55
  %57 = vrot.lane.b32.xlu0 %v21, 64
  %v58 = vpop.permute.xlu0 %57
  %v61 = vadd.f32 %v49, %v56
  %v62 = vadd.f32 %v50, %v58
  %65 = vrot.lane.b32.xlu0 %v24, 64
  %v66 = vpop.permute.xlu0 %65
  %67 = vrot.lane.b32.xlu0 %v27, 64
  %v68 = vpop.permute.xlu0 %67
  %v71 = vadd.f32 %v51, %v66
  %v72 = vadd.f32 %v52, %v68
  %v73 = vadd.f32 %v61, %v19
  %v74 = vadd.f32 %v62, %v22
  %v75 = vadd.f32 %v71, %v25
  %v76 = vadd.f32 %v72, %v28
  %79 = vrot.lane.b32.xlu0 %v75, 64
  %v80 = vpop.permute.xlu0 %79
  %81 = vrot.lane.b32.xlu0 %v76, 64
  %v82 = vpop.permute.xlu0 %81
  %vm85 = vcmask 523264
  %v86 = vsel %vm85, %v73, %v80
  %v87 = vsel %vm85, %v74, %v82
  %v88 = vmul.f32 %v86, 0.25
  %v89 = vmul.f32 %v87, 0.25
  %v90 = vpack.c.bf16 %v89, %v88
  %v91 = vld [vmem:[%s2] sm:$0xf]
  %v92 = vld [vmem:[%s2 + $0x4] sm:$0xf]
  %v93 = vld [vmem:[%s2 + $0x8] sm:$0xf]
  %v94 = vld [vmem:[%s2 + $0xc] sm:$0xf]
  %v95 = vld [vmem:[%s2 + $0x10] sm:$0xf]
  %v96 = vld [vmem:[%s2 + $0x14] sm:$0xf]
  %v97 = vld [vmem:[%s2 + $0x18] sm:$0xf]
  %v98 = vld [vmem:[%s2 + $0x1c] sm:$0xf]
  %v99 = vld [vmem:[%s2 + $0x20] sm:$0xf]
  %v100 = vld [vmem:[%s2 + $0x24] sm:$0xf]
  %v101 = vld [vmem:[%s2 + $0x28] sm:$0xf]
  %v102 = vld [vmem:[%s2 + $0x2c] sm:$0xf]
  %v103 = vld [vmem:[%s2 + $0x30] sm:$0xf]
  %v104 = vld [vmem:[%s2 + $0x34] sm:$0xf]
  %v105 = vld [vmem:[%s2 + $0x38] sm:$0xf]
  %v106 = vld [vmem:[%s2 + $0x3c] sm:$0xf]
  %v107 = vld [vmem:[%s3] sm:$0x1]
  %v109 = vperm.slane %v107, 0
  %v127 = vunpack.c.l.b16 %v91
  %v128 = vunpack.c.l.b16 %v92
  %v129 = vunpack.c.l.b16 %v93
  %v130 = vunpack.c.l.b16 %v94
  %v131 = vunpack.c.l.b16 %v95
  %v132 = vunpack.c.l.b16 %v96
  %v133 = vunpack.c.l.b16 %v97
  %v134 = vunpack.c.l.b16 %v98
  %v135 = vunpack.c.l.b16 %v99
  %v136 = vunpack.c.l.b16 %v100
  %v137 = vunpack.c.l.b16 %v101
  %v138 = vunpack.c.l.b16 %v102
  %v139 = vunpack.c.l.b16 %v103
  %v140 = vunpack.c.l.b16 %v104
  %v141 = vunpack.c.l.b16 %v105
  %v142 = vunpack.c.l.b16 %v106
  %v143 = vpack.c.b16 %v128, %v127
  %v144 = vpack.c.b16 %v130, %v129
  %v145 = vpack.c.b16 %v132, %v131
  %v146 = vpack.c.b16 %v134, %v133
  %v147 = vpack.c.b16 %v136, %v135
  %v148 = vpack.c.b16 %v138, %v137
  %v149 = vpack.c.b16 %v140, %v139
  %v150 = vpack.c.b16 %v142, %v141
  %159 = vmatpush.bf16.msra.mxu0 %v150
  %160 = vmatpush.bf16.msra.mxu0 %v149
  %161 = vmatpush.bf16.msra.mxu0 %v148
  %162 = vmatpush.bf16.msra.mxu0 %v147
  %163 = vmatpush.bf16.msra.mxu0 %v146
  %164 = vmatpush.bf16.msra.mxu0 %v145
  %165 = vmatpush.bf16.msra.mxu0 %v144
  %166 = vmatpush.bf16.msra.mxu0 %v143
  %167 = vmatmul.bf16.gmra.mxu0 %v90
  %v168 = vpop.f32.mrf.mxu0
  %v169 = vadd.f32 %v109, %v168
  %v170 = vpop.f32.mrf.mxu0
  %v171 = vadd.f32 %v109, %v170
  %172 = vdwg.mxu0
  %v173 = vpack.c.bf16 %v169, %v169
  %v174 = vpack.c.bf16 %v171, %v171
  %vm175 = vcmask 519168
  %176 = vst.msk [vmem:[%s4] sm:$0xf] %vm175, %v173
  %177 = vst.msk [vmem:[%s4 + $0x4] sm:$0xf] %vm175, %v174
  // Predicated region
  $region18: #{rgcn_forward.10} parent=0 // pred_check
    _
  $region19: #{rgcn_forward.10} parent=0 // pred_check_branch
    %179 = sbr.rel (0) target = $region21
  $region20: #{rgcn_forward.10} parent=0 // pred_region
    _
  $region21: #{rgcn_forward.10} parent=0 // pred_fallthru
    _
  // Predicated region
  $region22: #{rgcn_forward.10} parent=0 // pred_check
    _
  $region23: #{rgcn_forward.10} parent=0 // pred_check_branch
    %181 = sbr.rel (0) target = $region25
  $region24: #{rgcn_forward.10} parent=0 // pred_region
    _
  $region25: #{rgcn_forward.10} parent=0 // pred_fallthru
    _

// kernel: rgcn_forward.9
$region0: #{rgcn_forward.9}
  #allocation0 [shape = 'u32[]', space=smem, size = 0x4, offset = 0x4, fixed_abs, tag = 'smem constant byte address 0x4 - core index']
  #allocation1 [shape = 'u32[72,128]{1,0:T(1,128)}', space=vmem, size = 0x9000, scoped, tag = 'internal scratch']
  #allocation2 [shape = 'f32[16,64]{1,0:T(8,128)}', space=vmem, size = 0x2000, scoped, tag = 'scratch operand']
  %s0 = inlined_call_operand.vmem [shape: bf16[80,80], index: 0, kind: input, shape index: {}]
  %s1 = inlined_call_operand.vmem [shape: bf16[80,64], index: 1, kind: input, shape index: {}]
  %s2 = inlined_call_operand.vmem [shape: f32[1,64], index: 2, kind: input, shape index: {}]
  %s3 = inlined_call_operand.vmem [shape: f32[80,64], index: 3, kind: output, shape index: {}]
  %s4 = sld [smem:[#allocation0]]
  $region53: #{rgcn_forward.9} parent=0
    _
  %s6 = ssub.s32 1, %s4
  %s7 = scalar_select 0, %s6, %s4
  loop: start=0, step=1, limit=7
  $region2: #{rgcn_forward.9} parent=0 // loop_pre_header
    _
  $region3: #{rgcn_forward.9} parent=0 // loop_header
    %s9 = sphi 0, %s13
    %p10 = scmp.ge.s32.totalorder %s9, 7
    %s16 = sphi 0, %s28
    %s17 = sphi 0, %s24
    %s18 = sphi 0, %s16
    %s19 = sphi 0, %s17
    %s20 = sphi 0, %s18
    %s21 = sphi 0, %s19
    %s33 = sphi 0, %s35
    %s36 = sphi 0, %s33
    %s37 = sphi 0, %s36
    %s53 = sphi 0, %s37
    %s57 = sphi 0, %s57
    %s59 = sphi 0, %s57
    %s60 = sphi 0, %s59
    %s74 = sphi 0, %s60
    %s78 = sphi 0, %s78
    %s80 = sphi 0, %s78
    %s81 = sphi 0, %s80
    %s95 = sphi 0, %s81
    %s101 = sphi 0, %s103
    %s104 = sphi 0, %s101
    %s105 = sphi 0, %s104
    %s121 = sphi 0, %s105
  $region4: #{rgcn_forward.9} parent=0 // loop_header_branch
    %12 = sbr.rel (%p10) target = $region8
  $region5: #{rgcn_forward.9} parent=0 // loop_body
    %s14 = ssub.s32 %s9, 1
    %s15 = ssub.s32 %s9, 2
    %s22 = sadd.s32 1, %s17
    %p23 = scmp.ge.s32.totalorder %s22, 1
    %s24 = scalar_select %p23, 0, %s22
    %s25 = sadd.s32 1, %s16
    %s26 = scalar_select %p23, %s25, %s16
    %p27 = scmp.ge.s32.totalorder %s26, 5
    %s28 = scalar_select %p27, 0, %s26
    %s29 = ssub.s32 %s16, %s28
    %s30 = ssub.s32 %s17, %s24
    %s31 = sor.u32 %s29, %s30
    %p32 = scmp.eq.s32.totalorder %s31, 0
    %s34 = sadd.s32 %s33, 1
    %s35 = scalar_select %p32, %s33, %s34
    %p38 = pneg %p32
    %p39 = scmp.eq.s32.totalorder %s9, 4
    %p40 = por %p38, %p39
    %p41 = scmp.ne.s32.totalorder %s33, %s36
    %p42 = scmp.eq.s32.totalorder %s9, 0
    %p43 = por %p41, %p42
    %p44 = scmp.ne.s32.totalorder %s33, %s36
    %p45 = scmp.eq.s32.totalorder %s14, 4
    %p46 = por %p44, %p45
    %p47 = scmp.ne.s32.totalorder %s36, %s37
    %p48 = scmp.eq.s32.totalorder %s14, 0
    %p49 = por %p47, %p48
    %p50 = scmp.ne.s32.totalorder %s36, %s37
    %p51 = scmp.eq.s32.totalorder %s15, 4
    %p52 = por %p50, %p51
    %p54 = scmp.ne.s32.totalorder %s37, %s53
    %p55 = scmp.eq.s32.totalorder %s15, 0
    %p56 = por %p54, %p55
    %s58 = sadd.s32 %s57, 1
    %p61 = scmp.eq.s32.totalorder %s9, 4
    %p62 = scmp.ne.s32.totalorder %s57, %s59
    %p63 = scmp.eq.s32.totalorder %s9, 0
    %p64 = por %p62, %p63
    %p65 = scmp.ne.s32.totalorder %s57, %s59
    %p66 = scmp.eq.s32.totalorder %s14, 4
    %p67 = por %p65, %p66
    %p68 = scmp.ne.s32.totalorder %s59, %s60
    %p69 = scmp.eq.s32.totalorder %s14, 0
    %p70 = por %p68, %p69
    %p71 = scmp.ne.s32.totalorder %s59, %s60
    %p72 = scmp.eq.s32.totalorder %s15, 4
    %p73 = por %p71, %p72
    %p75 = scmp.ne.s32.totalorder %s60, %s74
    %p76 = scmp.eq.s32.totalorder %s15, 0
    %p77 = por %p75, %p76
    %s79 = sadd.s32 %s78, 1
    %p82 = scmp.eq.s32.totalorder %s9, 4
    %p83 = scmp.ne.s32.totalorder %s78, %s80
    %p84 = scmp.eq.s32.totalorder %s9, 0
    %p85 = por %p83, %p84
    %p86 = scmp.ne.s32.totalorder %s78, %s80
    %p87 = scmp.eq.s32.totalorder %s14, 4
    %p88 = por %p86, %p87
    %p89 = scmp.ne.s32.totalorder %s80, %s81
    %p90 = scmp.eq.s32.totalorder %s14, 0
    %p91 = por %p89, %p90
    %p92 = scmp.ne.s32.totalorder %s80, %s81
    %p93 = scmp.eq.s32.totalorder %s15, 4
    %p94 = por %p92, %p93
    %p96 = scmp.ne.s32.totalorder %s81, %s95
    %p97 = scmp.eq.s32.totalorder %s15, 0
    %p98 = por %p96, %p97
    %s99 = ssub.s32 %s16, %s28
    %p100 = scmp.eq.s32.totalorder %s99, 0
    %s102 = sadd.s32 %s101, 1
    %s103 = scalar_select %p100, %s101, %s102
    %p106 = pneg %p100
    %p107 = scmp.eq.s32.totalorder %s9, 4
    %p108 = por %p106, %p107
    %p109 = scmp.ne.s32.totalorder %s101, %s104
    %p110 = scmp.eq.s32.totalorder %s9, 0
    %p111 = por %p109, %p110
    %p112 = scmp.ne.s32.totalorder %s101, %s104
    %p113 = scmp.eq.s32.totalorder %s14, 4
    %p114 = por %p112, %p113
    %p115 = scmp.ne.s32.totalorder %s104, %s105
    %p116 = scmp.eq.s32.totalorder %s14, 0
    %p117 = por %p115, %p116
    %p118 = scmp.ne.s32.totalorder %s104, %s105
    %p119 = scmp.eq.s32.totalorder %s15, 4
    %p120 = por %p118, %p119
    %p122 = scmp.ne.s32.totalorder %s105, %s121
    %p123 = scmp.eq.s32.totalorder %s15, 0
    %p124 = por %p122, %p123
    %p125 = scmp.le.s32.totalorder 1, %s9
    %p126 = scmp.lt.s32.totalorder %s9, 6
    %p127 = pnand %p125, %p126
    %p128 = pneg %p127
    // Predicated region
    $region9: #{rgcn_forward.9} parent=5 // pred_check
      _
    $region10: #{rgcn_forward.9} parent=5 // pred_check_branch
      %130 = sbr.rel (%p127) target = $region12
    $region11: #{rgcn_forward.9} parent=5 // pred_region
      %s131 = ssub.s32 %s9, 1
      // Predicated region
      $region13: #{rgcn_forward.9} parent=11 // pred_check
        %p132 = pneg %p70
      $region14: #{rgcn_forward.9} parent=11 // pred_check_branch
        %134 = sbr.rel (%p132) target = $region16
      $region15: #{rgcn_forward.9} parent=11 // pred_region
        _
      $region16: #{rgcn_forward.9} parent=11 // pred_fallthru
        _
      // Predicated region
      $region17: #{rgcn_forward.9} parent=11 // pred_check
        %p135 = pneg %p91
      $region18: #{rgcn_forward.9} parent=11 // pred_check_branch
        %137 = sbr.rel (%p135) target = $region20
      $region19: #{rgcn_forward.9} parent=11 // pred_region
        _
      $region20: #{rgcn_forward.9} parent=11 // pred_fallthru
        _
    $region12: #{rgcn_forward.9} parent=5 // pred_fallthru
      _
    %p138 = scmp.lt.s32.totalorder %s9, 5
    // Predicated region
    $region21: #{rgcn_forward.9} parent=5 // pred_check
      %p139 = pneg %p138
    $region22: #{rgcn_forward.9} parent=5 // pred_check_branch
      %141 = sbr.rel (%p139) target = $region24
    $region23: #{rgcn_forward.9} parent=5 // pred_region
      // Predicated region
      $region25: #{rgcn_forward.9} parent=23 // pred_check
        %p142 = pneg %p43
      $region26: #{rgcn_forward.9} parent=23 // pred_check_branch
        %144 = sbr.rel (%p142) target = $region28
      $region27: #{rgcn_forward.9} parent=23 // pred_region
        %s145 = smul.u32 2, %s16
        %p146 = scmp.lt.s32.totalorder %s145, 9
        %s147 = scalar_select %p146, %s145, 9
        %p148 = scmp.lt.s32.totalorder %s17, 0
        %s149 = scalar_select %p148, %s17, 0
        %s150 = sadd.s32 %s149, %s147
        %s151 = smul.addr %s150, 4
        %s152 = scalar_lea.vmem %s0, %s151
        %s153 = smul.u32 2, %s16
      $region28: #{rgcn_forward.9} parent=23 // pred_fallthru
        _
    $region24: #{rgcn_forward.9} parent=5 // pred_fallthru
      _
    %p154 = scmp.le.s32.totalorder 1, %s9
    %p155 = scmp.lt.s32.totalorder %s9, 6
    %p156 = pnand %p154, %p155
    %p157 = pneg %p156
    // Predicated region
    $region29: #{rgcn_forward.9} parent=5 // pred_check
      _
    $region30: #{rgcn_forward.9} parent=5 // pred_check_branch
      %159 = sbr.rel (%p156) target = $region32
    $region31: #{rgcn_forward.9} parent=5 // pred_region
      %s160 = ssub.s32 %s9, 1
      %s161 = smul.u32 2, %s18
      %p162 = scmp.lt.s32.totalorder %s161, 9
      %s163 = scalar_select %p162, %s161, 9
      %p164 = scmp.lt.s32.totalorder %s19, 0
      %s165 = scalar_select %p164, %s19, 0
      %s166 = sadd.s32 %s165, %s163
      %s167 = smul.addr %s166, 4
      %s168 = scalar_lea.vmem %s0, %s167
      %p169 = pneg %p49
      %p170 = pneg %p46
      %p171 = pneg %p70
      %p172 = pneg %p67
      %p173 = pneg %p91
      %p174 = pneg %p88
      %p175 = pneg %p117
      %p176 = pneg %p114
      %s177 = smul.u32 2, %s18
      %p178 = scmp.lt.s32.totalorder %s177, 9
      %s179 = scalar_select %p178, %s177, 9
      %s180 = smul.addr %s179, 8
      %s181 = scalar_lea.vmem %s3, %s180
      %s182 = smul.u32 2, %s18
      %p183 = scmp.lt.s32.totalorder %s182, 9
      %s184 = scalar_select %p183, %s182, 9
      %p185 = scmp.lt.s32.totalorder %s19, 0
      %s186 = scalar_select %p185, %s19, 0
      %s187 = sadd.s32 %s186, %s184
      %s188 = smul.addr %s187, 4
      %s189 = scalar_lea.vmem %s0, %s188
      %s190 = smul.u32 2, %s18
      %s191 = smul.u32 2, %s18
      %p192 = scmp.lt.s32.totalorder %s191, 9
      %s193 = scalar_select %p192, %s191, 9
      %s194 = smul.addr %s193, 8
      %s195 = scalar_lea.vmem %s3, %s194
      %s196 = smul.u32 2, %s18
      %p198 = scmp.eq.s32.totalorder %s19, 0
      // Predicated region
      $region33: #{rgcn_forward.9} parent=31 // pred_check
        %p199 = pneg %p198
      $region34: #{rgcn_forward.9} parent=31 // pred_check_branch
        %201 = sbr.rel (%p199) target = $region36
      $region35: #{rgcn_forward.9} parent=31 // pred_region
        %vm202 = vcmask 523264
        %203 = vst.msk [vmem:[#allocation2] sm:$0xff] %vm202, 0.0
        %204 = vst.msk [vmem:[#allocation2 + $0x8] sm:$0xff] %vm202, 0.0
      $region36: #{rgcn_forward.9} parent=31 // pred_fallthru
        _
      %v205 = vld [vmem:[%s1] sm:$0xf]
      %v206 = vld [vmem:[%s1 + $0x4] sm:$0xf]
      %v207 = vld [vmem:[%s1 + $0x8] sm:$0xf]
      %v208 = vld [vmem:[%s1 + $0xc] sm:$0xf]
      %v209 = vld [vmem:[%s1 + $0x10] sm:$0xf]
      %v210 = vld [vmem:[%s1 + $0x14] sm:$0xf]
      %v211 = vld [vmem:[%s1 + $0x18] sm:$0xf]
      %v212 = vld [vmem:[%s1 + $0x1c] sm:$0xf]
      %v213 = vld [vmem:[%s1 + $0x20] sm:$0xf]
      %v214 = vld [vmem:[%s1 + $0x24] sm:$0xf]
      %v215 = vld [vmem:[#allocation2] sm:$0xff]
      %v216 = vld [vmem:[#allocation2 + $0x8] sm:$0xff]
      %v217 = vld [vmem:[%s189] sm:$0xf]
      %v218 = vld [vmem:[%s189 + $0x4] sm:$0xf]
      %v221 = vunpack.c.l.b16 %v217
      %v222 = vunpack.c.l.b16 %v218
      %v223 = vpack.c.b16 %v222, %v221
      %v234 = vunpack.c.l.b16 %v205
      %v235 = vunpack.c.l.b16 %v206
      %v236 = vunpack.c.l.b16 %v207
      %v237 = vunpack.c.l.b16 %v208
      %v238 = vunpack.c.l.b16 %v209
      %v239 = vunpack.c.l.b16 %v210
      %v240 = vunpack.c.l.b16 %v211
      %v241 = vunpack.c.l.b16 %v212
      %v242 = vunpack.c.l.b16 %v213
      %v243 = vunpack.c.l.b16 %v214
      %v244 = vpack.c.b16 %v235, %v234
      %v245 = vpack.c.b16 %v237, %v236
      %v246 = vpack.c.b16 %v239, %v238
      %v247 = vpack.c.b16 %v241, %v240
      %v248 = vpack.c.b16 %v243, %v242
      %vm254 = vcmask 654336
      %v256 = vsel %vm254, %v223, 0
      %258 = vmatpush.bf16.msra.mxu0 0
      %259 = vmatpush.bf16.msra.mxu0 0
      %260 = vmatpush.bf16.msra.mxu0 0
      %261 = vmatpush.bf16.msra.mxu0 %v248
      %262 = vmatpush.bf16.msra.mxu0 %v247
      %263 = vmatpush.bf16.msra.mxu0 %v246
      %264 = vmatpush.bf16.msra.mxu0 %v245
      %265 = vmatpush.bf16.msra.mxu0 %v244
      %266 = vmatmul.bf16.gmra.mxu0 %v256
      %v267 = vpop.f32.mrf.mxu0
      %v268 = vadd.f32 0.0, %v267
      %v269 = vpop.f32.mrf.mxu0
      %v270 = vadd.f32 0.0, %v269
      %271 = vdwg.mxu0
      %v272 = vadd.f32 %v215, %v268
      %v273 = vadd.f32 %v216, %v270
      %vm274 = vcmask 523264
      %275 = vst.msk [vmem:[#allocation2] sm:$0xff] %vm274, %v272
      %276 = vst.msk [vmem:[#allocation2 + $0x8] sm:$0xff] %vm274, %v273
      // Predicated region
      $region37: #{rgcn_forward.9} parent=31 // pred_check
        %p277 = pneg %p198
      $region38: #{rgcn_forward.9} parent=31 // pred_check_branch
        %279 = sbr.rel (%p277) target = $region40
      $region39: #{rgcn_forward.9} parent=31 // pred_region
        %v280 = vld [vmem:[#allocation2] sm:$0xff]
        %v281 = vld [vmem:[#allocation2 + $0x8] sm:$0xff]
        %vm282 = vcmp.gt.f32.partialorder %v280, 0.0
        %vm283 = vcmp.gt.f32.partialorder %v281, 0.0
        %v284 = vld [vmem:[%s2] sm:$0x1]
        %v286 = vperm.slane %v284, 0
        %v288 = vmul.f32 %v286, %v280
        %v289 = vmul.f32 %v286, %v281
        %v290 = vsel %vm282, %v280, %v288
        %v291 = vsel %vm283, %v281, %v289
        %292 = vst.msk [vmem:[%s195] sm:$0xff] %vm274, %v290
        %293 = vst.msk [vmem:[%s195 + $0x8] sm:$0xff] %vm274, %v291
      $region40: #{rgcn_forward.9} parent=31 // pred_fallthru
        _
      %s294 = smul.u32 2, %s18
      %p295 = scmp.lt.s32.totalorder %s294, 9
      %s296 = scalar_select %p295, %s294, 9
      %s297 = smul.addr %s296, 8
      %s298 = scalar_lea.vmem %s3, %s297
      // Predicated region
      $region41: #{rgcn_forward.9} parent=31 // pred_check
        %p299 = pneg %p114
      $region42: #{rgcn_forward.9} parent=31 // pred_check_branch
        %301 = sbr.rel (%p299) target = $region44
      $region43: #{rgcn_forward.9} parent=31 // pred_region
        %s302 = smul.u32 2, %s18
      $region44: #{rgcn_forward.9} parent=31 // pred_fallthru
        _
    $region32: #{rgcn_forward.9} parent=5 // pred_fallthru
      _
    %p303 = scmp.le.s32.totalorder 2, %s9
    // Predicated region
    $region45: #{rgcn_forward.9} parent=5 // pred_check
      %p304 = pneg %p303
    $region46: #{rgcn_forward.9} parent=5 // pred_check_branch
      %306 = sbr.rel (%p304) target = $region48
    $region47: #{rgcn_forward.9} parent=5 // pred_region
      %s307 = ssub.s32 %s9, 2
      // Predicated region
      $region49: #{rgcn_forward.9} parent=47 // pred_check
        %p308 = pneg %p120
      $region50: #{rgcn_forward.9} parent=47 // pred_check_branch
        %310 = sbr.rel (%p308) target = $region52
      $region51: #{rgcn_forward.9} parent=47 // pred_region
        %s311 = smul.u32 2, %s20
        %p312 = scmp.lt.s32.totalorder %s311, 9
        %s313 = scalar_select %p312, %s311, 9
        %s314 = smul.addr %s313, 8
        %s315 = scalar_lea.vmem %s3, %s314
      $region52: #{rgcn_forward.9} parent=47 // pred_fallthru
        _
    $region48: #{rgcn_forward.9} parent=5 // pred_fallthru
      _
  $region6: #{rgcn_forward.9} parent=0 // loop_footer
    %s13 = sadd.s32 1, %s9
  $region7: #{rgcn_forward.9} parent=0 // loop_footer_branch
    %8 = sbr.rel target = $region3
  $region8: #{rgcn_forward.9} parent=0 // loop_exit
    _

// kernel: rgcn_forward.8
$region0: #{rgcn_forward.8}
  #allocation0 [shape = 'u32[]', space=smem, size = 0x4, offset = 0x4, fixed_abs, tag = 'smem constant byte address 0x4 - core index']
  #allocation1 [shape = 'u32[72,128]{1,0:T(1,128)}', space=vmem, size = 0x9000, scoped, tag = 'internal scratch']
  #allocation2 [shape = 'f32[16,64]{1,0:T(8,128)}', space=vmem, size = 0x2000, scoped, tag = 'scratch operand']
  %s0 = inlined_call_operand.vmem [shape: bf16[80,80], index: 0, kind: input, shape index: {}]
  %s1 = inlined_call_operand.vmem [shape: bf16[80,64], index: 1, kind: input, shape index: {}]
  %s2 = inlined_call_operand.vmem [shape: bf16[64,64], index: 2, kind: input, shape index: {}]
  %s3 = inlined_call_operand.vmem [shape: f32[1,64], index: 3, kind: input, shape index: {}]
  %s4 = inlined_call_operand.vmem [shape: f32[80,64], index: 4, kind: output, shape index: {0}]
  %s5 = inlined_call_operand.vmem [shape: bf16[80,64], index: 5, kind: output, shape index: {1}]
  %6 = xla_tuple %s4, %s5
  %s7 = sld [smem:[#allocation0]]
  $region65: #{rgcn_forward.8} parent=0
    _
  %s9 = ssub.s32 1, %s7
  %s10 = scalar_select 0, %s9, %s7
  loop: start=0, step=1, limit=7
  $region2: #{rgcn_forward.8} parent=0 // loop_pre_header
    _
  $region3: #{rgcn_forward.8} parent=0 // loop_header
    %s12 = sphi 0, %s16
    %p13 = scmp.ge.s32.totalorder %s12, 7
    %s19 = sphi 0, %s31
    %s20 = sphi 0, %s27
    %s21 = sphi 0, %s19
    %s22 = sphi 0, %s20
    %s23 = sphi 0, %s21
    %s24 = sphi 0, %s22
    %s36 = sphi 0, %s38
    %s39 = sphi 0, %s36
    %s40 = sphi 0, %s39
    %s56 = sphi 0, %s40
    %s60 = sphi 0, %s60
    %s62 = sphi 0, %s60
    %s63 = sphi 0, %s62
    %s77 = sphi 0, %s63
    %s81 = sphi 0, %s81
    %s83 = sphi 0, %s81
    %s84 = sphi 0, %s83
    %s98 = sphi 0, %s84
    %s102 = sphi 0, %s102
    %s104 = sphi 0, %s102
    %s105 = sphi 0, %s104
    %s119 = sphi 0, %s105
    %s125 = sphi 0, %s127
    %s128 = sphi 0, %s125
    %s129 = sphi 0, %s128
    %s145 = sphi 0, %s129
    %s151 = sphi 0, %s153
    %s154 = sphi 0, %s151
    %s155 = sphi 0, %s154
    %s171 = sphi 0, %s155
  $region4: #{rgcn_forward.8} parent=0 // loop_header_branch
    %15 = sbr.rel (%p13) target = $region8
  $region5: #{rgcn_forward.8} parent=0 // loop_body
    %s17 = ssub.s32 %s12, 1
    %s18 = ssub.s32 %s12, 2
    %s25 = sadd.s32 1, %s20
    %p26 = scmp.ge.s32.totalorder %s25, 1
    %s27 = scalar_select %p26, 0, %s25
    %s28 = sadd.s32 1, %s19
    %s29 = scalar_select %p26, %s28, %s19
    %p30 = scmp.ge.s32.totalorder %s29, 5
    %s31 = scalar_select %p30, 0, %s29
    %s32 = ssub.s32 %s19, %s31
    %s33 = ssub.s32 %s20, %s27
    %s34 = sor.u32 %s32, %s33
    %p35 = scmp.eq.s32.totalorder %s34, 0
    %s37 = sadd.s32 %s36, 1
    %s38 = scalar_select %p35, %s36, %s37
    %p41 = pneg %p35
    %p42 = scmp.eq.s32.totalorder %s12, 4
    %p43 = por %p41, %p42
    %p44 = scmp.ne.s32.totalorder %s36, %s39
    %p45 = scmp.eq.s32.totalorder %s12, 0
    %p46 = por %p44, %p45
    %p47 = scmp.ne.s32.totalorder %s36, %s39
    %p48 = scmp.eq.s32.totalorder %s17, 4
    %p49 = por %p47, %p48
    %p50 = scmp.ne.s32.totalorder %s39, %s40
    %p51 = scmp.eq.s32.totalorder %s17, 0
    %p52 = por %p50, %p51
    %p53 = scmp.ne.s32.totalorder %s39, %s40
    %p54 = scmp.eq.s32.totalorder %s18, 4
    %p55 = por %p53, %p54
    %p57 = scmp.ne.s32.totalorder %s40, %s56
    %p58 = scmp.eq.s32.totalorder %s18, 0
    %p59 = por %p57, %p58
    %s61 = sadd.s32 %s60, 1
    %p64 = scmp.eq.s32.totalorder %s12, 4
    %p65 = scmp.ne.s32.totalorder %s60, %s62
    %p66 = scmp.eq.s32.totalorder %s12, 0
    %p67 = por %p65, %p66
    %p68 = scmp.ne.s32.totalorder %s60, %s62
    %p69 = scmp.eq.s32.totalorder %s17, 4
    %p70 = por %p68, %p69
    %p71 = scmp.ne.s32.totalorder %s62, %s63
    %p72 = scmp.eq.s32.totalorder %s17, 0
    %p73 = por %p71, %p72
    %p74 = scmp.ne.s32.totalorder %s62, %s63
    %p75 = scmp.eq.s32.totalorder %s18, 4
    %p76 = por %p74, %p75
    %p78 = scmp.ne.s32.totalorder %s63, %s77
    %p79 = scmp.eq.s32.totalorder %s18, 0
    %p80 = por %p78, %p79
    %s82 = sadd.s32 %s81, 1
    %p85 = scmp.eq.s32.totalorder %s12, 4
    %p86 = scmp.ne.s32.totalorder %s81, %s83
    %p87 = scmp.eq.s32.totalorder %s12, 0
    %p88 = por %p86, %p87
    %p89 = scmp.ne.s32.totalorder %s81, %s83
    %p90 = scmp.eq.s32.totalorder %s17, 4
    %p91 = por %p89, %p90
    %p92 = scmp.ne.s32.totalorder %s83, %s84
    %p93 = scmp.eq.s32.totalorder %s17, 0
    %p94 = por %p92, %p93
    %p95 = scmp.ne.s32.totalorder %s83, %s84
    %p96 = scmp.eq.s32.totalorder %s18, 4
    %p97 = por %p95, %p96
    %p99 = scmp.ne.s32.totalorder %s84, %s98
    %p100 = scmp.eq.s32.totalorder %s18, 0
    %p101 = por %p99, %p100
    %s103 = sadd.s32 %s102, 1
    %p106 = scmp.eq.s32.totalorder %s12, 4
    %p107 = scmp.ne.s32.totalorder %s102, %s104
    %p108 = scmp.eq.s32.totalorder %s12, 0
    %p109 = por %p107, %p108
    %p110 = scmp.ne.s32.totalorder %s102, %s104
    %p111 = scmp.eq.s32.totalorder %s17, 4
    %p112 = por %p110, %p111
    %p113 = scmp.ne.s32.totalorder %s104, %s105
    %p114 = scmp.eq.s32.totalorder %s17, 0
    %p115 = por %p113, %p114
    %p116 = scmp.ne.s32.totalorder %s104, %s105
    %p117 = scmp.eq.s32.totalorder %s18, 4
    %p118 = por %p116, %p117
    %p120 = scmp.ne.s32.totalorder %s105, %s119
    %p121 = scmp.eq.s32.totalorder %s18, 0
    %p122 = por %p120, %p121
    %s123 = ssub.s32 %s19, %s31
    %p124 = scmp.eq.s32.totalorder %s123, 0
    %s126 = sadd.s32 %s125, 1
    %s127 = scalar_select %p124, %s125, %s126
    %p130 = pneg %p124
    %p131 = scmp.eq.s32.totalorder %s12, 4
    %p132 = por %p130, %p131
    %p133 = scmp.ne.s32.totalorder %s125, %s128
    %p134 = scmp.eq.s32.totalorder %s12, 0
    %p135 = por %p133, %p134
    %p136 = scmp.ne.s32.totalorder %s125, %s128
    %p137 = scmp.eq.s32.totalorder %s17, 4
    %p138 = por %p136, %p137
    %p139 = scmp.ne.s32.totalorder %s128, %s129
    %p140 = scmp.eq.s32.totalorder %s17, 0
    %p141 = por %p139, %p140
    %p142 = scmp.ne.s32.totalorder %s128, %s129
    %p143 = scmp.eq.s32.totalorder %s18, 4
    %p144 = por %p142, %p143
    %p146 = scmp.ne.s32.totalorder %s129, %s145
    %p147 = scmp.eq.s32.totalorder %s18, 0
    %p148 = por %p146, %p147
    %s149 = ssub.s32 %s19, %s31
    %p150 = scmp.eq.s32.totalorder %s149, 0
    %s152 = sadd.s32 %s151, 1
    %s153 = scalar_select %p150, %s151, %s152
    %p156 = pneg %p150
    %p157 = scmp.eq.s32.totalorder %s12, 4
    %p158 = por %p156, %p157
    %p159 = scmp.ne.s32.totalorder %s151, %s154
    %p160 = scmp.eq.s32.totalorder %s12, 0
    %p161 = por %p159, %p160
    %p162 = scmp.ne.s32.totalorder %s151, %s154
    %p163 = scmp.eq.s32.totalorder %s17, 4
    %p164 = por %p162, %p163
    %p165 = scmp.ne.s32.totalorder %s154, %s155
    %p166 = scmp.eq.s32.totalorder %s17, 0
    %p167 = por %p165, %p166
    %p168 = scmp.ne.s32.totalorder %s154, %s155
    %p169 = scmp.eq.s32.totalorder %s18, 4
    %p170 = por %p168, %p169
    %p172 = scmp.ne.s32.totalorder %s155, %s171
    %p173 = scmp.eq.s32.totalorder %s18, 0
    %p174 = por %p172, %p173
    %p175 = scmp.le.s32.totalorder 1, %s12
    %p176 = scmp.lt.s32.totalorder %s12, 6
    %p177 = pnand %p175, %p176
    %p178 = pneg %p177
    // Predicated region
    $region9: #{rgcn_forward.8} parent=5 // pred_check
      _
    $region10: #{rgcn_forward.8} parent=5 // pred_check_branch
      %180 = sbr.rel (%p177) target = $region12
    $region11: #{rgcn_forward.8} parent=5 // pred_region
      %s181 = ssub.s32 %s12, 1
      // Predicated region
      $region13: #{rgcn_forward.8} parent=11 // pred_check
        %p182 = pneg %p73
      $region14: #{rgcn_forward.8} parent=11 // pred_check_branch
        %184 = sbr.rel (%p182) target = $region16
      $region15: #{rgcn_forward.8} parent=11 // pred_region
        _
      $region16: #{rgcn_forward.8} parent=11 // pred_fallthru
        _
      // Predicated region
      $region17: #{rgcn_forward.8} parent=11 // pred_check
        %p185 = pneg %p94
      $region18: #{rgcn_forward.8} parent=11 // pred_check_branch
        %187 = sbr.rel (%p185) target = $region20
      $region19: #{rgcn_forward.8} parent=11 // pred_region
        _
      $region20: #{rgcn_forward.8} parent=11 // pred_fallthru
        _
      // Predicated region
      $region21: #{rgcn_forward.8} parent=11 // pred_check
        %p188 = pneg %p115
      $region22: #{rgcn_forward.8} parent=11 // pred_check_branch
        %190 = sbr.rel (%p188) target = $region24
      $region23: #{rgcn_forward.8} parent=11 // pred_region
        _
      $region24: #{rgcn_forward.8} parent=11 // pred_fallthru
        _
    $region12: #{rgcn_forward.8} parent=5 // pred_fallthru
      _
    %p191 = scmp.lt.s32.totalorder %s12, 5
    // Predicated region
    $region25: #{rgcn_forward.8} parent=5 // pred_check
      %p192 = pneg %p191
    $region26: #{rgcn_forward.8} parent=5 // pred_check_branch
      %194 = sbr.rel (%p192) target = $region28
    $region27: #{rgcn_forward.8} parent=5 // pred_region
      // Predicated region
      $region29: #{rgcn_forward.8} parent=27 // pred_check
        %p195 = pneg %p46
      $region30: #{rgcn_forward.8} parent=27 // pred_check_branch
        %197 = sbr.rel (%p195) target = $region32
      $region31: #{rgcn_forward.8} parent=27 // pred_region
        %s198 = smul.u32 2, %s19
        %p199 = scmp.lt.s32.totalorder %s198, 9
        %s200 = scalar_select %p199, %s198, 9
        %p201 = scmp.lt.s32.totalorder %s20, 0
        %s202 = scalar_select %p201, %s20, 0
        %s203 = sadd.s32 %s202, %s200
        %s204 = smul.addr %s203, 4
        %s205 = scalar_lea.vmem %s0, %s204
        %s206 = smul.u32 2, %s19
      $region32: #{rgcn_forward.8} parent=27 // pred_fallthru
        _
    $region28: #{rgcn_forward.8} parent=5 // pred_fallthru
      _
    %p207 = scmp.le.s32.totalorder 1, %s12
    %p208 = scmp.lt.s32.totalorder %s12, 6
    %p209 = pnand %p207, %p208
    %p210 = pneg %p209
    // Predicated region
    $region33: #{rgcn_forward.8} parent=5 // pred_check
      _
    $region34: #{rgcn_forward.8} parent=5 // pred_check_branch
      %212 = sbr.rel (%p209) target = $region36
    $region35: #{rgcn_forward.8} parent=5 // pred_region
      %s213 = ssub.s32 %s12, 1
      %s214 = smul.u32 2, %s21
      %p215 = scmp.lt.s32.totalorder %s214, 9
      %s216 = scalar_select %p215, %s214, 9
      %p217 = scmp.lt.s32.totalorder %s22, 0
      %s218 = scalar_select %p217, %s22, 0
      %s219 = sadd.s32 %s218, %s216
      %s220 = smul.addr %s219, 4
      %s221 = scalar_lea.vmem %s0, %s220
      %p222 = pneg %p52
      %p223 = pneg %p49
      %p224 = pneg %p73
      %p225 = pneg %p70
      %p226 = pneg %p94
      %p227 = pneg %p91
      %p228 = pneg %p115
      %p229 = pneg %p112
      %p230 = pneg %p141
      %p231 = pneg %p138
      %s232 = smul.u32 2, %s21
      %p233 = scmp.lt.s32.totalorder %s232, 9
      %s234 = scalar_select %p233, %s232, 9
      %s235 = smul.addr %s234, 8
      %s236 = scalar_lea.vmem %s4, %s235
      %p237 = pneg %p167
      %p238 = pneg %p164
      %s239 = smul.u32 2, %s21
      %p240 = scmp.lt.s32.totalorder %s239, 9
      %s241 = scalar_select %p240, %s239, 9
      %s242 = smul.addr %s241, 4
      %s243 = scalar_lea.vmem %s5, %s242
      %s244 = smul.u32 2, %s21
      %p245 = scmp.lt.s32.totalorder %s244, 9
      %s246 = scalar_select %p245, %s244, 9
      %p247 = scmp.lt.s32.totalorder %s22, 0
      %s248 = scalar_select %p247, %s22, 0
      %s249 = sadd.s32 %s248, %s246
      %s250 = smul.addr %s249, 4
      %s251 = scalar_lea.vmem %s0, %s250
      %s252 = smul.u32 2, %s21
      %s253 = smul.u32 2, %s21
      %p254 = scmp.lt.s32.totalorder %s253, 9
      %s255 = scalar_select %p254, %s253, 9
      %s256 = smul.addr %s255, 8
      %s257 = scalar_lea.vmem %s4, %s256
      %s258 = smul.u32 2, %s21
      %s259 = smul.u32 2, %s21
      %p260 = scmp.lt.s32.totalorder %s259, 9
      %s261 = scalar_select %p260, %s259, 9
      %s262 = smul.addr %s261, 4
      %s263 = scalar_lea.vmem %s5, %s262
      %s264 = smul.u32 2, %s21
      %p266 = scmp.eq.s32.totalorder %s22, 0
      // Predicated region
      $region37: #{rgcn_forward.8} parent=35 // pred_check
        %p267 = pneg %p266
      $region38: #{rgcn_forward.8} parent=35 // pred_check_branch
        %269 = sbr.rel (%p267) target = $region40
      $region39: #{rgcn_forward.8} parent=35 // pred_region
        %vm270 = vcmask 523264
        %271 = vst.msk [vmem:[#allocation2] sm:$0xff] %vm270, 0.0
        %272 = vst.msk [vmem:[#allocation2 + $0x8] sm:$0xff] %vm270, 0.0
      $region40: #{rgcn_forward.8} parent=35 // pred_fallthru
        _
      %v273 = vld [vmem:[%s1] sm:$0xf]
      %v274 = vld [vmem:[%s1 + $0x4] sm:$0xf]
      %v275 = vld [vmem:[%s1 + $0x8] sm:$0xf]
      %v276 = vld [vmem:[%s1 + $0xc] sm:$0xf]
      %v277 = vld [vmem:[%s1 + $0x10] sm:$0xf]
      %v278 = vld [vmem:[%s1 + $0x14] sm:$0xf]
      %v279 = vld [vmem:[%s1 + $0x18] sm:$0xf]
      %v280 = vld [vmem:[%s1 + $0x1c] sm:$0xf]
      %v281 = vld [vmem:[%s1 + $0x20] sm:$0xf]
      %v282 = vld [vmem:[%s1 + $0x24] sm:$0xf]
      %v283 = vld [vmem:[#allocation2] sm:$0xff]
      %v284 = vld [vmem:[#allocation2 + $0x8] sm:$0xff]
      %v285 = vld [vmem:[%s251] sm:$0xf]
      %v286 = vld [vmem:[%s251 + $0x4] sm:$0xf]
      %v289 = vunpack.c.l.b16 %v285
      %v290 = vunpack.c.l.b16 %v286
      %v291 = vpack.c.b16 %v290, %v289
      %v302 = vunpack.c.l.b16 %v273
      %v303 = vunpack.c.l.b16 %v274
      %v304 = vunpack.c.l.b16 %v275
      %v305 = vunpack.c.l.b16 %v276
      %v306 = vunpack.c.l.b16 %v277
      %v307 = vunpack.c.l.b16 %v278
      %v308 = vunpack.c.l.b16 %v279
      %v309 = vunpack.c.l.b16 %v280
      %v310 = vunpack.c.l.b16 %v281
      %v311 = vunpack.c.l.b16 %v282
      %v312 = vpack.c.b16 %v303, %v302
      %v313 = vpack.c.b16 %v305, %v304
      %v314 = vpack.c.b16 %v307, %v306
      %v315 = vpack.c.b16 %v309, %v308
      %v316 = vpack.c.b16 %v311, %v310
      %vm322 = vcmask 654336
      %v324 = vsel %vm322, %v291, 0
      %326 = vmatpush.bf16.msra.mxu0 0
      %327 = vmatpush.bf16.msra.mxu0 0
      %328 = vmatpush.bf16.msra.mxu0 0
      %329 = vmatpush.bf16.msra.mxu0 %v316
      %330 = vmatpush.bf16.msra.mxu0 %v315
      %331 = vmatpush.bf16.msra.mxu0 %v314
      %332 = vmatpush.bf16.msra.mxu0 %v313
      %333 = vmatpush.bf16.msra.mxu0 %v312
      %334 = vmatmul.bf16.gmra.mxu0 %v324
      %v335 = vpop.f32.mrf.mxu0
      %v336 = vadd.f32 0.0, %v335
      %v337 = vpop.f32.mrf.mxu0
      %v338 = vadd.f32 0.0, %v337
      %339 = vdwg.mxu0
      %v340 = vadd.f32 %v283, %v336
      %v341 = vadd.f32 %v284, %v338
      %vm342 = vcmask 523264
      %343 = vst.msk [vmem:[#allocation2] sm:$0xff] %vm342, %v340
      %344 = vst.msk [vmem:[#allocation2 + $0x8] sm:$0xff] %vm342, %v341
      // Predicated region
      $region41: #{rgcn_forward.8} parent=35 // pred_check
        %p345 = pneg %p266
      $region42: #{rgcn_forward.8} parent=35 // pred_check_branch
        %347 = sbr.rel (%p345) target = $region44
      $region43: #{rgcn_forward.8} parent=35 // pred_region
        %v348 = vld [vmem:[#allocation2] sm:$0xff]
        %v349 = vld [vmem:[#allocation2 + $0x8] sm:$0xff]
        %vm350 = vcmp.gt.f32.partialorder %v348, 0.0
        %vm351 = vcmp.gt.f32.partialorder %v349, 0.0
        %v352 = vld [vmem:[%s3] sm:$0x1]
        %v354 = vperm.slane %v352, 0
        %v356 = vmul.f32 %v354, %v348
        %v357 = vmul.f32 %v354, %v349
        %v358 = vsel %vm350, %v348, %v356
        %v359 = vsel %vm351, %v349, %v357
        %360 = vst.msk [vmem:[%s257] sm:$0xff] %vm342, %v358
        %361 = vst.msk [vmem:[%s257 + $0x8] sm:$0xff] %vm342, %v359
        %v362 = vpack.c.bf16 %v359, %v358
        %v363 = vld [vmem:[%s2] sm:$0xf]
        %v364 = vld [vmem:[%s2 + $0x4] sm:$0xf]
        %v365 = vld [vmem:[%s2 + $0x8] sm:$0xf]
        %v366 = vld [vmem:[%s2 + $0xc] sm:$0xf]
        %v367 = vld [vmem:[%s2 + $0x10] sm:$0xf]
        %v368 = vld [vmem:[%s2 + $0x14] sm:$0xf]
        %v369 = vld [vmem:[%s2 + $0x18] sm:$0xf]
        %v370 = vld [vmem:[%s2 + $0x1c] sm:$0xf]
        %v379 = vunpack.c.l.b16 %v363
        %v380 = vunpack.c.l.b16 %v364
        %v381 = vunpack.c.l.b16 %v365
        %v382 = vunpack.c.l.b16 %v366
        %v383 = vunpack.c.l.b16 %v367
        %v384 = vunpack.c.l.b16 %v368
        %v385 = vunpack.c.l.b16 %v369
        %v386 = vunpack.c.l.b16 %v370
        %v387 = vpack.c.b16 %v380, %v379
        %v388 = vpack.c.b16 %v382, %v381
        %v389 = vpack.c.b16 %v384, %v383
        %v390 = vpack.c.b16 %v386, %v385
        %v396 = vsel %vm342, %v362, 0
        %398 = vmatpush.bf16.msra.mxu0 0
        %399 = vmatpush.bf16.msra.mxu0 0
        %400 = vmatpush.bf16.msra.mxu0 0
        %401 = vmatpush.bf16.msra.mxu0 0
        %402 = vmatpush.bf16.msra.mxu0 %v390
        %403 = vmatpush.bf16.msra.mxu0 %v389
        %404 = vmatpush.bf16.msra.mxu0 %v388
        %405 = vmatpush.bf16.msra.mxu0 %v387
        %406 = vmatmul.bf16.gmra.mxu0 %v396
        %v407 = vpop.f32.mrf.mxu0
        %v408 = vadd.f32 0.0, %v407
        %v409 = vpop.f32.mrf.mxu0
        %v410 = vadd.f32 0.0, %v409
        %411 = vdwg.mxu0
        %v412 = vpack.c.bf16 %v408, %v408
        %v413 = vpack.c.bf16 %v410, %v410
        %vm414 = vcmask 519168
        %415 = vst.msk [vmem:[%s263] sm:$0xf] %vm414, %v412
        %416 = vst.msk [vmem:[%s263 + $0x4] sm:$0xf] %vm414, %v413
      $region44: #{rgcn_forward.8} parent=35 // pred_fallthru
        _
      %s417 = smul.u32 2, %s21
      %p418 = scmp.lt.s32.totalorder %s417, 9
      %s419 = scalar_select %p418, %s417, 9
      %s420 = smul.addr %s419, 8
      %s421 = scalar_lea.vmem %s4, %s420
      %s422 = smul.u32 2, %s21
      %p423 = scmp.lt.s32.totalorder %s422, 9
      %s424 = scalar_select %p423, %s422, 9
      %s425 = smul.addr %s424, 4
      %s426 = scalar_lea.vmem %s5, %s425
      // Predicated region
      $region45: #{rgcn_forward.8} parent=35 // pred_check
        %p427 = pneg %p138
      $region46: #{rgcn_forward.8} parent=35 // pred_check_branch
        %429 = sbr.rel (%p427) target = $region48
      $region47: #{rgcn_forward.8} parent=35 // pred_region
        %s430 = smul.u32 2, %s21
      $region48: #{rgcn_forward.8} parent=35 // pred_fallthru
        _
      // Predicated region
      $region49: #{rgcn_forward.8} parent=35 // pred_check
        %p431 = pneg %p164
      $region50: #{rgcn_forward.8} parent=35 // pred_check_branch
        %433 = sbr.rel (%p431) target = $region52
      $region51: #{rgcn_forward.8} parent=35 // pred_region
        %s434 = smul.u32 2, %s21
      $region52: #{rgcn_forward.8} parent=35 // pred_fallthru
        _
    $region36: #{rgcn_forward.8} parent=5 // pred_fallthru
      _
    %p435 = scmp.le.s32.totalorder 2, %s12
    // Predicated region
    $region53: #{rgcn_forward.8} parent=5 // pred_check
      %p436 = pneg %p435
    $region54: #{rgcn_forward.8} parent=5 // pred_check_branch
      %438 = sbr.rel (%p436) target = $region56
    $region55: #{rgcn_forward.8} parent=5 // pred_region
      %s439 = ssub.s32 %s12, 2
      // Predicated region
      $region57: #{rgcn_forward.8} parent=55 // pred_check
        %p440 = pneg %p144
      $region58: #{rgcn_forward.8} parent=55 // pred_check_branch
        %442 = sbr.rel (%p440) target = $region60
      $region59: #{rgcn_forward.8} parent=55 // pred_region
        %s443 = smul.u32 2, %s23
        %p444 = scmp.lt.s32.totalorder %s443, 9
        %s445 = scalar_select %p444, %s443, 9
        %s446 = smul.addr %s445, 8
        %s447 = scalar_lea.vmem %s4, %s446
      $region60: #{rgcn_forward.8} parent=55 // pred_fallthru
        _
      // Predicated region
      $region61: #{rgcn_forward.8} parent=55 // pred_check
        %p448 = pneg %p170
      $region62: #{rgcn_forward.8} parent=55 // pred_check_branch
        %450 = sbr.rel (%p448) target = $region64
      $region63: #{rgcn_forward.8} parent=55 // pred_region
        %s451 = smul.u32 2, %s23
        %p452 = scmp.lt.s32.totalorder %s451, 9
        %s453 = scalar_select %p452, %s451, 9
        %s454 = smul.addr %s453, 4
        %s455 = scalar_lea.vmem %s5, %s454
      $region64: #{rgcn_forward.8} parent=55 // pred_fallthru
        _
    $region56: #{rgcn_forward.8} parent=5 // pred_fallthru
      _
  $region6: #{rgcn_forward.8} parent=0 // loop_footer
    %s16 = sadd.s32 1, %s12
  $region7: #{rgcn_forward.8} parent=0 // loop_footer_branch
    %11 = sbr.rel target = $region3
  $region8: #{rgcn_forward.8} parent=0 // loop_exit
    _

// kernel: rgcn_forward.11
$region0: #{rgcn_forward.11}
  #allocation0 [shape = 'u32[]', space=smem, size = 0x4, offset = 0x4, fixed_abs, tag = 'smem constant byte address 0x4 - core index']
  #allocation1 [shape = 'u32[72,128]{1,0:T(1,128)}', space=vmem, size = 0x9000, scoped, tag = 'internal scratch']
  #allocation2 [shape = 'f32[16,64]{1,0:T(8,128)}', space=vmem, size = 0x2000, scoped, tag = 'scratch operand']
  %s0 = inlined_call_operand.vmem [shape: bf16[16,96], index: 0, kind: input, shape index: {}]
  %s1 = inlined_call_operand.vmem [shape: bf16[96,64], index: 1, kind: input, shape index: {}]
  %s2 = inlined_call_operand.vmem [shape: bf16[64,64], index: 2, kind: input, shape index: {}]
  %s3 = inlined_call_operand.vmem [shape: f32[1,64], index: 3, kind: input, shape index: {}]
  %s4 = inlined_call_operand.vmem [shape: f32[16,64], index: 4, kind: output, shape index: {0}]
  %s5 = inlined_call_operand.vmem [shape: bf16[16,64], index: 5, kind: output, shape index: {1}]
  %6 = xla_tuple %s4, %s5
  %s7 = sld [smem:[#allocation0]]
  $region42: #{rgcn_forward.11} parent=0
    _
  %s9 = ssub.s32 1, %s7
  %s10 = scalar_select 0, %s9, %s7
  // Predicated region
  $region2: #{rgcn_forward.11} parent=0 // pred_check
    _
  $region3: #{rgcn_forward.11} parent=0 // pred_check_branch
    %12 = sbr.rel (0) target = $region5
  $region4: #{rgcn_forward.11} parent=0 // pred_region
    _
  $region5: #{rgcn_forward.11} parent=0 // pred_fallthru
    _
  // Predicated region
  $region6: #{rgcn_forward.11} parent=0 // pred_check
    _
  $region7: #{rgcn_forward.11} parent=0 // pred_check_branch
    %14 = sbr.rel (0) target = $region9
  $region8: #{rgcn_forward.11} parent=0 // pred_region
    _
  $region9: #{rgcn_forward.11} parent=0 // pred_fallthru
    _
  // Predicated region
  $region10: #{rgcn_forward.11} parent=0 // pred_check
    _
  $region11: #{rgcn_forward.11} parent=0 // pred_check_branch
    %16 = sbr.rel (0) target = $region13
  $region12: #{rgcn_forward.11} parent=0 // pred_region
    _
  $region13: #{rgcn_forward.11} parent=0 // pred_fallthru
    _
  // Predicated region
  $region14: #{rgcn_forward.11} parent=0 // pred_check
    _
  $region15: #{rgcn_forward.11} parent=0 // pred_check_branch
    %18 = sbr.rel (0) target = $region17
  $region16: #{rgcn_forward.11} parent=0 // pred_region
    _
  $region17: #{rgcn_forward.11} parent=0 // pred_fallthru
    _
  %p20 = scmp.eq.s32.totalorder 0, 0
  // Predicated region
  $region18: #{rgcn_forward.11} parent=0 // pred_check
    %p21 = pneg %p20
  $region19: #{rgcn_forward.11} parent=0 // pred_check_branch
    %23 = sbr.rel (%p21) target = $region21
  $region20: #{rgcn_forward.11} parent=0 // pred_region
    %vm24 = vcmask 523264
    %25 = vst.msk [vmem:[#allocation2] sm:$0xff] %vm24, 0.0
    %26 = vst.msk [vmem:[#allocation2 + $0x8] sm:$0xff] %vm24, 0.0
  $region21: #{rgcn_forward.11} parent=0 // pred_fallthru
    _
  %v27 = vld [vmem:[%s1] sm:$0xf]
  %v28 = vld [vmem:[%s1 + $0x4] sm:$0xf]
  %v29 = vld [vmem:[%s1 + $0x8] sm:$0xf]
  %v30 = vld [vmem:[%s1 + $0xc] sm:$0xf]
  %v31 = vld [vmem:[%s1 + $0x10] sm:$0xf]
  %v32 = vld [vmem:[%s1 + $0x14] sm:$0xf]
  %v33 = vld [vmem:[%s1 + $0x18] sm:$0xf]
  %v34 = vld [vmem:[%s1 + $0x1c] sm:$0xf]
  %v35 = vld [vmem:[%s1 + $0x20] sm:$0xf]
  %v36 = vld [vmem:[%s1 + $0x24] sm:$0xf]
  %v37 = vld [vmem:[%s1 + $0x28] sm:$0xf]
  %v38 = vld [vmem:[%s1 + $0x2c] sm:$0xf]
  %v39 = vld [vmem:[#allocation2] sm:$0xff]
  %v40 = vld [vmem:[#allocation2 + $0x8] sm:$0xff]
  %v41 = vld [vmem:[%s0] sm:$0xf]
  %v42 = vld [vmem:[%s0 + $0x4] sm:$0xf]
  %v45 = vunpack.c.l.b16 %v41
  %v46 = vunpack.c.l.b16 %v42
  %v47 = vpack.c.b16 %v46, %v45
  %v60 = vunpack.c.l.b16 %v27
  %v61 = vunpack.c.l.b16 %v28
  %v62 = vunpack.c.l.b16 %v29
  %v63 = vunpack.c.l.b16 %v30
  %v64 = vunpack.c.l.b16 %v31
  %v65 = vunpack.c.l.b16 %v32
  %v66 = vunpack.c.l.b16 %v33
  %v67 = vunpack.c.l.b16 %v34
  %v68 = vunpack.c.l.b16 %v35
  %v69 = vunpack.c.l.b16 %v36
  %v70 = vunpack.c.l.b16 %v37
  %v71 = vunpack.c.l.b16 %v38
  %v72 = vpack.c.b16 %v61, %v60
  %v73 = vpack.c.b16 %v63, %v62
  %v74 = vpack.c.b16 %v65, %v64
  %v75 = vpack.c.b16 %v67, %v66
  %v76 = vpack.c.b16 %v69, %v68
  %v77 = vpack.c.b16 %v71, %v70
  %vm84 = vcmask 785408
  %v86 = vsel %vm84, %v47, 0
  %88 = vmatpush.bf16.msra.mxu0 0
  %89 = vmatpush.bf16.msra.mxu0 0
  %90 = vmatpush.bf16.msra.mxu0 %v77
  %91 = vmatpush.bf16.msra.mxu0 %v76
  %92 = vmatpush.bf16.msra.mxu0 %v75
  %93 = vmatpush.bf16.msra.mxu0 %v74
  %94 = vmatpush.bf16.msra.mxu0 %v73
  %95 = vmatpush.bf16.msra.mxu0 %v72
  %96 = vmatmul.bf16.gmra.mxu0 %v86
  %v97 = vpop.f32.mrf.mxu0
  %v98 = vadd.f32 0.0, %v97
  %v99 = vpop.f32.mrf.mxu0
  %v100 = vadd.f32 0.0, %v99
  %101 = vdwg.mxu0
  %v102 = vadd.f32 %v39, %v98
  %v103 = vadd.f32 %v40, %v100
  %vm104 = vcmask 523264
  %105 = vst.msk [vmem:[#allocation2] sm:$0xff] %vm104, %v102
  %106 = vst.msk [vmem:[#allocation2 + $0x8] sm:$0xff] %vm104, %v103
  // Predicated region
  $region22: #{rgcn_forward.11} parent=0 // pred_check
    %p107 = pneg %p20
  $region23: #{rgcn_forward.11} parent=0 // pred_check_branch
    %109 = sbr.rel (%p107) target = $region25
  $region24: #{rgcn_forward.11} parent=0 // pred_region
    %v110 = vld [vmem:[#allocation2] sm:$0xff]
    %v111 = vld [vmem:[#allocation2 + $0x8] sm:$0xff]
    %vm112 = vcmp.gt.f32.partialorder %v110, 0.0
    %vm113 = vcmp.gt.f32.partialorder %v111, 0.0
    %v114 = vld [vmem:[%s3] sm:$0x1]
    %v116 = vperm.slane %v114, 0
    %v118 = vmul.f32 %v116, %v110
    %v119 = vmul.f32 %v116, %v111
    %v120 = vsel %vm112, %v110, %v118
    %v121 = vsel %vm113, %v111, %v119
    %122 = vst.msk [vmem:[%s4] sm:$0xff] %vm104, %v120
    %123 = vst.msk [vmem:[%s4 + $0x8] sm:$0xff] %vm104, %v121
    %v124 = vpack.c.bf16 %v121, %v120
    %v125 = vld [vmem:[%s2] sm:$0xf]
    %v126 = vld [vmem:[%s2 + $0x4] sm:$0xf]
    %v127 = vld [vmem:[%s2 + $0x8] sm:$0xf]
    %v128 = vld [vmem:[%s2 + $0xc] sm:$0xf]
    %v129 = vld [vmem:[%s2 + $0x10] sm:$0xf]
    %v130 = vld [vmem:[%s2 + $0x14] sm:$0xf]
    %v131 = vld [vmem:[%s2 + $0x18] sm:$0xf]
    %v132 = vld [vmem:[%s2 + $0x1c] sm:$0xf]
    %v141 = vunpack.c.l.b16 %v125
    %v142 = vunpack.c.l.b16 %v126
    %v143 = vunpack.c.l.b16 %v127
    %v144 = vunpack.c.l.b16 %v128
    %v145 = vunpack.c.l.b16 %v129
    %v146 = vunpack.c.l.b16 %v130
    %v147 = vunpack.c.l.b16 %v131
    %v148 = vunpack.c.l.b16 %v132
    %v149 = vpack.c.b16 %v142, %v141
    %v150 = vpack.c.b16 %v144, %v143
    %v151 = vpack.c.b16 %v146, %v145
    %v152 = vpack.c.b16 %v148, %v147
    %v158 = vsel %vm104, %v124, 0
    %160 = vmatpush.bf16.msra.mxu0 0
    %161 = vmatpush.bf16.msra.mxu0 0
    %162 = vmatpush.bf16.msra.mxu0 0
    %163 = vmatpush.bf16.msra.mxu0 0
    %164 = vmatpush.bf16.msra.mxu0 %v152
    %165 = vmatpush.bf16.msra.mxu0 %v151
    %166 = vmatpush.bf16.msra.mxu0 %v150
    %167 = vmatpush.bf16.msra.mxu0 %v149
    %168 = vmatmul.bf16.gmra.mxu0 %v158
    %v169 = vpop.f32.mrf.mxu0
    %v170 = vadd.f32 0.0, %v169
    %v171 = vpop.f32.mrf.mxu0
    %v172 = vadd.f32 0.0, %v171
    %173 = vdwg.mxu0
    %v174 = vpack.c.bf16 %v170, %v170
    %v175 = vpack.c.bf16 %v172, %v172
    %vm176 = vcmask 519168
    %177 = vst.msk [vmem:[%s5] sm:$0xf] %vm176, %v174
    %178 = vst.msk [vmem:[%s5 + $0x4] sm:$0xf] %vm176, %v175
  $region25: #{rgcn_forward.11} parent=0 // pred_fallthru
    _
  // Predicated region
  $region26: #{rgcn_forward.11} parent=0 // pred_check
    _
  $region27: #{rgcn_forward.11} parent=0 // pred_check_branch
    %180 = sbr.rel (0) target = $region29
  $region28: #{rgcn_forward.11} parent=0 // pred_region
    _
  $region29: #{rgcn_forward.11} parent=0 // pred_fallthru
    _
  // Predicated region
  $region30: #{rgcn_forward.11} parent=0 // pred_check
    _
  $region31: #{rgcn_forward.11} parent=0 // pred_check_branch
    %182 = sbr.rel (0) target = $region33
  $region32: #{rgcn_forward.11} parent=0 // pred_region
    _
  $region33: #{rgcn_forward.11} parent=0 // pred_fallthru
    _
  // Predicated region
  $region34: #{rgcn_forward.11} parent=0 // pred_check
    _
  $region35: #{rgcn_forward.11} parent=0 // pred_check_branch
    %184 = sbr.rel (0) target = $region37
  $region36: #{rgcn_forward.11} parent=0 // pred_region
    _
  $region37: #{rgcn_forward.11} parent=0 // pred_fallthru
    _
  // Predicated region
  $region38: #{rgcn_forward.11} parent=0 // pred_check
    _
  $region39: #{rgcn_forward.11} parent=0 // pred_check_branch
    %186 = sbr.rel (0) target = $region41
  $region40: #{rgcn_forward.11} parent=0 // pred_region
    _
  $region41: #{rgcn_forward.11} parent=0 // pred_fallthru
    _

// kernel: rgcn_forward.12
$region0: #{rgcn_forward.12}
  #allocation0 [shape = 'u32[]', space=smem, size = 0x4, offset = 0x4, fixed_abs, tag = 'smem constant byte address 0x4 - core index']
  #allocation1 [shape = 'u32[72,128]{1,0:T(1,128)}', space=vmem, size = 0x9000, scoped, tag = 'internal scratch']
  #allocation2 [shape = 'f32[16,64]{1,0:T(8,128)}', space=vmem, size = 0x2000, scoped, tag = 'scratch operand']
  %s0 = inlined_call_operand.vmem [shape: bf16[80,96], index: 0, kind: input, shape index: {}]
  %s1 = inlined_call_operand.vmem [shape: bf16[96,64], index: 1, kind: input, shape index: {}]
  %s2 = inlined_call_operand.vmem [shape: bf16[64,64], index: 2, kind: input, shape index: {}]
  %s3 = inlined_call_operand.vmem [shape: f32[1,64], index: 3, kind: input, shape index: {}]
  %s4 = inlined_call_operand.vmem [shape: f32[80,64], index: 4, kind: output, shape index: {0}]
  %s5 = inlined_call_operand.vmem [shape: bf16[80,64], index: 5, kind: output, shape index: {1}]
  %6 = xla_tuple %s4, %s5
  %s7 = sld [smem:[#allocation0]]
  $region65: #{rgcn_forward.12} parent=0
    _
  %s9 = ssub.s32 1, %s7
  %s10 = scalar_select 0, %s9, %s7
  loop: start=0, step=1, limit=7
  $region2: #{rgcn_forward.12} parent=0 // loop_pre_header
    _
  $region3: #{rgcn_forward.12} parent=0 // loop_header
    %s12 = sphi 0, %s16
    %p13 = scmp.ge.s32.totalorder %s12, 7
    %s19 = sphi 0, %s31
    %s20 = sphi 0, %s27
    %s21 = sphi 0, %s19
    %s22 = sphi 0, %s20
    %s23 = sphi 0, %s21
    %s24 = sphi 0, %s22
    %s36 = sphi 0, %s38
    %s39 = sphi 0, %s36
    %s40 = sphi 0, %s39
    %s56 = sphi 0, %s40
    %s60 = sphi 0, %s60
    %s62 = sphi 0, %s60
    %s63 = sphi 0, %s62
    %s77 = sphi 0, %s63
    %s81 = sphi 0, %s81
    %s83 = sphi 0, %s81
    %s84 = sphi 0, %s83
    %s98 = sphi 0, %s84
    %s102 = sphi 0, %s102
    %s104 = sphi 0, %s102
    %s105 = sphi 0, %s104
    %s119 = sphi 0, %s105
    %s125 = sphi 0, %s127
    %s128 = sphi 0, %s125
    %s129 = sphi 0, %s128
    %s145 = sphi 0, %s129
    %s151 = sphi 0, %s153
    %s154 = sphi 0, %s151
    %s155 = sphi 0, %s154
    %s171 = sphi 0, %s155
  $region4: #{rgcn_forward.12} parent=0 // loop_header_branch
    %15 = sbr.rel (%p13) target = $region8
  $region5: #{rgcn_forward.12} parent=0 // loop_body
    %s17 = ssub.s32 %s12, 1
    %s18 = ssub.s32 %s12, 2
    %s25 = sadd.s32 1, %s20
    %p26 = scmp.ge.s32.totalorder %s25, 1
    %s27 = scalar_select %p26, 0, %s25
    %s28 = sadd.s32 1, %s19
    %s29 = scalar_select %p26, %s28, %s19
    %p30 = scmp.ge.s32.totalorder %s29, 5
    %s31 = scalar_select %p30, 0, %s29
    %s32 = ssub.s32 %s19, %s31
    %s33 = ssub.s32 %s20, %s27
    %s34 = sor.u32 %s32, %s33
    %p35 = scmp.eq.s32.totalorder %s34, 0
    %s37 = sadd.s32 %s36, 1
    %s38 = scalar_select %p35, %s36, %s37
    %p41 = pneg %p35
    %p42 = scmp.eq.s32.totalorder %s12, 4
    %p43 = por %p41, %p42
    %p44 = scmp.ne.s32.totalorder %s36, %s39
    %p45 = scmp.eq.s32.totalorder %s12, 0
    %p46 = por %p44, %p45
    %p47 = scmp.ne.s32.totalorder %s36, %s39
    %p48 = scmp.eq.s32.totalorder %s17, 4
    %p49 = por %p47, %p48
    %p50 = scmp.ne.s32.totalorder %s39, %s40
    %p51 = scmp.eq.s32.totalorder %s17, 0
    %p52 = por %p50, %p51
    %p53 = scmp.ne.s32.totalorder %s39, %s40
    %p54 = scmp.eq.s32.totalorder %s18, 4
    %p55 = por %p53, %p54
    %p57 = scmp.ne.s32.totalorder %s40, %s56
    %p58 = scmp.eq.s32.totalorder %s18, 0
    %p59 = por %p57, %p58
    %s61 = sadd.s32 %s60, 1
    %p64 = scmp.eq.s32.totalorder %s12, 4
    %p65 = scmp.ne.s32.totalorder %s60, %s62
    %p66 = scmp.eq.s32.totalorder %s12, 0
    %p67 = por %p65, %p66
    %p68 = scmp.ne.s32.totalorder %s60, %s62
    %p69 = scmp.eq.s32.totalorder %s17, 4
    %p70 = por %p68, %p69
    %p71 = scmp.ne.s32.totalorder %s62, %s63
    %p72 = scmp.eq.s32.totalorder %s17, 0
    %p73 = por %p71, %p72
    %p74 = scmp.ne.s32.totalorder %s62, %s63
    %p75 = scmp.eq.s32.totalorder %s18, 4
    %p76 = por %p74, %p75
    %p78 = scmp.ne.s32.totalorder %s63, %s77
    %p79 = scmp.eq.s32.totalorder %s18, 0
    %p80 = por %p78, %p79
    %s82 = sadd.s32 %s81, 1
    %p85 = scmp.eq.s32.totalorder %s12, 4
    %p86 = scmp.ne.s32.totalorder %s81, %s83
    %p87 = scmp.eq.s32.totalorder %s12, 0
    %p88 = por %p86, %p87
    %p89 = scmp.ne.s32.totalorder %s81, %s83
    %p90 = scmp.eq.s32.totalorder %s17, 4
    %p91 = por %p89, %p90
    %p92 = scmp.ne.s32.totalorder %s83, %s84
    %p93 = scmp.eq.s32.totalorder %s17, 0
    %p94 = por %p92, %p93
    %p95 = scmp.ne.s32.totalorder %s83, %s84
    %p96 = scmp.eq.s32.totalorder %s18, 4
    %p97 = por %p95, %p96
    %p99 = scmp.ne.s32.totalorder %s84, %s98
    %p100 = scmp.eq.s32.totalorder %s18, 0
    %p101 = por %p99, %p100
    %s103 = sadd.s32 %s102, 1
    %p106 = scmp.eq.s32.totalorder %s12, 4
    %p107 = scmp.ne.s32.totalorder %s102, %s104
    %p108 = scmp.eq.s32.totalorder %s12, 0
    %p109 = por %p107, %p108
    %p110 = scmp.ne.s32.totalorder %s102, %s104
    %p111 = scmp.eq.s32.totalorder %s17, 4
    %p112 = por %p110, %p111
    %p113 = scmp.ne.s32.totalorder %s104, %s105
    %p114 = scmp.eq.s32.totalorder %s17, 0
    %p115 = por %p113, %p114
    %p116 = scmp.ne.s32.totalorder %s104, %s105
    %p117 = scmp.eq.s32.totalorder %s18, 4
    %p118 = por %p116, %p117
    %p120 = scmp.ne.s32.totalorder %s105, %s119
    %p121 = scmp.eq.s32.totalorder %s18, 0
    %p122 = por %p120, %p121
    %s123 = ssub.s32 %s19, %s31
    %p124 = scmp.eq.s32.totalorder %s123, 0
    %s126 = sadd.s32 %s125, 1
    %s127 = scalar_select %p124, %s125, %s126
    %p130 = pneg %p124
    %p131 = scmp.eq.s32.totalorder %s12, 4
    %p132 = por %p130, %p131
    %p133 = scmp.ne.s32.totalorder %s125, %s128
    %p134 = scmp.eq.s32.totalorder %s12, 0
    %p135 = por %p133, %p134
    %p136 = scmp.ne.s32.totalorder %s125, %s128
    %p137 = scmp.eq.s32.totalorder %s17, 4
    %p138 = por %p136, %p137
    %p139 = scmp.ne.s32.totalorder %s128, %s129
    %p140 = scmp.eq.s32.totalorder %s17, 0
    %p141 = por %p139, %p140
    %p142 = scmp.ne.s32.totalorder %s128, %s129
    %p143 = scmp.eq.s32.totalorder %s18, 4
    %p144 = por %p142, %p143
    %p146 = scmp.ne.s32.totalorder %s129, %s145
    %p147 = scmp.eq.s32.totalorder %s18, 0
    %p148 = por %p146, %p147
    %s149 = ssub.s32 %s19, %s31
    %p150 = scmp.eq.s32.totalorder %s149, 0
    %s152 = sadd.s32 %s151, 1
    %s153 = scalar_select %p150, %s151, %s152
    %p156 = pneg %p150
    %p157 = scmp.eq.s32.totalorder %s12, 4
    %p158 = por %p156, %p157
    %p159 = scmp.ne.s32.totalorder %s151, %s154
    %p160 = scmp.eq.s32.totalorder %s12, 0
    %p161 = por %p159, %p160
    %p162 = scmp.ne.s32.totalorder %s151, %s154
    %p163 = scmp.eq.s32.totalorder %s17, 4
    %p164 = por %p162, %p163
    %p165 = scmp.ne.s32.totalorder %s154, %s155
    %p166 = scmp.eq.s32.totalorder %s17, 0
    %p167 = por %p165, %p166
    %p168 = scmp.ne.s32.totalorder %s154, %s155
    %p169 = scmp.eq.s32.totalorder %s18, 4
    %p170 = por %p168, %p169
    %p172 = scmp.ne.s32.totalorder %s155, %s171
    %p173 = scmp.eq.s32.totalorder %s18, 0
    %p174 = por %p172, %p173
    %p175 = scmp.le.s32.totalorder 1, %s12
    %p176 = scmp.lt.s32.totalorder %s12, 6
    %p177 = pnand %p175, %p176
    %p178 = pneg %p177
    // Predicated region
    $region9: #{rgcn_forward.12} parent=5 // pred_check
      _
    $region10: #{rgcn_forward.12} parent=5 // pred_check_branch
      %180 = sbr.rel (%p177) target = $region12
    $region11: #{rgcn_forward.12} parent=5 // pred_region
      %s181 = ssub.s32 %s12, 1
      // Predicated region
      $region13: #{rgcn_forward.12} parent=11 // pred_check
        %p182 = pneg %p73
      $region14: #{rgcn_forward.12} parent=11 // pred_check_branch
        %184 = sbr.rel (%p182) target = $region16
      $region15: #{rgcn_forward.12} parent=11 // pred_region
        _
      $region16: #{rgcn_forward.12} parent=11 // pred_fallthru
        _
      // Predicated region
      $region17: #{rgcn_forward.12} parent=11 // pred_check
        %p185 = pneg %p94
      $region18: #{rgcn_forward.12} parent=11 // pred_check_branch
        %187 = sbr.rel (%p185) target = $region20
      $region19: #{rgcn_forward.12} parent=11 // pred_region
        _
      $region20: #{rgcn_forward.12} parent=11 // pred_fallthru
        _
      // Predicated region
      $region21: #{rgcn_forward.12} parent=11 // pred_check
        %p188 = pneg %p115
      $region22: #{rgcn_forward.12} parent=11 // pred_check_branch
        %190 = sbr.rel (%p188) target = $region24
      $region23: #{rgcn_forward.12} parent=11 // pred_region
        _
      $region24: #{rgcn_forward.12} parent=11 // pred_fallthru
        _
    $region12: #{rgcn_forward.12} parent=5 // pred_fallthru
      _
    %p191 = scmp.lt.s32.totalorder %s12, 5
    // Predicated region
    $region25: #{rgcn_forward.12} parent=5 // pred_check
      %p192 = pneg %p191
    $region26: #{rgcn_forward.12} parent=5 // pred_check_branch
      %194 = sbr.rel (%p192) target = $region28
    $region27: #{rgcn_forward.12} parent=5 // pred_region
      // Predicated region
      $region29: #{rgcn_forward.12} parent=27 // pred_check
        %p195 = pneg %p46
      $region30: #{rgcn_forward.12} parent=27 // pred_check_branch
        %197 = sbr.rel (%p195) target = $region32
      $region31: #{rgcn_forward.12} parent=27 // pred_region
        %s198 = smul.u32 2, %s19
        %p199 = scmp.lt.s32.totalorder %s198, 9
        %s200 = scalar_select %p199, %s198, 9
        %p201 = scmp.lt.s32.totalorder %s20, 0
        %s202 = scalar_select %p201, %s20, 0
        %s203 = sadd.s32 %s202, %s200
        %s204 = smul.addr %s203, 4
        %s205 = scalar_lea.vmem %s0, %s204
        %s206 = smul.u32 2, %s19
      $region32: #{rgcn_forward.12} parent=27 // pred_fallthru
        _
    $region28: #{rgcn_forward.12} parent=5 // pred_fallthru
      _
    %p207 = scmp.le.s32.totalorder 1, %s12
    %p208 = scmp.lt.s32.totalorder %s12, 6
    %p209 = pnand %p207, %p208
    %p210 = pneg %p209
    // Predicated region
    $region33: #{rgcn_forward.12} parent=5 // pred_check
      _
    $region34: #{rgcn_forward.12} parent=5 // pred_check_branch
      %212 = sbr.rel (%p209) target = $region36
    $region35: #{rgcn_forward.12} parent=5 // pred_region
      %s213 = ssub.s32 %s12, 1
      %s214 = smul.u32 2, %s21
      %p215 = scmp.lt.s32.totalorder %s214, 9
      %s216 = scalar_select %p215, %s214, 9
      %p217 = scmp.lt.s32.totalorder %s22, 0
      %s218 = scalar_select %p217, %s22, 0
      %s219 = sadd.s32 %s218, %s216
      %s220 = smul.addr %s219, 4
      %s221 = scalar_lea.vmem %s0, %s220
      %p222 = pneg %p52
      %p223 = pneg %p49
      %p224 = pneg %p73
      %p225 = pneg %p70
      %p226 = pneg %p94
      %p227 = pneg %p91
      %p228 = pneg %p115
      %p229 = pneg %p112
      %p230 = pneg %p141
      %p231 = pneg %p138
      %s232 = smul.u32 2, %s21
      %p233 = scmp.lt.s32.totalorder %s232, 9
      %s234 = scalar_select %p233, %s232, 9
      %s235 = smul.addr %s234, 8
      %s236 = scalar_lea.vmem %s4, %s235
      %p237 = pneg %p167
      %p238 = pneg %p164
      %s239 = smul.u32 2, %s21
      %p240 = scmp.lt.s32.totalorder %s239, 9
      %s241 = scalar_select %p240, %s239, 9
      %s242 = smul.addr %s241, 4
      %s243 = scalar_lea.vmem %s5, %s242
      %s244 = smul.u32 2, %s21
      %p245 = scmp.lt.s32.totalorder %s244, 9
      %s246 = scalar_select %p245, %s244, 9
      %p247 = scmp.lt.s32.totalorder %s22, 0
      %s248 = scalar_select %p247, %s22, 0
      %s249 = sadd.s32 %s248, %s246
      %s250 = smul.addr %s249, 4
      %s251 = scalar_lea.vmem %s0, %s250
      %s252 = smul.u32 2, %s21
      %s253 = smul.u32 2, %s21
      %p254 = scmp.lt.s32.totalorder %s253, 9
      %s255 = scalar_select %p254, %s253, 9
      %s256 = smul.addr %s255, 8
      %s257 = scalar_lea.vmem %s4, %s256
      %s258 = smul.u32 2, %s21
      %s259 = smul.u32 2, %s21
      %p260 = scmp.lt.s32.totalorder %s259, 9
      %s261 = scalar_select %p260, %s259, 9
      %s262 = smul.addr %s261, 4
      %s263 = scalar_lea.vmem %s5, %s262
      %s264 = smul.u32 2, %s21
      %p266 = scmp.eq.s32.totalorder %s22, 0
      // Predicated region
      $region37: #{rgcn_forward.12} parent=35 // pred_check
        %p267 = pneg %p266
      $region38: #{rgcn_forward.12} parent=35 // pred_check_branch
        %269 = sbr.rel (%p267) target = $region40
      $region39: #{rgcn_forward.12} parent=35 // pred_region
        %vm270 = vcmask 523264
        %271 = vst.msk [vmem:[#allocation2] sm:$0xff] %vm270, 0.0
        %272 = vst.msk [vmem:[#allocation2 + $0x8] sm:$0xff] %vm270, 0.0
      $region40: #{rgcn_forward.12} parent=35 // pred_fallthru
        _
      %v273 = vld [vmem:[%s1] sm:$0xf]
      %v274 = vld [vmem:[%s1 + $0x4] sm:$0xf]
      %v275 = vld [vmem:[%s1 + $0x8] sm:$0xf]
      %v276 = vld [vmem:[%s1 + $0xc] sm:$0xf]
      %v277 = vld [vmem:[%s1 + $0x10] sm:$0xf]
      %v278 = vld [vmem:[%s1 + $0x14] sm:$0xf]
      %v279 = vld [vmem:[%s1 + $0x18] sm:$0xf]
      %v280 = vld [vmem:[%s1 + $0x1c] sm:$0xf]
      %v281 = vld [vmem:[%s1 + $0x20] sm:$0xf]
      %v282 = vld [vmem:[%s1 + $0x24] sm:$0xf]
      %v283 = vld [vmem:[%s1 + $0x28] sm:$0xf]
      %v284 = vld [vmem:[%s1 + $0x2c] sm:$0xf]
      %v285 = vld [vmem:[#allocation2] sm:$0xff]
      %v286 = vld [vmem:[#allocation2 + $0x8] sm:$0xff]
      %v287 = vld [vmem:[%s251] sm:$0xf]
      %v288 = vld [vmem:[%s251 + $0x4] sm:$0xf]
      %v291 = vunpack.c.l.b16 %v287
      %v292 = vunpack.c.l.b16 %v288
      %v293 = vpack.c.b16 %v292, %v291
      %v306 = vunpack.c.l.b16 %v273
      %v307 = vunpack.c.l.b16 %v274
      %v308 = vunpack.c.l.b16 %v275
      %v309 = vunpack.c.l.b16 %v276
      %v310 = vunpack.c.l.b16 %v277
      %v311 = vunpack.c.l.b16 %v278
      %v312 = vunpack.c.l.b16 %v279
      %v313 = vunpack.c.l.b16 %v280
      %v314 = vunpack.c.l.b16 %v281
      %v315 = vunpack.c.l.b16 %v282
      %v316 = vunpack.c.l.b16 %v283
      %v317 = vunpack.c.l.b16 %v284
      %v318 = vpack.c.b16 %v307, %v306
      %v319 = vpack.c.b16 %v309, %v308
      %v320 = vpack.c.b16 %v311, %v310
      %v321 = vpack.c.b16 %v313, %v312
      %v322 = vpack.c.b16 %v315, %v314
      %v323 = vpack.c.b16 %v317, %v316
      %vm330 = vcmask 785408
      %v332 = vsel %vm330, %v293, 0
      %334 = vmatpush.bf16.msra.mxu0 0
      %335 = vmatpush.bf16.msra.mxu0 0
      %336 = vmatpush.bf16.msra.mxu0 %v323
      %337 = vmatpush.bf16.msra.mxu0 %v322
      %338 = vmatpush.bf16.msra.mxu0 %v321
      %339 = vmatpush.bf16.msra.mxu0 %v320
      %340 = vmatpush.bf16.msra.mxu0 %v319
      %341 = vmatpush.bf16.msra.mxu0 %v318
      %342 = vmatmul.bf16.gmra.mxu0 %v332
      %v343 = vpop.f32.mrf.mxu0
      %v344 = vadd.f32 0.0, %v343
      %v345 = vpop.f32.mrf.mxu0
      %v346 = vadd.f32 0.0, %v345
      %347 = vdwg.mxu0
      %v348 = vadd.f32 %v285, %v344
      %v349 = vadd.f32 %v286, %v346
      %vm350 = vcmask 523264
      %351 = vst.msk [vmem:[#allocation2] sm:$0xff] %vm350, %v348
      %352 = vst.msk [vmem:[#allocation2 + $0x8] sm:$0xff] %vm350, %v349
      // Predicated region
      $region41: #{rgcn_forward.12} parent=35 // pred_check
        %p353 = pneg %p266
      $region42: #{rgcn_forward.12} parent=35 // pred_check_branch
        %355 = sbr.rel (%p353) target = $region44
      $region43: #{rgcn_forward.12} parent=35 // pred_region
        %v356 = vld [vmem:[#allocation2] sm:$0xff]
        %v357 = vld [vmem:[#allocation2 + $0x8] sm:$0xff]
        %vm358 = vcmp.gt.f32.partialorder %v356, 0.0
        %vm359 = vcmp.gt.f32.partialorder %v357, 0.0
        %v360 = vld [vmem:[%s3] sm:$0x1]
        %v362 = vperm.slane %v360, 0
        %v364 = vmul.f32 %v362, %v356
        %v365 = vmul.f32 %v362, %v357
        %v366 = vsel %vm358, %v356, %v364
        %v367 = vsel %vm359, %v357, %v365
        %368 = vst.msk [vmem:[%s257] sm:$0xff] %vm350, %v366
        %369 = vst.msk [vmem:[%s257 + $0x8] sm:$0xff] %vm350, %v367
        %v370 = vpack.c.bf16 %v367, %v366
        %v371 = vld [vmem:[%s2] sm:$0xf]
        %v372 = vld [vmem:[%s2 + $0x4] sm:$0xf]
        %v373 = vld [vmem:[%s2 + $0x8] sm:$0xf]
        %v374 = vld [vmem:[%s2 + $0xc] sm:$0xf]
        %v375 = vld [vmem:[%s2 + $0x10] sm:$0xf]
        %v376 = vld [vmem:[%s2 + $0x14] sm:$0xf]
        %v377 = vld [vmem:[%s2 + $0x18] sm:$0xf]
        %v378 = vld [vmem:[%s2 + $0x1c] sm:$0xf]
        %v387 = vunpack.c.l.b16 %v371
        %v388 = vunpack.c.l.b16 %v372
        %v389 = vunpack.c.l.b16 %v373
        %v390 = vunpack.c.l.b16 %v374
        %v391 = vunpack.c.l.b16 %v375
        %v392 = vunpack.c.l.b16 %v376
        %v393 = vunpack.c.l.b16 %v377
        %v394 = vunpack.c.l.b16 %v378
        %v395 = vpack.c.b16 %v388, %v387
        %v396 = vpack.c.b16 %v390, %v389
        %v397 = vpack.c.b16 %v392, %v391
        %v398 = vpack.c.b16 %v394, %v393
        %v404 = vsel %vm350, %v370, 0
        %406 = vmatpush.bf16.msra.mxu0 0
        %407 = vmatpush.bf16.msra.mxu0 0
        %408 = vmatpush.bf16.msra.mxu0 0
        %409 = vmatpush.bf16.msra.mxu0 0
        %410 = vmatpush.bf16.msra.mxu0 %v398
        %411 = vmatpush.bf16.msra.mxu0 %v397
        %412 = vmatpush.bf16.msra.mxu0 %v396
        %413 = vmatpush.bf16.msra.mxu0 %v395
        %414 = vmatmul.bf16.gmra.mxu0 %v404
        %v415 = vpop.f32.mrf.mxu0
        %v416 = vadd.f32 0.0, %v415
        %v417 = vpop.f32.mrf.mxu0
        %v418 = vadd.f32 0.0, %v417
        %419 = vdwg.mxu0
        %v420 = vpack.c.bf16 %v416, %v416
        %v421 = vpack.c.bf16 %v418, %v418
        %vm422 = vcmask 519168
        %423 = vst.msk [vmem:[%s263] sm:$0xf] %vm422, %v420
        %424 = vst.msk [vmem:[%s263 + $0x4] sm:$0xf] %vm422, %v421
      $region44: #{rgcn_forward.12} parent=35 // pred_fallthru
        _
      %s425 = smul.u32 2, %s21
      %p426 = scmp.lt.s32.totalorder %s425, 9
      %s427 = scalar_select %p426, %s425, 9
      %s428 = smul.addr %s427, 8
      %s429 = scalar_lea.vmem %s4, %s428
      %s430 = smul.u32 2, %s21
      %p431 = scmp.lt.s32.totalorder %s430, 9
      %s432 = scalar_select %p431, %s430, 9
      %s433 = smul.addr %s432, 4
      %s434 = scalar_lea.vmem %s5, %s433
      // Predicated region
      $region45: #{rgcn_forward.12} parent=35 // pred_check
        %p435 = pneg %p138
      $region46: #{rgcn_forward.12} parent=35 // pred_check_branch
        %437 = sbr.rel (%p435) target = $region48
      $region47: #{rgcn_forward.12} parent=35 // pred_region
        %s438 = smul.u32 2, %s21
      $region48: #{rgcn_forward.12} parent=35 // pred_fallthru
        _
      // Predicated region
      $region49: #{rgcn_forward.12} parent=35 // pred_check
        %p439 = pneg %p164
      $region50: #{rgcn_forward.12} parent=35 // pred_check_branch
        %441 = sbr.rel (%p439) target = $region52
      $region51: #{rgcn_forward.12} parent=35 // pred_region
        %s442 = smul.u32 2, %s21
      $region52: #{rgcn_forward.12} parent=35 // pred_fallthru
        _
    $region36: #{rgcn_forward.12} parent=5 // pred_fallthru
      _
    %p443 = scmp.le.s32.totalorder 2, %s12
    // Predicated region
    $region53: #{rgcn_forward.12} parent=5 // pred_check
      %p444 = pneg %p443
    $region54: #{rgcn_forward.12} parent=5 // pred_check_branch
      %446 = sbr.rel (%p444) target = $region56
    $region55: #{rgcn_forward.12} parent=5 // pred_region
      %s447 = ssub.s32 %s12, 2
      // Predicated region
      $region57: #{rgcn_forward.12} parent=55 // pred_check
        %p448 = pneg %p144
      $region58: #{rgcn_forward.12} parent=55 // pred_check_branch
        %450 = sbr.rel (%p448) target = $region60
      $region59: #{rgcn_forward.12} parent=55 // pred_region
        %s451 = smul.u32 2, %s23
        %p452 = scmp.lt.s32.totalorder %s451, 9
        %s453 = scalar_select %p452, %s451, 9
        %s454 = smul.addr %s453, 8
        %s455 = scalar_lea.vmem %s4, %s454
      $region60: #{rgcn_forward.12} parent=55 // pred_fallthru
        _
      // Predicated region
      $region61: #{rgcn_forward.12} parent=55 // pred_check
        %p456 = pneg %p170
      $region62: #{rgcn_forward.12} parent=55 // pred_check_branch
        %458 = sbr.rel (%p456) target = $region64
      $region63: #{rgcn_forward.12} parent=55 // pred_region
        %s459 = smul.u32 2, %s23
        %p460 = scmp.lt.s32.totalorder %s459, 9
        %s461 = scalar_select %p460, %s459, 9
        %s462 = smul.addr %s461, 4
        %s463 = scalar_lea.vmem %s5, %s462
      $region64: #{rgcn_forward.12} parent=55 // pred_fallthru
        _
    $region56: #{rgcn_forward.12} parent=5 // pred_fallthru
      _
  $region6: #{rgcn_forward.12} parent=0 // loop_footer
    %s16 = sadd.s32 1, %s12
  $region7: #{rgcn_forward.12} parent=0 // loop_footer_branch
    %11 = sbr.rel target = $region3
  $region8: #{rgcn_forward.12} parent=0 // loop_exit
    _

// kernel: rgcn_forward.14
$region0: #{rgcn_forward.14}
  #allocation0 [shape = 'u32[]', space=smem, size = 0x4, offset = 0x4, fixed_abs, tag = 'smem constant byte address 0x4 - core index']
  #allocation1 [shape = 'u32[72,128]{1,0:T(1,128)}', space=vmem, size = 0x9000, scoped, tag = 'internal scratch']
  #allocation2 [shape = 'f32[16,64]{1,0:T(8,128)}', space=vmem, size = 0x2000, scoped, tag = 'scratch operand']
  %s0 = inlined_call_operand.vmem [shape: bf16[80,96], index: 0, kind: input, shape index: {}]
  %s1 = inlined_call_operand.vmem [shape: bf16[96,64], index: 1, kind: input, shape index: {}]
  %s2 = inlined_call_operand.vmem [shape: f32[1,64], index: 2, kind: input, shape index: {}]
  %s3 = inlined_call_operand.vmem [shape: f32[80,64], index: 3, kind: output, shape index: {}]
  %s4 = sld [smem:[#allocation0]]
  $region53: #{rgcn_forward.14} parent=0
    _
  %s6 = ssub.s32 1, %s4
  %s7 = scalar_select 0, %s6, %s4
  loop: start=0, step=1, limit=7
  $region2: #{rgcn_forward.14} parent=0 // loop_pre_header
    _
  $region3: #{rgcn_forward.14} parent=0 // loop_header
    %s9 = sphi 0, %s13
    %p10 = scmp.ge.s32.totalorder %s9, 7
    %s16 = sphi 0, %s28
    %s17 = sphi 0, %s24
    %s18 = sphi 0, %s16
    %s19 = sphi 0, %s17
    %s20 = sphi 0, %s18
    %s21 = sphi 0, %s19
    %s33 = sphi 0, %s35
    %s36 = sphi 0, %s33
    %s37 = sphi 0, %s36
    %s53 = sphi 0, %s37
    %s57 = sphi 0, %s57
    %s59 = sphi 0, %s57
    %s60 = sphi 0, %s59
    %s74 = sphi 0, %s60
    %s78 = sphi 0, %s78
    %s80 = sphi 0, %s78
    %s81 = sphi 0, %s80
    %s95 = sphi 0, %s81
    %s101 = sphi 0, %s103
    %s104 = sphi 0, %s101
    %s105 = sphi 0, %s104
    %s121 = sphi 0, %s105
  $region4: #{rgcn_forward.14} parent=0 // loop_header_branch
    %12 = sbr.rel (%p10) target = $region8
  $region5: #{rgcn_forward.14} parent=0 // loop_body
    %s14 = ssub.s32 %s9, 1
    %s15 = ssub.s32 %s9, 2
    %s22 = sadd.s32 1, %s17
    %p23 = scmp.ge.s32.totalorder %s22, 1
    %s24 = scalar_select %p23, 0, %s22
    %s25 = sadd.s32 1, %s16
    %s26 = scalar_select %p23, %s25, %s16
    %p27 = scmp.ge.s32.totalorder %s26, 5
    %s28 = scalar_select %p27, 0, %s26
    %s29 = ssub.s32 %s16, %s28
    %s30 = ssub.s32 %s17, %s24
    %s31 = sor.u32 %s29, %s30
    %p32 = scmp.eq.s32.totalorder %s31, 0
    %s34 = sadd.s32 %s33, 1
    %s35 = scalar_select %p32, %s33, %s34
    %p38 = pneg %p32
    %p39 = scmp.eq.s32.totalorder %s9, 4
    %p40 = por %p38, %p39
    %p41 = scmp.ne.s32.totalorder %s33, %s36
    %p42 = scmp.eq.s32.totalorder %s9, 0
    %p43 = por %p41, %p42
    %p44 = scmp.ne.s32.totalorder %s33, %s36
    %p45 = scmp.eq.s32.totalorder %s14, 4
    %p46 = por %p44, %p45
    %p47 = scmp.ne.s32.totalorder %s36, %s37
    %p48 = scmp.eq.s32.totalorder %s14, 0
    %p49 = por %p47, %p48
    %p50 = scmp.ne.s32.totalorder %s36, %s37
    %p51 = scmp.eq.s32.totalorder %s15, 4
    %p52 = por %p50, %p51
    %p54 = scmp.ne.s32.totalorder %s37, %s53
    %p55 = scmp.eq.s32.totalorder %s15, 0
    %p56 = por %p54, %p55
    %s58 = sadd.s32 %s57, 1
    %p61 = scmp.eq.s32.totalorder %s9, 4
    %p62 = scmp.ne.s32.totalorder %s57, %s59
    %p63 = scmp.eq.s32.totalorder %s9, 0
    %p64 = por %p62, %p63
    %p65 = scmp.ne.s32.totalorder %s57, %s59
    %p66 = scmp.eq.s32.totalorder %s14, 4
    %p67 = por %p65, %p66
    %p68 = scmp.ne.s32.totalorder %s59, %s60
    %p69 = scmp.eq.s32.totalorder %s14, 0
    %p70 = por %p68, %p69
    %p71 = scmp.ne.s32.totalorder %s59, %s60
    %p72 = scmp.eq.s32.totalorder %s15, 4
    %p73 = por %p71, %p72
    %p75 = scmp.ne.s32.totalorder %s60, %s74
    %p76 = scmp.eq.s32.totalorder %s15, 0
    %p77 = por %p75, %p76
    %s79 = sadd.s32 %s78, 1
    %p82 = scmp.eq.s32.totalorder %s9, 4
    %p83 = scmp.ne.s32.totalorder %s78, %s80
    %p84 = scmp.eq.s32.totalorder %s9, 0
    %p85 = por %p83, %p84
    %p86 = scmp.ne.s32.totalorder %s78, %s80
    %p87 = scmp.eq.s32.totalorder %s14, 4
    %p88 = por %p86, %p87
    %p89 = scmp.ne.s32.totalorder %s80, %s81
    %p90 = scmp.eq.s32.totalorder %s14, 0
    %p91 = por %p89, %p90
    %p92 = scmp.ne.s32.totalorder %s80, %s81
    %p93 = scmp.eq.s32.totalorder %s15, 4
    %p94 = por %p92, %p93
    %p96 = scmp.ne.s32.totalorder %s81, %s95
    %p97 = scmp.eq.s32.totalorder %s15, 0
    %p98 = por %p96, %p97
    %s99 = ssub.s32 %s16, %s28
    %p100 = scmp.eq.s32.totalorder %s99, 0
    %s102 = sadd.s32 %s101, 1
    %s103 = scalar_select %p100, %s101, %s102
    %p106 = pneg %p100
    %p107 = scmp.eq.s32.totalorder %s9, 4
    %p108 = por %p106, %p107
    %p109 = scmp.ne.s32.totalorder %s101, %s104
    %p110 = scmp.eq.s32.totalorder %s9, 0
    %p111 = por %p109, %p110
    %p112 = scmp.ne.s32.totalorder %s101, %s104
    %p113 = scmp.eq.s32.totalorder %s14, 4
    %p114 = por %p112, %p113
    %p115 = scmp.ne.s32.totalorder %s104, %s105
    %p116 = scmp.eq.s32.totalorder %s14, 0
    %p117 = por %p115, %p116
    %p118 = scmp.ne.s32.totalorder %s104, %s105
    %p119 = scmp.eq.s32.totalorder %s15, 4
    %p120 = por %p118, %p119
    %p122 = scmp.ne.s32.totalorder %s105, %s121
    %p123 = scmp.eq.s32.totalorder %s15, 0
    %p124 = por %p122, %p123
    %p125 = scmp.le.s32.totalorder 1, %s9
    %p126 = scmp.lt.s32.totalorder %s9, 6
    %p127 = pnand %p125, %p126
    %p128 = pneg %p127
    // Predicated region
    $region9: #{rgcn_forward.14} parent=5 // pred_check
      _
    $region10: #{rgcn_forward.14} parent=5 // pred_check_branch
      %130 = sbr.rel (%p127) target = $region12
    $region11: #{rgcn_forward.14} parent=5 // pred_region
      %s131 = ssub.s32 %s9, 1
      // Predicated region
      $region13: #{rgcn_forward.14} parent=11 // pred_check
        %p132 = pneg %p70
      $region14: #{rgcn_forward.14} parent=11 // pred_check_branch
        %134 = sbr.rel (%p132) target = $region16
      $region15: #{rgcn_forward.14} parent=11 // pred_region
        _
      $region16: #{rgcn_forward.14} parent=11 // pred_fallthru
        _
      // Predicated region
      $region17: #{rgcn_forward.14} parent=11 // pred_check
        %p135 = pneg %p91
      $region18: #{rgcn_forward.14} parent=11 // pred_check_branch
        %137 = sbr.rel (%p135) target = $region20
      $region19: #{rgcn_forward.14} parent=11 // pred_region
        _
      $region20: #{rgcn_forward.14} parent=11 // pred_fallthru
        _
    $region12: #{rgcn_forward.14} parent=5 // pred_fallthru
      _
    %p138 = scmp.lt.s32.totalorder %s9, 5
    // Predicated region
    $region21: #{rgcn_forward.14} parent=5 // pred_check
      %p139 = pneg %p138
    $region22: #{rgcn_forward.14} parent=5 // pred_check_branch
      %141 = sbr.rel (%p139) target = $region24
    $region23: #{rgcn_forward.14} parent=5 // pred_region
      // Predicated region
      $region25: #{rgcn_forward.14} parent=23 // pred_check
        %p142 = pneg %p43
      $region26: #{rgcn_forward.14} parent=23 // pred_check_branch
        %144 = sbr.rel (%p142) target = $region28
      $region27: #{rgcn_forward.14} parent=23 // pred_region
        %s145 = smul.u32 2, %s16
        %p146 = scmp.lt.s32.totalorder %s145, 9
        %s147 = scalar_select %p146, %s145, 9
        %p148 = scmp.lt.s32.totalorder %s17, 0
        %s149 = scalar_select %p148, %s17, 0
        %s150 = sadd.s32 %s149, %s147
        %s151 = smul.addr %s150, 4
        %s152 = scalar_lea.vmem %s0, %s151
        %s153 = smul.u32 2, %s16
      $region28: #{rgcn_forward.14} parent=23 // pred_fallthru
        _
    $region24: #{rgcn_forward.14} parent=5 // pred_fallthru
      _
    %p154 = scmp.le.s32.totalorder 1, %s9
    %p155 = scmp.lt.s32.totalorder %s9, 6
    %p156 = pnand %p154, %p155
    %p157 = pneg %p156
    // Predicated region
    $region29: #{rgcn_forward.14} parent=5 // pred_check
      _
    $region30: #{rgcn_forward.14} parent=5 // pred_check_branch
      %159 = sbr.rel (%p156) target = $region32
    $region31: #{rgcn_forward.14} parent=5 // pred_region
      %s160 = ssub.s32 %s9, 1
      %s161 = smul.u32 2, %s18
      %p162 = scmp.lt.s32.totalorder %s161, 9
      %s163 = scalar_select %p162, %s161, 9
      %p164 = scmp.lt.s32.totalorder %s19, 0
      %s165 = scalar_select %p164, %s19, 0
      %s166 = sadd.s32 %s165, %s163
      %s167 = smul.addr %s166, 4
      %s168 = scalar_lea.vmem %s0, %s167
      %p169 = pneg %p49
      %p170 = pneg %p46
      %p171 = pneg %p70
      %p172 = pneg %p67
      %p173 = pneg %p91
      %p174 = pneg %p88
      %p175 = pneg %p117
      %p176 = pneg %p114
      %s177 = smul.u32 2, %s18
      %p178 = scmp.lt.s32.totalorder %s177, 9
      %s179 = scalar_select %p178, %s177, 9
      %s180 = smul.addr %s179, 8
      %s181 = scalar_lea.vmem %s3, %s180
      %s182 = smul.u32 2, %s18
      %p183 = scmp.lt.s32.totalorder %s182, 9
      %s184 = scalar_select %p183, %s182, 9
      %p185 = scmp.lt.s32.totalorder %s19, 0
      %s186 = scalar_select %p185, %s19, 0
      %s187 = sadd.s32 %s186, %s184
      %s188 = smul.addr %s187, 4
      %s189 = scalar_lea.vmem %s0, %s188
      %s190 = smul.u32 2, %s18
      %s191 = smul.u32 2, %s18
      %p192 = scmp.lt.s32.totalorder %s191, 9
      %s193 = scalar_select %p192, %s191, 9
      %s194 = smul.addr %s193, 8
      %s195 = scalar_lea.vmem %s3, %s194
      %s196 = smul.u32 2, %s18
      %p198 = scmp.eq.s32.totalorder %s19, 0
      // Predicated region
      $region33: #{rgcn_forward.14} parent=31 // pred_check
        %p199 = pneg %p198
      $region34: #{rgcn_forward.14} parent=31 // pred_check_branch
        %201 = sbr.rel (%p199) target = $region36
      $region35: #{rgcn_forward.14} parent=31 // pred_region
        %vm202 = vcmask 523264
        %203 = vst.msk [vmem:[#allocation2] sm:$0xff] %vm202, 0.0
        %204 = vst.msk [vmem:[#allocation2 + $0x8] sm:$0xff] %vm202, 0.0
      $region36: #{rgcn_forward.14} parent=31 // pred_fallthru
        _
      %v205 = vld [vmem:[%s1] sm:$0xf]
      %v206 = vld [vmem:[%s1 + $0x4] sm:$0xf]
      %v207 = vld [vmem:[%s1 + $0x8] sm:$0xf]
      %v208 = vld [vmem:[%s1 + $0xc] sm:$0xf]
      %v209 = vld [vmem:[%s1 + $0x10] sm:$0xf]
      %v210 = vld [vmem:[%s1 + $0x14] sm:$0xf]
      %v211 = vld [vmem:[%s1 + $0x18] sm:$0xf]
      %v212 = vld [vmem:[%s1 + $0x1c] sm:$0xf]
      %v213 = vld [vmem:[%s1 + $0x20] sm:$0xf]
      %v214 = vld [vmem:[%s1 + $0x24] sm:$0xf]
      %v215 = vld [vmem:[%s1 + $0x28] sm:$0xf]
      %v216 = vld [vmem:[%s1 + $0x2c] sm:$0xf]
      %v217 = vld [vmem:[#allocation2] sm:$0xff]
      %v218 = vld [vmem:[#allocation2 + $0x8] sm:$0xff]
      %v219 = vld [vmem:[%s189] sm:$0xf]
      %v220 = vld [vmem:[%s189 + $0x4] sm:$0xf]
      %v223 = vunpack.c.l.b16 %v219
      %v224 = vunpack.c.l.b16 %v220
      %v225 = vpack.c.b16 %v224, %v223
      %v238 = vunpack.c.l.b16 %v205
      %v239 = vunpack.c.l.b16 %v206
      %v240 = vunpack.c.l.b16 %v207
      %v241 = vunpack.c.l.b16 %v208
      %v242 = vunpack.c.l.b16 %v209
      %v243 = vunpack.c.l.b16 %v210
      %v244 = vunpack.c.l.b16 %v211
      %v245 = vunpack.c.l.b16 %v212
      %v246 = vunpack.c.l.b16 %v213
      %v247 = vunpack.c.l.b16 %v214
      %v248 = vunpack.c.l.b16 %v215
      %v249 = vunpack.c.l.b16 %v216
      %v250 = vpack.c.b16 %v239, %v238
      %v251 = vpack.c.b16 %v241, %v240
      %v252 = vpack.c.b16 %v243, %v242
      %v253 = vpack.c.b16 %v245, %v244
      %v254 = vpack.c.b16 %v247, %v246
      %v255 = vpack.c.b16 %v249, %v248
      %vm262 = vcmask 785408
      %v264 = vsel %vm262, %v225, 0
      %266 = vmatpush.bf16.msra.mxu0 0
      %267 = vmatpush.bf16.msra.mxu0 0
      %268 = vmatpush.bf16.msra.mxu0 %v255
      %269 = vmatpush.bf16.msra.mxu0 %v254
      %270 = vmatpush.bf16.msra.mxu0 %v253
      %271 = vmatpush.bf16.msra.mxu0 %v252
      %272 = vmatpush.bf16.msra.mxu0 %v251
      %273 = vmatpush.bf16.msra.mxu0 %v250
      %274 = vmatmul.bf16.gmra.mxu0 %v264
      %v275 = vpop.f32.mrf.mxu0
      %v276 = vadd.f32 0.0, %v275
      %v277 = vpop.f32.mrf.mxu0
      %v278 = vadd.f32 0.0, %v277
      %279 = vdwg.mxu0
      %v280 = vadd.f32 %v217, %v276
      %v281 = vadd.f32 %v218, %v278
      %vm282 = vcmask 523264
      %283 = vst.msk [vmem:[#allocation2] sm:$0xff] %vm282, %v280
      %284 = vst.msk [vmem:[#allocation2 + $0x8] sm:$0xff] %vm282, %v281
      // Predicated region
      $region37: #{rgcn_forward.14} parent=31 // pred_check
        %p285 = pneg %p198
      $region38: #{rgcn_forward.14} parent=31 // pred_check_branch
        %287 = sbr.rel (%p285) target = $region40
      $region39: #{rgcn_forward.14} parent=31 // pred_region
        %v288 = vld [vmem:[#allocation2] sm:$0xff]
        %v289 = vld [vmem:[#allocation2 + $0x8] sm:$0xff]
        %vm290 = vcmp.gt.f32.partialorder %v288, 0.0
        %vm291 = vcmp.gt.f32.partialorder %v289, 0.0
        %v292 = vld [vmem:[%s2] sm:$0x1]
        %v294 = vperm.slane %v292, 0
        %v296 = vmul.f32 %v294, %v288
        %v297 = vmul.f32 %v294, %v289
        %v298 = vsel %vm290, %v288, %v296
        %v299 = vsel %vm291, %v289, %v297
        %300 = vst.msk [vmem:[%s195] sm:$0xff] %vm282, %v298
        %301 = vst.msk [vmem:[%s195 + $0x8] sm:$0xff] %vm282, %v299
      $region40: #{rgcn_forward.14} parent=31 // pred_fallthru
        _
      %s302 = smul.u32 2, %s18
      %p303 = scmp.lt.s32.totalorder %s302, 9
      %s304 = scalar_select %p303, %s302, 9
      %s305 = smul.addr %s304, 8
      %s306 = scalar_lea.vmem %s3, %s305
      // Predicated region
      $region41: #{rgcn_forward.14} parent=31 // pred_check
        %p307 = pneg %p114
      $region42: #{rgcn_forward.14} parent=31 // pred_check_branch
        %309 = sbr.rel (%p307) target = $region44
      $region43: #{rgcn_forward.14} parent=31 // pred_region
        %s310 = smul.u32 2, %s18
      $region44: #{rgcn_forward.14} parent=31 // pred_fallthru
        _
    $region32: #{rgcn_forward.14} parent=5 // pred_fallthru
      _
    %p311 = scmp.le.s32.totalorder 2, %s9
    // Predicated region
    $region45: #{rgcn_forward.14} parent=5 // pred_check
      %p312 = pneg %p311
    $region46: #{rgcn_forward.14} parent=5 // pred_check_branch
      %314 = sbr.rel (%p312) target = $region48
    $region47: #{rgcn_forward.14} parent=5 // pred_region
      %s315 = ssub.s32 %s9, 2
      // Predicated region
      $region49: #{rgcn_forward.14} parent=47 // pred_check
        %p316 = pneg %p120
      $region50: #{rgcn_forward.14} parent=47 // pred_check_branch
        %318 = sbr.rel (%p316) target = $region52
      $region51: #{rgcn_forward.14} parent=47 // pred_region
        %s319 = smul.u32 2, %s20
        %p320 = scmp.lt.s32.totalorder %s319, 9
        %s321 = scalar_select %p320, %s319, 9
        %s322 = smul.addr %s321, 8
        %s323 = scalar_lea.vmem %s3, %s322
      $region52: #{rgcn_forward.14} parent=47 // pred_fallthru
        _
    $region48: #{rgcn_forward.14} parent=5 // pred_fallthru
      _
  $region6: #{rgcn_forward.14} parent=0 // loop_footer
    %s13 = sadd.s32 1, %s9
  $region7: #{rgcn_forward.14} parent=0 // loop_footer_branch
    %8 = sbr.rel target = $region3
  $region8: #{rgcn_forward.14} parent=0 // loop_exit
    _

// kernel: rgcn_forward.15
$region0: #{rgcn_forward.15}
  #allocation0 [shape = 'u32[]', space=smem, size = 0x4, offset = 0x4, fixed_abs, tag = 'smem constant byte address 0x4 - core index']
  #allocation1 [shape = 'u32[72,128]{1,0:T(1,128)}', space=vmem, size = 0x9000, scoped, tag = 'internal scratch']
  %s0 = inlined_call_operand.vmem [shape: f32[16,320], index: 0, kind: input, shape index: {}]
  %s1 = inlined_call_operand.vmem [shape: f32[16,320], index: 1, kind: input, shape index: {}]
  %s2 = inlined_call_operand.hbm [shape: f32[16,128], index: 2, kind: output, shape index: {}]
  %s3 = sld [smem:[#allocation0]]
  $region41: #{rgcn_forward.15} parent=0
    _
  %s5 = ssub.s32 1, %s3
  %s6 = scalar_select 0, %s5, %s3
  $region1: #{rgcn_forward.15} parent=0
    #allocation2 [shape = 'u8[8192]{0}', space=vmem, size = 0x2000, scoped, tag = 'output window, operand 0']
    #allocation3 [shape = 's32[2]{0}', space=sflag, size = 0x8, scoped, tag = 'scoped memory for rgcn_forward.15']
    %7 = vsyncpa [#allocation3], 0
    %s8 = scalar_lea.sflag [#allocation3], 1
    %9 = vsyncpa %s8, 0
    loop: start=0, step=1, limit=4
    $region2: #{rgcn_forward.15} parent=1 // loop_pre_header
      _
    $region3: #{rgcn_forward.15} parent=1 // loop_header
      %s11 = sphi 0, %s15
      %p12 = scmp.ge.s32.totalorder %s11, 4
      %s21 = sphi 0, %s23
      %s24 = sphi 0, %s21
      %s25 = sphi 0, %s24
      %s41 = sphi 0, %s25
      %s47 = sphi 0, %s49
      %s50 = sphi 0, %s47
      %s51 = sphi 0, %s50
      %s67 = sphi 0, %s51
      %s73 = sphi 0, %s75
      %s76 = sphi 0, %s73
      %s77 = sphi 0, %s76
      %s93 = sphi 0, %s77
    $region4: #{rgcn_forward.15} parent=1 // loop_header_branch
      %14 = sbr.rel (%p12) target = $region8
    $region5: #{rgcn_forward.15} parent=1 // loop_body
      %s16 = ssub.s32 %s11, 1
      %s17 = ssub.s32 %s11, 2
      %s18 = sadd.s32 %s11, 1
      %s19 = ssub.s32 %s11, %s18
      %p20 = scmp.eq.s32.totalorder %s19, 0
      %s22 = sadd.s32 %s21, 1
      %s23 = scalar_select %p20, %s21, %s22
      %p26 = pneg %p20
      %p27 = scmp.eq.s32.totalorder %s11, 1
      %p28 = por %p26, %p27
      %p29 = scmp.ne.s32.totalorder %s21, %s24
      %p30 = scmp.eq.s32.totalorder %s11, 0
      %p31 = por %p29, %p30
      %p32 = scmp.ne.s32.totalorder %s21, %s24
      %p33 = scmp.eq.s32.totalorder %s16, 1
      %p34 = por %p32, %p33
      %p35 = scmp.ne.s32.totalorder %s24, %s25
      %p36 = scmp.eq.s32.totalorder %s16, 0
      %p37 = por %p35, %p36
      %p38 = scmp.ne.s32.totalorder %s24, %s25
      %p39 = scmp.eq.s32.totalorder %s17, 1
      %p40 = por %p38, %p39
      %p42 = scmp.ne.s32.totalorder %s25, %s41
      %p43 = scmp.eq.s32.totalorder %s17, 0
      %p44 = por %p42, %p43
      %s45 = ssub.s32 %s11, %s18
      %p46 = scmp.eq.s32.totalorder %s45, 0
      %s48 = sadd.s32 %s47, 1
      %s49 = scalar_select %p46, %s47, %s48
      %p52 = pneg %p46
      %p53 = scmp.eq.s32.totalorder %s11, 1
      %p54 = por %p52, %p53
      %p55 = scmp.ne.s32.totalorder %s47, %s50
      %p56 = scmp.eq.s32.totalorder %s11, 0
      %p57 = por %p55, %p56
      %p58 = scmp.ne.s32.totalorder %s47, %s50
      %p59 = scmp.eq.s32.totalorder %s16, 1
      %p60 = por %p58, %p59
      %p61 = scmp.ne.s32.totalorder %s50, %s51
      %p62 = scmp.eq.s32.totalorder %s16, 0
      %p63 = por %p61, %p62
      %p64 = scmp.ne.s32.totalorder %s50, %s51
      %p65 = scmp.eq.s32.totalorder %s17, 1
      %p66 = por %p64, %p65
      %p68 = scmp.ne.s32.totalorder %s51, %s67
      %p69 = scmp.eq.s32.totalorder %s17, 0
      %p70 = por %p68, %p69
      %s71 = ssub.s32 %s11, %s18
      %p72 = scmp.eq.s32.totalorder %s71, 0
      %s74 = sadd.s32 %s73, 1
      %s75 = scalar_select %p72, %s73, %s74
      %p78 = pneg %p72
      %p79 = scmp.eq.s32.totalorder %s11, 1
      %p80 = por %p78, %p79
      %p81 = scmp.ne.s32.totalorder %s73, %s76
      %p82 = scmp.eq.s32.totalorder %s11, 0
      %p83 = por %p81, %p82
      %p84 = scmp.ne.s32.totalorder %s73, %s76
      %p85 = scmp.eq.s32.totalorder %s16, 1
      %p86 = por %p84, %p85
      %p87 = scmp.ne.s32.totalorder %s76, %s77
      %p88 = scmp.eq.s32.totalorder %s16, 0
      %p89 = por %p87, %p88
      %p90 = scmp.ne.s32.totalorder %s76, %s77
      %p91 = scmp.eq.s32.totalorder %s17, 1
      %p92 = por %p90, %p91
      %p94 = scmp.ne.s32.totalorder %s77, %s93
      %p95 = scmp.eq.s32.totalorder %s17, 0
      %p96 = por %p94, %p95
      %p97 = scmp.le.s32.totalorder 1, %s11
      %p98 = scmp.lt.s32.totalorder %s11, 3
      %p99 = pnand %p97, %p98
      %p100 = pneg %p99
      // Predicated region
      $region9: #{rgcn_forward.15} parent=5 // pred_check
        _
      $region10: #{rgcn_forward.15} parent=5 // pred_check_branch
        %102 = sbr.rel (%p99) target = $region12
      $region11: #{rgcn_forward.15} parent=5 // pred_region
        %s103 = ssub.s32 %s11, 1
      $region12: #{rgcn_forward.15} parent=5 // pred_fallthru
        _
      %p104 = scmp.lt.s32.totalorder %s11, 2
      // Predicated region
      $region13: #{rgcn_forward.15} parent=5 // pred_check
        %p105 = pneg %p104
      $region14: #{rgcn_forward.15} parent=5 // pred_check_branch
        %107 = sbr.rel (%p105) target = $region16
      $region15: #{rgcn_forward.15} parent=5 // pred_region
        // Predicated region
        $region17: #{rgcn_forward.15} parent=15 // pred_check
          %p108 = pneg %p31
        $region18: #{rgcn_forward.15} parent=15 // pred_check_branch
          %110 = sbr.rel (%p108) target = $region20
        $region19: #{rgcn_forward.15} parent=15 // pred_region
          %p111 = scmp.lt.s32.totalorder %s11, 1
          %s112 = scalar_select %p111, %s11, 1
          %s113 = smul.addr %s112, 3
          %s114 = smul.addr %s113, 8
          %s115 = scalar_lea.vmem %s0, %s114
        $region20: #{rgcn_forward.15} parent=15 // pred_fallthru
          _
        // Predicated region
        $region21: #{rgcn_forward.15} parent=15 // pred_check
          %p116 = pneg %p57
        $region22: #{rgcn_forward.15} parent=15 // pred_check_branch
          %118 = sbr.rel (%p116) target = $region24
        $region23: #{rgcn_forward.15} parent=15 // pred_region
          %p119 = scmp.lt.s32.totalorder %s11, 1
          %s120 = scalar_select %p119, %s11, 1
          %s121 = smul.addr %s120, 3
          %s122 = smul.addr %s121, 8
          %s123 = scalar_lea.vmem %s1, %s122
        $region24: #{rgcn_forward.15} parent=15 // pred_fallthru
          _
      $region16: #{rgcn_forward.15} parent=5 // pred_fallthru
        _
      %p124 = scmp.le.s32.totalorder 1, %s11
      %p125 = scmp.lt.s32.totalorder %s11, 3
      %p126 = pnand %p124, %p125
      %p127 = pneg %p126
      // Predicated region
      $region25: #{rgcn_forward.15} parent=5 // pred_check
        _
      $region26: #{rgcn_forward.15} parent=5 // pred_check_branch
        %129 = sbr.rel (%p126) target = $region28
      $region27: #{rgcn_forward.15} parent=5 // pred_region
        %s130 = ssub.s32 %s11, 1
        %p131 = scmp.lt.s32.totalorder %s16, 1
        %s132 = scalar_select %p131, %s16, 1
        %s133 = smul.addr %s132, 3
        %s134 = smul.addr %s133, 8
        %s135 = scalar_lea.vmem %s0, %s134
        %p136 = pneg %p37
        %p137 = pneg %p34
        %p138 = scmp.lt.s32.totalorder %s16, 1
        %s139 = scalar_select %p138, %s16, 1
        %s140 = smul.addr %s139, 3
        %s141 = smul.addr %s140, 8
        %s142 = scalar_lea.vmem %s1, %s141
        %p143 = pneg %p63
        %p144 = pneg %p60
        %p145 = pneg %p89
        %p146 = pneg %p86
        %s147 = sand.u32 %s76, 1
        %s148 = scalar_lea.sflag [#allocation3], %s147
        %s149 = sand.u32 %s76, 1
        %s150 = smul.addr %s149, 8
        %s151 = scalar_lea.vmem [#allocation2], %s150
        %p152 = scmp.lt.s32.totalorder %s16, 1
        %s153 = scalar_select %p152, %s16, 1
        %s154 = smul.addr %s153, 3
        %s155 = smul.addr %s154, 8
        %s156 = scalar_lea.vmem %s0, %s155
        %p157 = scmp.lt.s32.totalorder %s16, 1
        %s158 = scalar_select %p157, %s16, 1
        %s159 = smul.addr %s158, 3
        %s160 = smul.addr %s159, 8
        %s161 = scalar_lea.vmem %s1, %s160
        %v162 = vld [vmem:[%s156] sm:$0xff]
        %v163 = vld [vmem:[%s156 + $0x8] sm:$0xff]
        %v164 = vld [vmem:[%s156 + $0x10] sm:$0xff]
        %v165 = vld [vmem:[%s161] sm:$0xff]
        %v166 = vld [vmem:[%s161 + $0x8] sm:$0xff]
        %v167 = vld [vmem:[%s161 + $0x10] sm:$0xff]
        %169 = vrot.lane.b32.xlu0 %v162, 64
        %v170 = vpop.permute.xlu0 %169
        %v172 = vadd.f32 %v162, %v170
        %174 = vrot.lane.b32.xlu0 %v165, 64
        %v175 = vpop.permute.xlu0 %174
        %v177 = vadd.f32 %v165, %v175
        %v178 = vadd.f32 %v172, %v163
        %v179 = vadd.f32 %v177, %v166
        %181 = vrot.lane.b32.xlu0 %v163, 64
        %v182 = vpop.permute.xlu0 %181
        %v184 = vadd.f32 %v178, %v182
        %186 = vrot.lane.b32.xlu0 %v166, 64
        %v187 = vpop.permute.xlu0 %186
        %v189 = vadd.f32 %v179, %v187
        %v190 = vadd.f32 %v184, %v164
        %v191 = vadd.f32 %v189, %v167
        %193 = vrot.lane.b32.xlu0 %v191, 64
        %v194 = vpop.permute.xlu0 %193
        %vm196 = vcmask 523264
        %v197 = vsel %vm196, %v190, %v194
        %v198 = vmul.f32 %v197, 0.2
        %199 = vst [vmem:[%s151] sm:$0xff] %v198
        %s200 = sand.u32 %s76, 1
        %s201 = scalar_lea.sflag [#allocation3], %s200
        %s202 = sand.u32 %s76, 1
        %s203 = smul.addr %s202, 8
        %s204 = scalar_lea.vmem [#allocation2], %s203
        // Predicated region
        $region29: #{rgcn_forward.15} parent=27 // pred_check
          %p205 = pneg %p86
        $region30: #{rgcn_forward.15} parent=27 // pred_check_branch
          %207 = sbr.rel (%p205) target = $region32
        $region31: #{rgcn_forward.15} parent=27 // pred_region
          %209 = vsyncadd %s201, 0
          %s210 = smul.addr %s16, 8
          %s211 = scalar_lea.hbm %s2, %s210
          %s213 = sshll.u32 %s204, 4
          %s214 = int_to_ptr.vmem [resolvable:$true] %s213
          %s215 = sshll.u32 %s211, 4
          %s216 = int_to_ptr.hbm [resolvable:$true] %s215
          %218 = dma.vmem_to_hbm [thread:$0]  %s214, 128, %s216, %s201
        $region32: #{rgcn_forward.15} parent=27 // pred_fallthru
          _
      $region28: #{rgcn_forward.15} parent=5 // pred_fallthru
        _
      %p219 = scmp.le.s32.totalorder 2, %s11
      // Predicated region
      $region33: #{rgcn_forward.15} parent=5 // pred_check
        %p220 = pneg %p219
      $region34: #{rgcn_forward.15} parent=5 // pred_check_branch
        %222 = sbr.rel (%p220) target = $region36
      $region35: #{rgcn_forward.15} parent=5 // pred_region
        %s223 = ssub.s32 %s11, 2
        // Predicated region
        $region37: #{rgcn_forward.15} parent=35 // pred_check
          %p224 = pneg %p92
        $region38: #{rgcn_forward.15} parent=35 // pred_check_branch
          %226 = sbr.rel (%p224) target = $region40
        $region39: #{rgcn_forward.15} parent=35 // pred_region
          %s227 = sand.u32 %s77, 1
          %s228 = scalar_lea.sflag [#allocation3], %s227
          %s229 = sand.u32 %s77, 1
          %s230 = smul.addr %s229, 8
          %s231 = scalar_lea.vmem [#allocation2], %s230
          %233 = dma.done %s228, 128
        $region40: #{rgcn_forward.15} parent=35 // pred_fallthru
          _
      $region36: #{rgcn_forward.15} parent=5 // pred_fallthru
        _
    $region6: #{rgcn_forward.15} parent=1 // loop_footer
      %s15 = sadd.s32 1, %s11
    $region7: #{rgcn_forward.15} parent=1 // loop_footer_branch
      %10 = sbr.rel target = $region3
    $region8: #{rgcn_forward.15} parent=1 // loop_exit
      _
    %234 = vsyncpa [#allocation3], 1
    %s235 = scalar_lea.sflag [#allocation3], 1
    %236 = vsyncpa %s235, 1

// kernel: rgcn_forward.13
$region0: #{rgcn_forward.13}
  #allocation0 [shape = 'u32[]', space=smem, size = 0x4, offset = 0x4, fixed_abs, tag = 'smem constant byte address 0x4 - core index']
  #allocation1 [shape = 'u32[72,128]{1,0:T(1,128)}', space=vmem, size = 0x9000, scoped, tag = 'internal scratch']
  #allocation2 [shape = 'f32[16,64]{1,0:T(8,128)}', space=vmem, size = 0x2000, scoped, tag = 'scratch operand']
  %s0 = inlined_call_operand.vmem [shape: bf16[16,96], index: 0, kind: input, shape index: {}]
  %s1 = inlined_call_operand.vmem [shape: bf16[96,64], index: 1, kind: input, shape index: {}]
  %s2 = inlined_call_operand.vmem [shape: f32[1,64], index: 2, kind: input, shape index: {}]
  %s3 = inlined_call_operand.vmem [shape: f32[16,64], index: 3, kind: output, shape index: {}]
  %s4 = sld [smem:[#allocation0]]
  $region30: #{rgcn_forward.13} parent=0
    _
  %s6 = ssub.s32 1, %s4
  %s7 = scalar_select 0, %s6, %s4
  // Predicated region
  $region2: #{rgcn_forward.13} parent=0 // pred_check
    _
  $region3: #{rgcn_forward.13} parent=0 // pred_check_branch
    %9 = sbr.rel (0) target = $region5
  $region4: #{rgcn_forward.13} parent=0 // pred_region
    _
  $region5: #{rgcn_forward.13} parent=0 // pred_fallthru
    _
  // Predicated region
  $region6: #{rgcn_forward.13} parent=0 // pred_check
    _
  $region7: #{rgcn_forward.13} parent=0 // pred_check_branch
    %11 = sbr.rel (0) target = $region9
  $region8: #{rgcn_forward.13} parent=0 // pred_region
    _
  $region9: #{rgcn_forward.13} parent=0 // pred_fallthru
    _
  // Predicated region
  $region10: #{rgcn_forward.13} parent=0 // pred_check
    _
  $region11: #{rgcn_forward.13} parent=0 // pred_check_branch
    %13 = sbr.rel (0) target = $region13
  $region12: #{rgcn_forward.13} parent=0 // pred_region
    _
  $region13: #{rgcn_forward.13} parent=0 // pred_fallthru
    _
  %p15 = scmp.eq.s32.totalorder 0, 0
  // Predicated region
  $region14: #{rgcn_forward.13} parent=0 // pred_check
    %p16 = pneg %p15
  $region15: #{rgcn_forward.13} parent=0 // pred_check_branch
    %18 = sbr.rel (%p16) target = $region17
  $region16: #{rgcn_forward.13} parent=0 // pred_region
    %vm19 = vcmask 523264
    %20 = vst.msk [vmem:[#allocation2] sm:$0xff] %vm19, 0.0
    %21 = vst.msk [vmem:[#allocation2 + $0x8] sm:$0xff] %vm19, 0.0
  $region17: #{rgcn_forward.13} parent=0 // pred_fallthru
    _
  %v22 = vld [vmem:[%s1] sm:$0xf]
  %v23 = vld [vmem:[%s1 + $0x4] sm:$0xf]
  %v24 = vld [vmem:[%s1 + $0x8] sm:$0xf]
  %v25 = vld [vmem:[%s1 + $0xc] sm:$0xf]
  %v26 = vld [vmem:[%s1 + $0x10] sm:$0xf]
  %v27 = vld [vmem:[%s1 + $0x14] sm:$0xf]
  %v28 = vld [vmem:[%s1 + $0x18] sm:$0xf]
  %v29 = vld [vmem:[%s1 + $0x1c] sm:$0xf]
  %v30 = vld [vmem:[%s1 + $0x20] sm:$0xf]
  %v31 = vld [vmem:[%s1 + $0x24] sm:$0xf]
  %v32 = vld [vmem:[%s1 + $0x28] sm:$0xf]
  %v33 = vld [vmem:[%s1 + $0x2c] sm:$0xf]
  %v34 = vld [vmem:[#allocation2] sm:$0xff]
  %v35 = vld [vmem:[#allocation2 + $0x8] sm:$0xff]
  %v36 = vld [vmem:[%s0] sm:$0xf]
  %v37 = vld [vmem:[%s0 + $0x4] sm:$0xf]
  %v40 = vunpack.c.l.b16 %v36
  %v41 = vunpack.c.l.b16 %v37
  %v42 = vpack.c.b16 %v41, %v40
  %v55 = vunpack.c.l.b16 %v22
  %v56 = vunpack.c.l.b16 %v23
  %v57 = vunpack.c.l.b16 %v24
  %v58 = vunpack.c.l.b16 %v25
  %v59 = vunpack.c.l.b16 %v26
  %v60 = vunpack.c.l.b16 %v27
  %v61 = vunpack.c.l.b16 %v28
  %v62 = vunpack.c.l.b16 %v29
  %v63 = vunpack.c.l.b16 %v30
  %v64 = vunpack.c.l.b16 %v31
  %v65 = vunpack.c.l.b16 %v32
  %v66 = vunpack.c.l.b16 %v33
  %v67 = vpack.c.b16 %v56, %v55
  %v68 = vpack.c.b16 %v58, %v57
  %v69 = vpack.c.b16 %v60, %v59
  %v70 = vpack.c.b16 %v62, %v61
  %v71 = vpack.c.b16 %v64, %v63
  %v72 = vpack.c.b16 %v66, %v65
  %vm79 = vcmask 785408
  %v81 = vsel %vm79, %v42, 0
  %83 = vmatpush.bf16.msra.mxu0 0
  %84 = vmatpush.bf16.msra.mxu0 0
  %85 = vmatpush.bf16.msra.mxu0 %v72
  %86 = vmatpush.bf16.msra.mxu0 %v71
  %87 = vmatpush.bf16.msra.mxu0 %v70
  %88 = vmatpush.bf16.msra.mxu0 %v69
  %89 = vmatpush.bf16.msra.mxu0 %v68
  %90 = vmatpush.bf16.msra.mxu0 %v67
  %91 = vmatmul.bf16.gmra.mxu0 %v81
  %v92 = vpop.f32.mrf.mxu0
  %v93 = vadd.f32 0.0, %v92
  %v94 = vpop.f32.mrf.mxu0
  %v95 = vadd.f32 0.0, %v94
  %96 = vdwg.mxu0
  %v97 = vadd.f32 %v34, %v93
  %v98 = vadd.f32 %v35, %v95
  %vm99 = vcmask 523264
  %100 = vst.msk [vmem:[#allocation2] sm:$0xff] %vm99, %v97
  %101 = vst.msk [vmem:[#allocation2 + $0x8] sm:$0xff] %vm99, %v98
  // Predicated region
  $region18: #{rgcn_forward.13} parent=0 // pred_check
    %p102 = pneg %p15
  $region19: #{rgcn_forward.13} parent=0 // pred_check_branch
    %104 = sbr.rel (%p102) target = $region21
  $region20: #{rgcn_forward.13} parent=0 // pred_region
    %v105 = vld [vmem:[#allocation2] sm:$0xff]
    %v106 = vld [vmem:[#allocation2 + $0x8] sm:$0xff]
    %vm107 = vcmp.gt.f32.partialorder %v105, 0.0
    %vm108 = vcmp.gt.f32.partialorder %v106, 0.0
    %v109 = vld [vmem:[%s2] sm:$0x1]
    %v111 = vperm.slane %v109, 0
    %v113 = vmul.f32 %v111, %v105
    %v114 = vmul.f32 %v111, %v106
    %v115 = vsel %vm107, %v105, %v113
    %v116 = vsel %vm108, %v106, %v114
    %117 = vst.msk [vmem:[%s3] sm:$0xff] %vm99, %v115
    %118 = vst.msk [vmem:[%s3 + $0x8] sm:$0xff] %vm99, %v116
  $region21: #{rgcn_forward.13} parent=0 // pred_fallthru
    _
  // Predicated region
  $region22: #{rgcn_forward.13} parent=0 // pred_check
    _
  $region23: #{rgcn_forward.13} parent=0 // pred_check_branch
    %120 = sbr.rel (0) target = $region25
  $region24: #{rgcn_forward.13} parent=0 // pred_region
    _
  $region25: #{rgcn_forward.13} parent=0 // pred_fallthru
    _
  // Predicated region
  $region26: #{rgcn_forward.13} parent=0 // pred_check
    _
  $region27: #{rgcn_forward.13} parent=0 // pred_check_branch
    %122 = sbr.rel (0) target = $region29
  $region28: #{rgcn_forward.13} parent=0 // pred_region
    _
  $region29: #{rgcn_forward.13} parent=0 // pred_fallthru
    _

</llo_original>
